<compile_context>
chip_gen: v7x
topology: tpu7x:2x2x1
jax: 0.10.0
libtpu: 0.0.40
codegen_flags: <defaults>
</compile_context>

<pallas_src>
import functools

import jax
import jax.numpy as jnp
from jax import lax
from jax.experimental import pallas as pl
from jax.experimental.pallas import tpu as pltpu


_LANE = 128      # channel dims padded to a multiple of this (lane-dense stores / MXU K)
_SUBLANE = 8     # row-tile heights are multiples of this


def _round_up(x, m):
    return (x + m - 1) // m * m


def _vmem_budgets():
    """(vmem_limit_bytes, per-grid-step tile budget) -- TPU-generation aware."""
    try:
        phys = int(pltpu.get_tpu_info().vmem_capacity_bytes)
    except Exception:
        phys = 64 * 1024 * 1024                       # conservative (v7x-class) fallback
    if phys <= 64 * 1024 * 1024:                      # v7x: 64 MiB per TensorCore
        return 48 * 1024 * 1024, 20 * 1024 * 1024
    return 96 * 1024 * 1024, 32 * 1024 * 1024         # v5e / v6e: 128 MiB physical


def _pick_tile_h(h, w, cin_p, cout_p, in_bytes, tile_budget):
    """Largest multiple-of-8 row-tile height whose per-step working set fits the budget."""
    wp = w + 2
    k3 = 3 * cin_p
    fixed = 2 * (3 * k3 * cout_p) * in_bytes          # weights (x2 pipeline buffers)
    fixed += 2 * (2 * wp * cin_p) * in_bytes          # 2-row halo tile (x2 buffers)
    fixed += 2 * (w * k3) * in_bytes                  # halo rows of the merged-LHS scratch
    per_row = 2 * (wp * cin_p) * in_bytes             # main input tile rows (x2 buffers)
    per_row += 2 * (w * cout_p) * in_bytes            # conv-out tile rows (x2 buffers)
    per_row += (w * k3) * in_bytes                    # merged-LHS scratch rows
    per_row += 2 * (w * cout_p) * 4                   # f32 accumulator temporaries
    avail = max(tile_budget - fixed, _SUBLANE * per_row)
    cap = max(_SUBLANE, (avail // per_row) // _SUBLANE * _SUBLANE)
    cap = min(cap, _round_up(h, _SUBLANE))
    # Prefer a tile height dividing H (skips the stats row mask), but never shrink > ~2x.
    for cand in range(cap, max(_SUBLANE, cap // 2) - 1, -_SUBLANE):
        if h % cand == 0:
            return cand
    return cap


def _conv_stats_kernel(xm_ref, xh_ref, w_ref, y_ref, stats_ref, lhs_ref,
                       *, real_h, needs_mask):
    """3x3 conv for one (batch, row-tile) block + per-tile BN (sum, sum_sq).

    xm_ref   : [1, TH, W+2, Cin_p]     main rows of the zero-padded NHWC input
    xh_ref   : [1, 2,  W+2, Cin_p]     2 halo rows directly below the tile
    w_ref    : [3, 3*Cin_p, Cout_p]    HWIO weight, kw taps folded into the K dim
    y_ref    : [1, TH, W, Cout_p]      pre-BN conv output tile (bf16/f32)
    stats_ref: [1, 1, 2, Cout_p]       per-(batch, row-tile) [sum, sum_sq] (f32)
    lhs_ref  : VMEM [TH+2, W, 3*Cin_p] kw-merged, halo-extended LHS scratch
    """
    th = y_ref.shape[1]
    w_out = y_ref.shape[2]
    cin_p = xm_ref.shape[3]

    # Assemble the kw-merged LHS with direct slice copies (no concat materialization):
    #   lhs[p, j, kw*Cin_p + c] = x_padded[p, j + kw, c]
    for kw in range(3):
        lane = slice(kw * cin_p, (kw + 1) * cin_p)
        lhs_ref[0:th, :, lane] = xm_ref[0, :, kw:kw + w_out, :]
        lhs_ref[th:th + 2, :, lane] = xh_ref[0, :, kw:kw + w_out, :]

    # 3 deep matmuls (K = 3*Cin_p) with loop-carried f32 accumulation (no scratch RMW).
    acc = None
    for kh in range(3):
        part = lax.dot_general(
            lhs_ref[kh:kh + th], w_ref[kh],
            dimension_numbers=(((2,), (0,)), ((), ())),
            preferred_element_type=jnp.float32)                    # [TH, W, Cout_p]
        acc = part if acc is None else acc + part

    y_ref[0] = acc.astype(y_ref.dtype)

    # Per-tile BN sums (f32).  Rows past the real image height (only present when H was
    # padded to a multiple of TH) must not contribute; skipped statically when H % TH == 0.
    if needs_mask:
        r = pl.program_id(1)
        row_ids = r * th + lax.broadcasted_iota(jnp.int32, (th, w_out), 0)
        valid = (row_ids < real_h).astype(jnp.float32)[:, :, None]
        masked = acc * valid
        tile_sum = jnp.sum(masked, axis=(0, 1))
        tile_sq = jnp.sum(masked * acc, axis=(0, 1))
    else:
        tile_sum = jnp.sum(acc, axis=(0, 1))
        tile_sq = jnp.sum(acc * acc, axis=(0, 1))
    stats_ref[0, 0] = jnp.concatenate([tile_sum[None, :], tile_sq[None, :]], axis=0)


def conv_block(x, weight, bias, gamma, beta, *, eps=1e-5, with_nonlinearity=True,
               compute_dtype=jnp.bfloat16):
    """ConvBlock forward: Conv2d(3x3, stride 1, pad 1) -> BatchNorm2d (training-mode
    batch statistics) -> optional ReLU.

    x: [N, Cin, H, W] (NCHW, PyTorch layout); weight: OIHW [Cout, Cin, 3, 3].
    Returns [N, Cout, H, W] f32.

    `bias` is accepted for API parity but is mathematically a no-op here: training-mode
    BatchNorm subtracts the per-channel batch mean, which cancels the conv bias exactly.
    (If a no-BN path is ever added, the bias must be reinstated.)
    """
    del bias  # cancelled exactly by the batch-mean subtraction
    n, cin, h, w = x.shape
    cout = weight.shape[0]

    cin_p = _round_up(cin, _LANE)
    cout_p = _round_up(cout, _LANE)
    wp = w + 2
    in_bytes = jnp.dtype(compute_dtype).itemsize

    vmem_limit, tile_budget = _vmem_budgets()
    th = _pick_tile_h(h, w, cin_p, cout_p, in_bytes, tile_budget)
    h_t = _round_up(h, th)
    r_tiles = h_t // th
    halo_blk = th // 2                 # halo block (height 2) index stride
    needs_mask = (h_t != h)

    # Layout prep (one fused XLA pass): NCHW -> NHWC, compute-dtype cast, conv zero-pad,
    # channel padding to lane multiples, and bottom zero rows so the last tile plus its
    # 2-row halo stay in bounds.  Padded rows/channels are zero, so (with no conv bias)
    # they contribute exactly zero to the BN sums.
    # TODO(synk): when chained inside the UNet, keep NHWC + padded channels end-to-end to
    # avoid the NCHW<->NHWC transposes at every block boundary.
    x_nhwc = jnp.transpose(x, (0, 2, 3, 1)).astype(compute_dtype)
    xp = jnp.pad(x_nhwc, ((0, 0), (1, h_t + 1 - h), (1, 1), (0, cin_p - cin)))

    w_hwio = jnp.transpose(weight, (2, 3, 1, 0)).astype(compute_dtype)   # [3,3,Cin,Cout]
    w_p = jnp.pad(w_hwio, ((0, 0), (0, 0), (0, cin_p - cin), (0, cout_p - cout)))
    w3 = w_p.reshape(3, 3 * cin_p, cout_p)               # [kh, kw*Cin_p + ci, co]

    grid = (n, r_tiles)
    kernel = functools.partial(_conv_stats_kernel, real_h=h, needs_mask=needs_mask)

    # TODO(synk): sweep pipeline_mode=pl.Buffered(3) on the main-input / conv-out specs
    # once tiles sit at the HBM roofline (cheap on v5e/v6e, check the budget on v7x).
    conv_out, stats = pl.pallas_call(
        kernel,
        grid=grid,
        in_specs=[
            pl.BlockSpec((1, th, wp, cin_p), lambda b, r: (b, r, 0, 0)),
            pl.BlockSpec((1, 2, wp, cin_p), lambda b, r: (b, (r + 1) * halo_blk, 0, 0)),
            pl.BlockSpec((3, 3 * cin_p, cout_p), lambda b, r: (0, 0, 0)),
        ],
        out_specs=[
            pl.BlockSpec((1, th, w, cout_p), lambda b, r: (b, r, 0, 0)),
            pl.BlockSpec((1, 1, 2, cout_p), lambda b, r: (b, r, 0, 0)),
        ],
        out_shape=[
            jax.ShapeDtypeStruct((n, h_t, w, cout_p), compute_dtype),
            jax.ShapeDtypeStruct((n, r_tiles, 2, cout_p), jnp.float32),
        ],
        scratch_shapes=[pltpu.VMEM((th + 2, w, 3 * cin_p), compute_dtype)],
        compiler_params=pltpu.CompilerParams(
            dimension_semantics=("parallel", "parallel"),
            vmem_limit_bytes=vmem_limit),
    )(xp, xp, w3)

    # Finalize global BN statistics ([Cout]-sized math, negligible cost) ...
    count = jnp.float32(n * h * w)
    total = jnp.sum(stats[:, :, 0, :cout], axis=(0, 1))
    total_sq = jnp.sum(stats[:, :, 1, :cout], axis=(0, 1))
    mean = total / count
    var = jnp.maximum(total_sq / count - mean * mean, 0.0)   # biased var (BN training mode)
    scale = gamma.astype(jnp.float32) * lax.rsqrt(var + jnp.float32(eps))
    shift = beta.astype(jnp.float32) - mean * scale

    # ... and apply BN affine + ReLU + unpad + NCHW transpose as ONE fused XLA pass
    # (single read of conv_out, single write of the final output -- no extra round trip).
    y = conv_out[:, :h, :, :cout].astype(jnp.float32) * scale + shift
    if with_nonlinearity:
        y = jnp.maximum(y, 0.0)
    return jnp.transpose(y, (0, 3, 1, 2))


def _reference(x, weight, bias, gamma, beta, eps=1e-5):
    # Plain-JAX reference (conv + training-mode BN + ReLU) for validation.
    y = lax.conv_general_dilated(
        x, weight, window_strides=(1, 1), padding=((1, 1), (1, 1)),
        dimension_numbers=('NCHW', 'OIHW', 'NCHW'))
    y = y + bias[None, :, None, None]
    mean = jnp.mean(y, axis=(0, 2, 3), keepdims=True)
    var = jnp.mean((y - mean) ** 2, axis=(0, 2, 3), keepdims=True)
    y = (y - mean) * lax.rsqrt(var + eps)
    y = y * gamma[None, :, None, None] + beta[None, :, None, None]
    return jnp.maximum(y, 0.0)


if __name__ == "__main__":
    N, Cin, Cout, H, W = 2, 4, 8, 16, 16
    key = jax.random.PRNGKey(0)
    kx, kw, kb = jax.random.split(key, 3)

    x = jax.random.normal(kx, (N, Cin, H, W), dtype=jnp.float32)

    # Deterministic parameter init mirroring nn.Conv2d / nn.BatchNorm2d defaults.
    fan_in = Cin * 3 * 3
    bound = 1.0 / (fan_in ** 0.5)
    weight = jax.random.uniform(kw, (Cout, Cin, 3, 3), jnp.float32, -bound, bound)
    bias = jax.random.uniform(kb, (Cout,), jnp.float32, -bound, bound)
    gamma = jnp.ones((Cout,), jnp.float32)     # BN weight init = 1
    beta = jnp.zeros((Cout,), jnp.float32)     # BN bias init = 0

    ref = jax.block_until_ready(_reference(x, weight, bias, gamma, beta))

    # f32 path: tight numerical check against the f32 reference.
    fn_f32 = jax.jit(functools.partial(conv_block, compute_dtype=jnp.float32))
    out_f32 = jax.block_until_ready(fn_f32(x, weight, bias, gamma, beta))
    assert out_f32.shape == (N, Cout, H, W)
    assert jnp.allclose(out_f32, ref, atol=2e-4, rtol=2e-4), "f32 path mismatch vs reference"

    # bf16 (default, perf) path: looser tolerance for the reduced-precision MXU/intermediate.
    fn_bf16 = jax.jit(conv_block)
    out_bf16 = jax.block_until_ready(fn_bf16(x, weight, bias, gamma, beta))
    assert out_bf16.shape == (N, Cout, H, W)
    assert jnp.allclose(out_bf16, ref, atol=5e-2, rtol=5e-2), "bf16 path mismatch vs reference"

    print("KERNEL_OK")
</pallas_src>

<mosaic_0001>
module attributes {stable_mosaic.version = 11 : i64} {
  func.func @_conv_stats_kernel(%arg0: i32, %arg1: i32, %arg2: memref<1x16x18x128xf32, #tpu.memory_space<vmem>>, %arg3: memref<1x2x18x128xf32, #tpu.memory_space<vmem>>, %arg4: memref<3x384x128xf32, #tpu.memory_space<vmem>>, %arg5: memref<1x16x16x128xf32, #tpu.memory_space<vmem>>, %arg6: memref<1x1x2x128xf32, #tpu.memory_space<vmem>>, %arg7: memref<18x16x384xf32, #tpu.memory_space<vmem>>) attributes {dimension_semantics = [#tpu.dimension_semantics<parallel>, #tpu.dimension_semantics<parallel>], iteration_bounds = array<i64: 2, 1>, scalar_prefetch = 0 : i64, scratch_operands = 1 : i64, tpu.core_type = #tpu.core_type<tc>, window_params = [{transform_indices = @transform_0, window_bounds = array<i64: 1, 16, 18, 128>}, {transform_indices = @transform_1, window_bounds = array<i64: 1, 2, 18, 128>}, {pipeline_mode = #tpu.pipeline_mode<synchronous>, transform_indices = @transform_2, window_bounds = array<i64: 3, 384, 128>}, {transform_indices = @transform_3, window_bounds = array<i64: 1, 16, 16, 128>}, {transform_indices = @transform_4, window_bounds = array<i64: 1, 1, 2, 128>}]} {
    %c0 = arith.constant 0 : index
    %c0_0 = arith.constant 0 : index
    %c0_1 = arith.constant 0 : index
    %c0_2 = arith.constant 0 : index
    %0 = vector.load %arg2[%c0, %c0_0, %c0_1, %c0_2] : memref<1x16x18x128xf32, #tpu.memory_space<vmem>>, vector<1x16x16x128xf32>
    %1 = vector.shape_cast %0 : vector<1x16x16x128xf32> to vector<16x16x128xf32>
    %c0_3 = arith.constant 0 : index
    %c0_4 = arith.constant 0 : index
    %c0_5 = arith.constant 0 : index
    %2 = vector.load %arg7[%c0_3, %c0_4, %c0_5] : memref<18x16x384xf32, #tpu.memory_space<vmem>>, vector<16x16x128xf32>
    tpu.vector_store %arg7[%c0_3, %c0_4, %c0_5], %1 {strides = array<i32>} : memref<18x16x384xf32, #tpu.memory_space<vmem>>, vector<16x16x128xf32>,
    %c0_6 = arith.constant 0 : index
    %c0_7 = arith.constant 0 : index
    %c0_8 = arith.constant 0 : index
    %c0_9 = arith.constant 0 : index
    %3 = vector.load %arg3[%c0_6, %c0_7, %c0_8, %c0_9] : memref<1x2x18x128xf32, #tpu.memory_space<vmem>>, vector<1x2x16x128xf32>
    %4 = vector.shape_cast %3 : vector<1x2x16x128xf32> to vector<2x16x128xf32>
    %c16 = arith.constant 16 : index
    %c0_10 = arith.constant 0 : index
    %c0_11 = arith.constant 0 : index
    %5 = vector.load %arg7[%c16, %c0_10, %c0_11] : memref<18x16x384xf32, #tpu.memory_space<vmem>>, vector<2x16x128xf32>
    tpu.vector_store %arg7[%c16, %c0_10, %c0_11], %4 {strides = array<i32>} : memref<18x16x384xf32, #tpu.memory_space<vmem>>, vector<2x16x128xf32>,
    %c0_12 = arith.constant 0 : index
    %c0_13 = arith.constant 0 : index
    %c1 = arith.constant 1 : index
    %c0_14 = arith.constant 0 : index
    %6 = vector.load %arg2[%c0_12, %c0_13, %c1, %c0_14] : memref<1x16x18x128xf32, #tpu.memory_space<vmem>>, vector<1x16x16x128xf32>
    %7 = vector.shape_cast %6 : vector<1x16x16x128xf32> to vector<16x16x128xf32>
    %c0_15 = arith.constant 0 : index
    %c0_16 = arith.constant 0 : index
    %c128 = arith.constant 128 : index
    %8 = vector.load %arg7[%c0_15, %c0_16, %c128] : memref<18x16x384xf32, #tpu.memory_space<vmem>>, vector<16x16x128xf32>
    tpu.vector_store %arg7[%c0_15, %c0_16, %c128], %7 {strides = array<i32>} : memref<18x16x384xf32, #tpu.memory_space<vmem>>, vector<16x16x128xf32>,
    %c0_17 = arith.constant 0 : index
    %c0_18 = arith.constant 0 : index
    %c1_19 = arith.constant 1 : index
    %c0_20 = arith.constant 0 : index
    %9 = vector.load %arg3[%c0_17, %c0_18, %c1_19, %c0_20] : memref<1x2x18x128xf32, #tpu.memory_space<vmem>>, vector<1x2x16x128xf32>
    %10 = vector.shape_cast %9 : vector<1x2x16x128xf32> to vector<2x16x128xf32>
    %c16_21 = arith.constant 16 : index
    %c0_22 = arith.constant 0 : index
    %c128_23 = arith.constant 128 : index
    %11 = vector.load %arg7[%c16_21, %c0_22, %c128_23] : memref<18x16x384xf32, #tpu.memory_space<vmem>>, vector<2x16x128xf32>
    tpu.vector_store %arg7[%c16_21, %c0_22, %c128_23], %10 {strides = array<i32>} : memref<18x16x384xf32, #tpu.memory_space<vmem>>, vector<2x16x128xf32>,
    %c0_24 = arith.constant 0 : index
    %c0_25 = arith.constant 0 : index
    %c2 = arith.constant 2 : index
    %c0_26 = arith.constant 0 : index
    %12 = vector.load %arg2[%c0_24, %c0_25, %c2, %c0_26] : memref<1x16x18x128xf32, #tpu.memory_space<vmem>>, vector<1x16x16x128xf32>
    %13 = vector.shape_cast %12 : vector<1x16x16x128xf32> to vector<16x16x128xf32>
    %c0_27 = arith.constant 0 : index
    %c0_28 = arith.constant 0 : index
    %c256 = arith.constant 256 : index
    %14 = vector.load %arg7[%c0_27, %c0_28, %c256] : memref<18x16x384xf32, #tpu.memory_space<vmem>>, vector<16x16x128xf32>
    tpu.vector_store %arg7[%c0_27, %c0_28, %c256], %13 {strides = array<i32>} : memref<18x16x384xf32, #tpu.memory_space<vmem>>, vector<16x16x128xf32>,
    %c0_29 = arith.constant 0 : index
    %c0_30 = arith.constant 0 : index
    %c2_31 = arith.constant 2 : index
    %c0_32 = arith.constant 0 : index
    %15 = vector.load %arg3[%c0_29, %c0_30, %c2_31, %c0_32] : memref<1x2x18x128xf32, #tpu.memory_space<vmem>>, vector<1x2x16x128xf32>
    %16 = vector.shape_cast %15 : vector<1x2x16x128xf32> to vector<2x16x128xf32>
    %c16_33 = arith.constant 16 : index
    %c0_34 = arith.constant 0 : index
    %c256_35 = arith.constant 256 : index
    %17 = vector.load %arg7[%c16_33, %c0_34, %c256_35] : memref<18x16x384xf32, #tpu.memory_space<vmem>>, vector<2x16x128xf32>
    tpu.vector_store %arg7[%c16_33, %c0_34, %c256_35], %16 {strides = array<i32>} : memref<18x16x384xf32, #tpu.memory_space<vmem>>, vector<2x16x128xf32>,
    %c0_36 = arith.constant 0 : index
    %c0_37 = arith.constant 0 : index
    %c0_38 = arith.constant 0 : index
    %18 = vector.load %arg7[%c0_36, %c0_37, %c0_38] : memref<18x16x384xf32, #tpu.memory_space<vmem>>, vector<16x16x384xf32>
    %c0_39 = arith.constant 0 : index
    %c0_40 = arith.constant 0 : index
    %c0_41 = arith.constant 0 : index
    %19 = vector.load %arg4[%c0_39, %c0_40, %c0_41] : memref<3x384x128xf32, #tpu.memory_space<vmem>>, vector<1x384x128xf32>
    %20 = vector.shape_cast %19 : vector<1x384x128xf32> to vector<384x128xf32>
    %cst = arith.constant dense<0.000000e+00> : vector<16x16x128xf32>
    %21 = tpu.matmul %18, %20, %cst {dimension_numbers = #tpu.dot_dimension_numbers<[2], [0], [0, 1], [1], [0, 0, 0, 1, 1, 1], [], []>} : vector<16x16x384xf32>, vector<384x128xf32>, vector<16x16x128xf32> -> vector<16x16x128xf32>
    %c1_42 = arith.constant 1 : index
    %c0_43 = arith.constant 0 : index
    %c0_44 = arith.constant 0 : index
    %22 = vector.load %arg7[%c1_42, %c0_43, %c0_44] : memref<18x16x384xf32, #tpu.memory_space<vmem>>, vector<16x16x384xf32>
    %c1_45 = arith.constant 1 : index
    %c0_46 = arith.constant 0 : index
    %c0_47 = arith.constant 0 : index
    %23 = vector.load %arg4[%c1_45, %c0_46, %c0_47] : memref<3x384x128xf32, #tpu.memory_space<vmem>>, vector<1x384x128xf32>
    %24 = vector.shape_cast %23 : vector<1x384x128xf32> to vector<384x128xf32>
    %cst_48 = arith.constant dense<0.000000e+00> : vector<16x16x128xf32>
    %25 = tpu.matmul %22, %24, %cst_48 {dimension_numbers = #tpu.dot_dimension_numbers<[2], [0], [0, 1], [1], [0, 0, 0, 1, 1, 1], [], []>} : vector<16x16x384xf32>, vector<384x128xf32>, vector<16x16x128xf32> -> vector<16x16x128xf32>
    %26 = arith.addf %21, %25 : vector<16x16x128xf32>
    %c2_49 = arith.constant 2 : index
    %c0_50 = arith.constant 0 : index
    %c0_51 = arith.constant 0 : index
    %27 = vector.load %arg7[%c2_49, %c0_50, %c0_51] : memref<18x16x384xf32, #tpu.memory_space<vmem>>, vector<16x16x384xf32>
    %c2_52 = arith.constant 2 : index
    %c0_53 = arith.constant 0 : index
    %c0_54 = arith.constant 0 : index
    %28 = vector.load %arg4[%c2_52, %c0_53, %c0_54] : memref<3x384x128xf32, #tpu.memory_space<vmem>>, vector<1x384x128xf32>
    %29 = vector.shape_cast %28 : vector<1x384x128xf32> to vector<384x128xf32>
    %cst_55 = arith.constant dense<0.000000e+00> : vector<16x16x128xf32>
    %30 = tpu.matmul %27, %29, %cst_55 {dimension_numbers = #tpu.dot_dimension_numbers<[2], [0], [0, 1], [1], [0, 0, 0, 1, 1, 1], [], []>} : vector<16x16x384xf32>, vector<384x128xf32>, vector<16x16x128xf32> -> vector<16x16x128xf32>
    %31 = arith.addf %26, %30 : vector<16x16x128xf32>
    %c0_56 = arith.constant 0 : index
    %c0_57 = arith.constant 0 : index
    %c0_58 = arith.constant 0 : index
    %c0_59 = arith.constant 0 : index
    %32 = vector.load %arg5[%c0_56, %c0_57, %c0_58, %c0_59] : memref<1x16x16x128xf32, #tpu.memory_space<vmem>>, vector<1x16x16x128xf32>
    %33 = vector.shape_cast %32 : vector<1x16x16x128xf32> to vector<16x16x128xf32>
    %34 = vector.shape_cast %31 : vector<16x16x128xf32> to vector<1x16x16x128xf32>
    tpu.vector_store %arg5[%c0_56, %c0_57, %c0_58, %c0_59], %34 {strides = array<i32>} : memref<1x16x16x128xf32, #tpu.memory_space<vmem>>, vector<1x16x16x128xf32>,
    %cst_60 = arith.constant dense<0.000000e+00> : vector<128xf32>
    %35 = vector.multi_reduction <add>, %31, %cst_60 [0, 1] : vector<16x16x128xf32> to vector<128xf32>
    %36 = arith.mulf %31, %31 : vector<16x16x128xf32>
    %cst_61 = arith.constant dense<0.000000e+00> : vector<128xf32>
    %37 = vector.multi_reduction <add>, %36, %cst_61 [0, 1] : vector<16x16x128xf32> to vector<128xf32>
    %38 = vector.shape_cast %35 : vector<128xf32> to vector<1x128xf32>
    %39 = vector.shape_cast %37 : vector<128xf32> to vector<1x128xf32>
    %40 = tpu.concatenate %38, %39 in 0 : vector<1x128xf32>, vector<1x128xf32> -> vector<2x128xf32>
    %c0_62 = arith.constant 0 : index
    %c0_63 = arith.constant 0 : index
    %c0_64 = arith.constant 0 : index
    %c0_65 = arith.constant 0 : index
    %41 = vector.load %arg6[%c0_62, %c0_63, %c0_64, %c0_65] : memref<1x1x2x128xf32, #tpu.memory_space<vmem>>, vector<1x1x2x128xf32>
    %42 = vector.shape_cast %41 : vector<1x1x2x128xf32> to vector<2x128xf32>
    %43 = vector.shape_cast %40 : vector<2x128xf32> to vector<1x1x2x128xf32>
    tpu.vector_store %arg6[%c0_62, %c0_63, %c0_64, %c0_65], %43 {strides = array<i32>} : memref<1x1x2x128xf32, #tpu.memory_space<vmem>>, vector<1x1x2x128xf32>,
    return
  }
  func.func @transform_0(%arg0: i32, %arg1: i32) -> (i32, i32, i32, i32) {
    %c0_i32 = arith.constant 0 : i32
    %c0_i32_0 = arith.constant 0 : i32
    %c0_i32_1 = arith.constant 0 : i32
    return %arg0, %arg1, %c0_i32, %c0_i32_0 : i32, i32, i32, i32
  }
  func.func @transform_1(%arg0: i32, %arg1: i32) -> (i32, i32, i32, i32) {
    %c1_i32 = arith.constant 1 : i32
    %0 = arith.addi %arg1, %c1_i32 : i32
    %c8_i32 = arith.constant 8 : i32
    %1 = arith.muli %0, %c8_i32 : i32
    %c0_i32 = arith.constant 0 : i32
    %c0_i32_0 = arith.constant 0 : i32
    %c0_i32_1 = arith.constant 0 : i32
    return %arg0, %1, %c0_i32, %c0_i32_0 : i32, i32, i32, i32
  }
  func.func @transform_2(%arg0: i32, %arg1: i32) -> (i32, i32, i32) {
    %c0_i32 = arith.constant 0 : i32
    %c0_i32_0 = arith.constant 0 : i32
    %c0_i32_1 = arith.constant 0 : i32
    %c0_i32_2 = arith.constant 0 : i32
    return %c0_i32, %c0_i32_0, %c0_i32_1 : i32, i32, i32
  }
  func.func @transform_3(%arg0: i32, %arg1: i32) -> (i32, i32, i32, i32) {
    %c0_i32 = arith.constant 0 : i32
    %c0_i32_0 = arith.constant 0 : i32
    %c0_i32_1 = arith.constant 0 : i32
    return %arg0, %arg1, %c0_i32, %c0_i32_0 : i32, i32, i32, i32
  }
  func.func @transform_4(%arg0: i32, %arg1: i32) -> (i32, i32, i32, i32) {
    %c0_i32 = arith.constant 0 : i32
    %c0_i32_0 = arith.constant 0 : i32
    %c0_i32_1 = arith.constant 0 : i32
    return %arg0, %arg1, %c0_i32, %c0_i32_0 : i32, i32, i32, i32
  }
}

</mosaic_0001>

<llo_original>
// kernel: conv_block.1
$region0: #{conv_block.1}
  #allocation0 [shape = 'u32[]', space=smem, size = 0x4, offset = 0x4, fixed_abs, tag = 'smem constant byte address 0x4 - core index']
  #allocation1 [shape = 'u32[144,128]{1,0:T(1,128)}', space=vmem, size = 0x12000, scoped, tag = 'internal scratch']
  #allocation2 [shape = 'f32[18,16,384]{2,1,0:T(8,128)}', space=vmem, size = 0x6c000, scoped, tag = 'scratch operand']
  %s0 = inlined_call_operand.vmem [shape: f32[2,18,18,128], index: 0, kind: input, shape index: {}, may-alias: {0,1}]
  %s1 = inlined_call_operand.vmem [shape: f32[2,18,18,128], index: 1, kind: input, shape index: {}, may-alias: {0,1}]
  %s2 = inlined_call_operand.vmem [shape: f32[3,384,128], index: 2, kind: input, shape index: {}]
  %s3 = inlined_call_operand.vmem [shape: f32[2,16,16,128], index: 3, kind: output, shape index: {0}]
  %s4 = inlined_call_operand.vmem [shape: f32[2,1,2,128], index: 4, kind: output, shape index: {1}]
  %5 = xla_tuple %s3, %s4
  %s6 = sld [smem:[#allocation0]]
  $region53: #{conv_block.1} parent=0
    _
  %s8 = ssub.s32 1, %s6
  %s9 = scalar_select 0, %s8, %s6
  loop: start=0, step=1, limit=4
  $region2: #{conv_block.1} parent=0 // loop_pre_header
    _
  $region3: #{conv_block.1} parent=0 // loop_header
    %s11 = sphi 0, %s15
    %p12 = scmp.ge.s32.totalorder %s11, 4
    %s18 = sphi 0, %s30
    %s19 = sphi 0, %s26
    %s20 = sphi 0, %s18
    %s21 = sphi 0, %s19
    %s22 = sphi 0, %s20
    %s23 = sphi 0, %s21
    %s35 = sphi 0, %s37
    %s38 = sphi 0, %s35
    %s39 = sphi 0, %s38
    %s55 = sphi 0, %s39
    %s67 = sphi 0, %s69
    %s70 = sphi 0, %s67
    %s71 = sphi 0, %s70
    %s87 = sphi 0, %s71
    %s91 = sphi 0, %s91
    %s93 = sphi 0, %s91
    %s94 = sphi 0, %s93
    %s108 = sphi 0, %s94
    %s116 = sphi 0, %s118
    %s119 = sphi 0, %s116
    %s120 = sphi 0, %s119
    %s136 = sphi 0, %s120
    %s144 = sphi 0, %s146
    %s147 = sphi 0, %s144
    %s148 = sphi 0, %s147
    %s164 = sphi 0, %s148
  $region4: #{conv_block.1} parent=0 // loop_header_branch
    %14 = sbr.rel (%p12) target = $region8
  $region5: #{conv_block.1} parent=0 // loop_body
    %s16 = ssub.s32 %s11, 1
    %s17 = ssub.s32 %s11, 2
    %s24 = sadd.s32 1, %s19
    %p25 = scmp.ge.s32.totalorder %s24, 1
    %s26 = scalar_select %p25, 0, %s24
    %s27 = sadd.s32 1, %s18
    %s28 = scalar_select %p25, %s27, %s18
    %p29 = scmp.ge.s32.totalorder %s28, 2
    %s30 = scalar_select %p29, 0, %s28
    %s31 = ssub.s32 %s18, %s30
    %s32 = ssub.s32 %s19, %s26
    %s33 = sor.u32 %s31, %s32
    %p34 = scmp.eq.s32.totalorder %s33, 0
    %s36 = sadd.s32 %s35, 1
    %s37 = scalar_select %p34, %s35, %s36
    %p40 = pneg %p34
    %p41 = scmp.eq.s32.totalorder %s11, 1
    %p42 = por %p40, %p41
    %p43 = scmp.ne.s32.totalorder %s35, %s38
    %p44 = scmp.eq.s32.totalorder %s11, 0
    %p45 = por %p43, %p44
    %p46 = scmp.ne.s32.totalorder %s35, %s38
    %p47 = scmp.eq.s32.totalorder %s16, 1
    %p48 = por %p46, %p47
    %p49 = scmp.ne.s32.totalorder %s38, %s39
    %p50 = scmp.eq.s32.totalorder %s16, 0
    %p51 = por %p49, %p50
    %p52 = scmp.ne.s32.totalorder %s38, %s39
    %p53 = scmp.eq.s32.totalorder %s17, 1
    %p54 = por %p52, %p53
    %p56 = scmp.ne.s32.totalorder %s39, %s55
    %p57 = scmp.eq.s32.totalorder %s17, 0
    %p58 = por %p56, %p57
    %s59 = sadd.s32 %s19, 1
    %s60 = smul.u32 %s59, 8
    %s61 = sadd.s32 %s26, 1
    %s62 = smul.u32 %s61, 8
    %s63 = ssub.s32 %s18, %s30
    %s64 = ssub.s32 %s60, %s62
    %s65 = sor.u32 %s63, %s64
    %p66 = scmp.eq.s32.totalorder %s65, 0
    %s68 = sadd.s32 %s67, 1
    %s69 = scalar_select %p66, %s67, %s68
    %p72 = pneg %p66
    %p73 = scmp.eq.s32.totalorder %s11, 1
    %p74 = por %p72, %p73
    %p75 = scmp.ne.s32.totalorder %s67, %s70
    %p76 = scmp.eq.s32.totalorder %s11, 0
    %p77 = por %p75, %p76
    %p78 = scmp.ne.s32.totalorder %s67, %s70
    %p79 = scmp.eq.s32.totalorder %s16, 1
    %p80 = por %p78, %p79
    %p81 = scmp.ne.s32.totalorder %s70, %s71
    %p82 = scmp.eq.s32.totalorder %s16, 0
    %p83 = por %p81, %p82
    %p84 = scmp.ne.s32.totalorder %s70, %s71
    %p85 = scmp.eq.s32.totalorder %s17, 1
    %p86 = por %p84, %p85
    %p88 = scmp.ne.s32.totalorder %s71, %s87
    %p89 = scmp.eq.s32.totalorder %s17, 0
    %p90 = por %p88, %p89
    %s92 = sadd.s32 %s91, 1
    %p95 = scmp.eq.s32.totalorder %s11, 1
    %p96 = scmp.ne.s32.totalorder %s91, %s93
    %p97 = scmp.eq.s32.totalorder %s11, 0
    %p98 = por %p96, %p97
    %p99 = scmp.ne.s32.totalorder %s91, %s93
    %p100 = scmp.eq.s32.totalorder %s16, 1
    %p101 = por %p99, %p100
    %p102 = scmp.ne.s32.totalorder %s93, %s94
    %p103 = scmp.eq.s32.totalorder %s16, 0
    %p104 = por %p102, %p103
    %p105 = scmp.ne.s32.totalorder %s93, %s94
    %p106 = scmp.eq.s32.totalorder %s17, 1
    %p107 = por %p105, %p106
    %p109 = scmp.ne.s32.totalorder %s94, %s108
    %p110 = scmp.eq.s32.totalorder %s17, 0
    %p111 = por %p109, %p110
    %s112 = ssub.s32 %s18, %s30
    %s113 = ssub.s32 %s19, %s26
    %s114 = sor.u32 %s112, %s113
    %p115 = scmp.eq.s32.totalorder %s114, 0
    %s117 = sadd.s32 %s116, 1
    %s118 = scalar_select %p115, %s116, %s117
    %p121 = pneg %p115
    %p122 = scmp.eq.s32.totalorder %s11, 1
    %p123 = por %p121, %p122
    %p124 = scmp.ne.s32.totalorder %s116, %s119
    %p125 = scmp.eq.s32.totalorder %s11, 0
    %p126 = por %p124, %p125
    %p127 = scmp.ne.s32.totalorder %s116, %s119
    %p128 = scmp.eq.s32.totalorder %s16, 1
    %p129 = por %p127, %p128
    %p130 = scmp.ne.s32.totalorder %s119, %s120
    %p131 = scmp.eq.s32.totalorder %s16, 0
    %p132 = por %p130, %p131
    %p133 = scmp.ne.s32.totalorder %s119, %s120
    %p134 = scmp.eq.s32.totalorder %s17, 1
    %p135 = por %p133, %p134
    %p137 = scmp.ne.s32.totalorder %s120, %s136
    %p138 = scmp.eq.s32.totalorder %s17, 0
    %p139 = por %p137, %p138
    %s140 = ssub.s32 %s18, %s30
    %s141 = ssub.s32 %s19, %s26
    %s142 = sor.u32 %s140, %s141
    %p143 = scmp.eq.s32.totalorder %s142, 0
    %s145 = sadd.s32 %s144, 1
    %s146 = scalar_select %p143, %s144, %s145
    %p149 = pneg %p143
    %p150 = scmp.eq.s32.totalorder %s11, 1
    %p151 = por %p149, %p150
    %p152 = scmp.ne.s32.totalorder %s144, %s147
    %p153 = scmp.eq.s32.totalorder %s11, 0
    %p154 = por %p152, %p153
    %p155 = scmp.ne.s32.totalorder %s144, %s147
    %p156 = scmp.eq.s32.totalorder %s16, 1
    %p157 = por %p155, %p156
    %p158 = scmp.ne.s32.totalorder %s147, %s148
    %p159 = scmp.eq.s32.totalorder %s16, 0
    %p160 = por %p158, %p159
    %p161 = scmp.ne.s32.totalorder %s147, %s148
    %p162 = scmp.eq.s32.totalorder %s17, 1
    %p163 = por %p161, %p162
    %p165 = scmp.ne.s32.totalorder %s148, %s164
    %p166 = scmp.eq.s32.totalorder %s17, 0
    %p167 = por %p165, %p166
    %p168 = scmp.le.s32.totalorder 1, %s11
    %p169 = scmp.lt.s32.totalorder %s11, 3
    %p170 = pnand %p168, %p169
    %p171 = pneg %p170
    // Predicated region
    $region9: #{conv_block.1} parent=5 // pred_check
      _
    $region10: #{conv_block.1} parent=5 // pred_check_branch
      %173 = sbr.rel (%p170) target = $region12
    $region11: #{conv_block.1} parent=5 // pred_region
      %s174 = ssub.s32 %s11, 1
      // Predicated region
      $region13: #{conv_block.1} parent=11 // pred_check
        %p175 = pneg %p104
      $region14: #{conv_block.1} parent=11 // pred_check_branch
        %177 = sbr.rel (%p175) target = $region16
      $region15: #{conv_block.1} parent=11 // pred_region
        _
      $region16: #{conv_block.1} parent=11 // pred_fallthru
        _
    $region12: #{conv_block.1} parent=5 // pred_fallthru
      _
    %p178 = scmp.lt.s32.totalorder %s11, 2
    // Predicated region
    $region17: #{conv_block.1} parent=5 // pred_check
      %p179 = pneg %p178
    $region18: #{conv_block.1} parent=5 // pred_check_branch
      %181 = sbr.rel (%p179) target = $region20
    $region19: #{conv_block.1} parent=5 // pred_region
      // Predicated region
      $region21: #{conv_block.1} parent=19 // pred_check
        %p182 = pneg %p45
      $region22: #{conv_block.1} parent=19 // pred_check_branch
        %184 = sbr.rel (%p182) target = $region24
      $region23: #{conv_block.1} parent=19 // pred_region
        %s185 = smul.u32 16, %s19
        %s186 = ssub.s32 18, %s185
        %p187 = scmp.lt.s32.totalorder %s186, 16
        %s188 = scalar_select %p187, %s186, 16
        %s189 = smul.u32 128, %s188
        %s190 = smul.u32 %s189, 3
        %p191 = scmp.lt.s32.totalorder %s18, 1
        %s192 = scalar_select %p191, %s18, 1
        %p193 = scmp.lt.s32.totalorder %s185, 17
        %s194 = scalar_select %p193, %s185, 17
        %s195 = smul.addr %s194, 3
        %s196 = smul.addr %s192, 54
        %s197 = sadd.s32 %s195, %s196
        %s198 = smul.addr %s197, 8
        %s199 = scalar_lea.vmem %s0, %s198
        %s200 = smul.u32 16, %s19
        %s201 = ssub.s32 18, %s200
        %p202 = scmp.lt.s32.totalorder %s201, 16
        %s203 = scalar_select %p202, %s201, 16
        %s204 = smul.u32 128, %s203
        %s205 = smul.u32 %s204, 3
      $region24: #{conv_block.1} parent=19 // pred_fallthru
        _
      // Predicated region
      $region25: #{conv_block.1} parent=19 // pred_check
        %p206 = pneg %p77
      $region26: #{conv_block.1} parent=19 // pred_check_branch
        %208 = sbr.rel (%p206) target = $region28
      $region27: #{conv_block.1} parent=19 // pred_region
        %s209 = sadd.s32 %s19, 1
        %s210 = smul.u32 %s209, 8
        %s211 = smul.u32 2, %s210
        %p212 = scmp.lt.s32.totalorder %s18, 1
        %s213 = scalar_select %p212, %s18, 1
        %p214 = scmp.lt.s32.totalorder %s211, 17
        %s215 = scalar_select %p214, %s211, 17
        %s216 = smul.addr %s215, 3
        %s217 = smul.addr %s213, 54
        %s218 = sadd.s32 %s216, %s217
        %s219 = smul.addr %s218, 8
        %s220 = scalar_lea.vmem %s1, %s219
        %s221 = sadd.s32 %s19, 1
        %s222 = smul.u32 %s221, 8
        %s223 = smul.u32 2, %s222
      $region28: #{conv_block.1} parent=19 // pred_fallthru
        _
    $region20: #{conv_block.1} parent=5 // pred_fallthru
      _
    %p224 = scmp.le.s32.totalorder 1, %s11
    %p225 = scmp.lt.s32.totalorder %s11, 3
    %p226 = pnand %p224, %p225
    %p227 = pneg %p226
    // Predicated region
    $region29: #{conv_block.1} parent=5 // pred_check
      _
    $region30: #{conv_block.1} parent=5 // pred_check_branch
      %229 = sbr.rel (%p226) target = $region32
    $region31: #{conv_block.1} parent=5 // pred_region
      %s230 = ssub.s32 %s11, 1
      %s231 = smul.u32 16, %s21
      %s232 = ssub.s32 18, %s231
      %p233 = scmp.lt.s32.totalorder %s232, 16
      %s234 = scalar_select %p233, %s232, 16
      %s235 = smul.u32 128, %s234
      %s236 = smul.u32 %s235, 3
      %p237 = scmp.lt.s32.totalorder %s20, 1
      %s238 = scalar_select %p237, %s20, 1
      %p239 = scmp.lt.s32.totalorder %s231, 17
      %s240 = scalar_select %p239, %s231, 17
      %s241 = smul.addr %s240, 3
      %s242 = smul.addr %s238, 54
      %s243 = sadd.s32 %s241, %s242
      %s244 = smul.addr %s243, 8
      %s245 = scalar_lea.vmem %s0, %s244
      %p246 = pneg %p51
      %p247 = pneg %p48
      %s248 = sadd.s32 %s21, 1
      %s249 = smul.u32 %s248, 8
      %s250 = smul.u32 2, %s249
      %p251 = scmp.lt.s32.totalorder %s20, 1
      %s252 = scalar_select %p251, %s20, 1
      %p253 = scmp.lt.s32.totalorder %s250, 17
      %s254 = scalar_select %p253, %s250, 17
      %s255 = smul.addr %s254, 3
      %s256 = smul.addr %s252, 54
      %s257 = sadd.s32 %s255, %s256
      %s258 = smul.addr %s257, 8
      %s259 = scalar_lea.vmem %s1, %s258
      %p260 = pneg %p83
      %p261 = pneg %p80
      %p262 = pneg %p104
      %p263 = pneg %p101
      %p264 = pneg %p132
      %p265 = pneg %p129
      %s266 = smul.u32 16, %s21
      %p267 = scmp.lt.s32.totalorder %s20, 1
      %s268 = scalar_select %p267, %s20, 1
      %p269 = scmp.lt.s32.totalorder %s266, 15
      %s270 = scalar_select %p269, %s266, 15
      %s271 = smul.addr %s270, 2
      %s272 = smul.addr %s268, 32
      %s273 = sadd.s32 %s271, %s272
      %s274 = smul.addr %s273, 8
      %s275 = scalar_lea.vmem %s3, %s274
      %p276 = pneg %p160
      %p277 = pneg %p157
      %p278 = scmp.lt.s32.totalorder %s20, 1
      %s279 = scalar_select %p278, %s20, 1
      %p280 = scmp.lt.s32.totalorder %s21, 0
      %s281 = scalar_select %p280, %s21, 0
      %s282 = sadd.s32 %s281, %s279
      %s283 = smul.addr %s282, 2
      %s284 = scalar_lea.vmem %s4, %s283
      %s285 = smul.u32 16, %s21
      %s286 = ssub.s32 18, %s285
      %p287 = scmp.lt.s32.totalorder %s286, 16
      %s288 = scalar_select %p287, %s286, 16
      %s289 = smul.u32 128, %s288
      %s290 = smul.u32 %s289, 3
      %p291 = scmp.lt.s32.totalorder %s20, 1
      %s292 = scalar_select %p291, %s20, 1
      %p293 = scmp.lt.s32.totalorder %s285, 17
      %s294 = scalar_select %p293, %s285, 17
      %s295 = smul.addr %s294, 3
      %s296 = smul.addr %s292, 54
      %s297 = sadd.s32 %s295, %s296
      %s298 = smul.addr %s297, 8
      %s299 = scalar_lea.vmem %s0, %s298
      %s300 = smul.u32 16, %s21
      %s301 = ssub.s32 18, %s300
      %p302 = scmp.lt.s32.totalorder %s301, 16
      %s303 = scalar_select %p302, %s301, 16
      %s304 = smul.u32 128, %s303
      %s305 = smul.u32 %s304, 3
      %s306 = sadd.s32 %s21, 1
      %s307 = smul.u32 %s306, 8
      %s308 = smul.u32 2, %s307
      %p309 = scmp.lt.s32.totalorder %s20, 1
      %s310 = scalar_select %p309, %s20, 1
      %p311 = scmp.lt.s32.totalorder %s308, 17
      %s312 = scalar_select %p311, %s308, 17
      %s313 = smul.addr %s312, 3
      %s314 = smul.addr %s310, 54
      %s315 = sadd.s32 %s313, %s314
      %s316 = smul.addr %s315, 8
      %s317 = scalar_lea.vmem %s1, %s316
      %s318 = sadd.s32 %s21, 1
      %s319 = smul.u32 %s318, 8
      %s320 = smul.u32 2, %s319
      %s321 = smul.u32 16, %s21
      %p322 = scmp.lt.s32.totalorder %s20, 1
      %s323 = scalar_select %p322, %s20, 1
      %p324 = scmp.lt.s32.totalorder %s321, 15
      %s325 = scalar_select %p324, %s321, 15
      %s326 = smul.addr %s325, 2
      %s327 = smul.addr %s323, 32
      %s328 = sadd.s32 %s326, %s327
      %s329 = smul.addr %s328, 8
      %s330 = scalar_lea.vmem %s3, %s329
      %s331 = smul.u32 16, %s21
      %p332 = scmp.lt.s32.totalorder %s20, 1
      %s333 = scalar_select %p332, %s20, 1
      %p334 = scmp.lt.s32.totalorder %s21, 0
      %s335 = scalar_select %p334, %s21, 0
      %s336 = sadd.s32 %s335, %s333
      %s337 = smul.addr %s336, 2
      %s338 = scalar_lea.vmem %s4, %s337
      %v339 = vld [vmem:[%s299] sm:$0xff]
      %v340 = vld [vmem:[%s299 + $0x8] sm:$0xff]
      %v341 = vld [vmem:[%s299 + $0x18] sm:$0xff]
      %v342 = vld [vmem:[%s299 + $0x20] sm:$0xff]
      %v343 = vld [vmem:[%s299 + $0x30] sm:$0xff]
      %v344 = vld [vmem:[%s299 + $0x38] sm:$0xff]
      %v345 = vld [vmem:[%s299 + $0x48] sm:$0xff]
      %v346 = vld [vmem:[%s299 + $0x50] sm:$0xff]
      %v347 = vld [vmem:[%s299 + $0x60] sm:$0xff]
      %v348 = vld [vmem:[%s299 + $0x68] sm:$0xff]
      %v349 = vld [vmem:[%s299 + $0x78] sm:$0xff]
      %v350 = vld [vmem:[%s299 + $0x80] sm:$0xff]
      %v351 = vld [vmem:[%s299 + $0x90] sm:$0xff]
      %v352 = vld [vmem:[%s299 + $0x98] sm:$0xff]
      %v353 = vld [vmem:[%s299 + $0xa8] sm:$0xff]
      %v354 = vld [vmem:[%s299 + $0xb0] sm:$0xff]
      %v355 = vld [vmem:[%s299 + $0xc0] sm:$0xff]
      %v356 = vld [vmem:[%s299 + $0xc8] sm:$0xff]
      %v357 = vld [vmem:[%s299 + $0xd8] sm:$0xff]
      %v358 = vld [vmem:[%s299 + $0xe0] sm:$0xff]
      %v359 = vld [vmem:[%s299 + $0xf0] sm:$0xff]
      %v360 = vld [vmem:[%s299 + $0xf8] sm:$0xff]
      %v361 = vld [vmem:[%s299 + $0x108] sm:$0xff]
      %v362 = vld [vmem:[%s299 + $0x110] sm:$0xff]
      %v363 = vld [vmem:[%s299 + $0x120] sm:$0xff]
      %v364 = vld [vmem:[%s299 + $0x128] sm:$0xff]
      %v365 = vld [vmem:[%s299 + $0x138] sm:$0xff]
      %v366 = vld [vmem:[%s299 + $0x140] sm:$0xff]
      %v367 = vld [vmem:[%s299 + $0x150] sm:$0xff]
      %v368 = vld [vmem:[%s299 + $0x158] sm:$0xff]
      %v369 = vld [vmem:[%s299 + $0x168] sm:$0xff]
      %v370 = vld [vmem:[%s299 + $0x170] sm:$0xff]
      %371 = vst [vmem:[#allocation2] sm:$0xff] %v339
      %372 = vst [vmem:[#allocation2 + $0x18] sm:$0xff] %v340
      %373 = vst [vmem:[#allocation2 + $0x30] sm:$0xff] %v341
      %374 = vst [vmem:[#allocation2 + $0x48] sm:$0xff] %v342
      %375 = vst [vmem:[#allocation2 + $0x60] sm:$0xff] %v343
      %376 = vst [vmem:[#allocation2 + $0x78] sm:$0xff] %v344
      %377 = vst [vmem:[#allocation2 + $0x90] sm:$0xff] %v345
      %378 = vst [vmem:[#allocation2 + $0xa8] sm:$0xff] %v346
      %379 = vst [vmem:[#allocation2 + $0xc0] sm:$0xff] %v347
      %380 = vst [vmem:[#allocation2 + $0xd8] sm:$0xff] %v348
      %381 = vst [vmem:[#allocation2 + $0xf0] sm:$0xff] %v349
      %382 = vst [vmem:[#allocation2 + $0x108] sm:$0xff] %v350
      %383 = vst [vmem:[#allocation2 + $0x120] sm:$0xff] %v351
      %384 = vst [vmem:[#allocation2 + $0x138] sm:$0xff] %v352
      %385 = vst [vmem:[#allocation2 + $0x150] sm:$0xff] %v353
      %386 = vst [vmem:[#allocation2 + $0x168] sm:$0xff] %v354
      %387 = vst [vmem:[#allocation2 + $0x180] sm:$0xff] %v355
      %388 = vst [vmem:[#allocation2 + $0x198] sm:$0xff] %v356
      %389 = vst [vmem:[#allocation2 + $0x1b0] sm:$0xff] %v357
      %390 = vst [vmem:[#allocation2 + $0x1c8] sm:$0xff] %v358
      %391 = vst [vmem:[#allocation2 + $0x1e0] sm:$0xff] %v359
      %392 = vst [vmem:[#allocation2 + $0x1f8] sm:$0xff] %v360
      %393 = vst [vmem:[#allocation2 + $0x210] sm:$0xff] %v361
      %394 = vst [vmem:[#allocation2 + $0x228] sm:$0xff] %v362
      %395 = vst [vmem:[#allocation2 + $0x240] sm:$0xff] %v363
      %396 = vst [vmem:[#allocation2 + $0x258] sm:$0xff] %v364
      %397 = vst [vmem:[#allocation2 + $0x270] sm:$0xff] %v365
      %398 = vst [vmem:[#allocation2 + $0x288] sm:$0xff] %v366
      %399 = vst [vmem:[#allocation2 + $0x2a0] sm:$0xff] %v367
      %400 = vst [vmem:[#allocation2 + $0x2b8] sm:$0xff] %v368
      %401 = vst [vmem:[#allocation2 + $0x2d0] sm:$0xff] %v369
      %402 = vst [vmem:[#allocation2 + $0x2e8] sm:$0xff] %v370
      %v403 = vld [vmem:[%s317] sm:$0xff]
      %v404 = vld [vmem:[%s317 + $0x8] sm:$0xff]
      %v405 = vld [vmem:[%s317 + $0x18] sm:$0xff]
      %v406 = vld [vmem:[%s317 + $0x20] sm:$0xff]
      %s407 = scalar_lea.vmem [#allocation2], 768
      %408 = vst [vmem:[%s407] sm:$0xff] %v403
      %409 = vst [vmem:[%s407 + $0x18] sm:$0xff] %v404
      %410 = vst [vmem:[%s407 + $0x30] sm:$0xff] %v405
      %411 = vst [vmem:[%s407 + $0x48] sm:$0xff] %v406
      %v412 = vld [vmem:[%s299 + $0x1] sm:$0xff]
      %v413 = vld [vmem:[%s299 + $0x9] sm:$0xff]
      %v414 = vld [vmem:[%s299 + $0x19] sm:$0xff]
      %v415 = vld [vmem:[%s299 + $0x21] sm:$0xff]
      %v416 = vld [vmem:[%s299 + $0x31] sm:$0xff]
      %v417 = vld [vmem:[%s299 + $0x39] sm:$0xff]
      %v418 = vld [vmem:[%s299 + $0x49] sm:$0xff]
      %v419 = vld [vmem:[%s299 + $0x51] sm:$0xff]
      %v420 = vld [vmem:[%s299 + $0x61] sm:$0xff]
      %v421 = vld [vmem:[%s299 + $0x69] sm:$0xff]
      %v422 = vld [vmem:[%s299 + $0x79] sm:$0xff]
      %v423 = vld [vmem:[%s299 + $0x81] sm:$0xff]
      %v424 = vld [vmem:[%s299 + $0x91] sm:$0xff]
      %v425 = vld [vmem:[%s299 + $0x99] sm:$0xff]
      %v426 = vld [vmem:[%s299 + $0xa9] sm:$0xff]
      %v427 = vld [vmem:[%s299 + $0xb1] sm:$0xff]
      %v428 = vld [vmem:[%s299 + $0xc1] sm:$0xff]
      %v429 = vld [vmem:[%s299 + $0xc9] sm:$0xff]
      %v430 = vld [vmem:[%s299 + $0xd9] sm:$0xff]
      %v431 = vld [vmem:[%s299 + $0xe1] sm:$0xff]
      %v432 = vld [vmem:[%s299 + $0xf1] sm:$0xff]
      %v433 = vld [vmem:[%s299 + $0xf9] sm:$0xff]
      %v434 = vld [vmem:[%s299 + $0x109] sm:$0xff]
      %v435 = vld [vmem:[%s299 + $0x111] sm:$0xff]
      %v436 = vld [vmem:[%s299 + $0x121] sm:$0xff]
      %v437 = vld [vmem:[%s299 + $0x129] sm:$0xff]
      %v438 = vld [vmem:[%s299 + $0x139] sm:$0xff]
      %v439 = vld [vmem:[%s299 + $0x141] sm:$0xff]
      %v440 = vld [vmem:[%s299 + $0x151] sm:$0xff]
      %v441 = vld [vmem:[%s299 + $0x159] sm:$0xff]
      %v442 = vld [vmem:[%s299 + $0x169] sm:$0xff]
      %v443 = vld [vmem:[%s299 + $0x171] sm:$0xff]
      %444 = vst [vmem:[#allocation2 + $0x8] sm:$0xff] %v412
      %445 = vst [vmem:[#allocation2 + $0x20] sm:$0xff] %v413
      %446 = vst [vmem:[#allocation2 + $0x38] sm:$0xff] %v414
      %447 = vst [vmem:[#allocation2 + $0x50] sm:$0xff] %v415
      %448 = vst [vmem:[#allocation2 + $0x68] sm:$0xff] %v416
      %449 = vst [vmem:[#allocation2 + $0x80] sm:$0xff] %v417
      %450 = vst [vmem:[#allocation2 + $0x98] sm:$0xff] %v418
      %451 = vst [vmem:[#allocation2 + $0xb0] sm:$0xff] %v419
      %452 = vst [vmem:[#allocation2 + $0xc8] sm:$0xff] %v420
      %453 = vst [vmem:[#allocation2 + $0xe0] sm:$0xff] %v421
      %454 = vst [vmem:[#allocation2 + $0xf8] sm:$0xff] %v422
      %455 = vst [vmem:[#allocation2 + $0x110] sm:$0xff] %v423
      %456 = vst [vmem:[#allocation2 + $0x128] sm:$0xff] %v424
      %457 = vst [vmem:[#allocation2 + $0x140] sm:$0xff] %v425
      %458 = vst [vmem:[#allocation2 + $0x158] sm:$0xff] %v426
      %459 = vst [vmem:[#allocation2 + $0x170] sm:$0xff] %v427
      %460 = vst [vmem:[#allocation2 + $0x188] sm:$0xff] %v428
      %461 = vst [vmem:[#allocation2 + $0x1a0] sm:$0xff] %v429
      %462 = vst [vmem:[#allocation2 + $0x1b8] sm:$0xff] %v430
      %463 = vst [vmem:[#allocation2 + $0x1d0] sm:$0xff] %v431
      %464 = vst [vmem:[#allocation2 + $0x1e8] sm:$0xff] %v432
      %465 = vst [vmem:[#allocation2 + $0x200] sm:$0xff] %v433
      %466 = vst [vmem:[#allocation2 + $0x218] sm:$0xff] %v434
      %467 = vst [vmem:[#allocation2 + $0x230] sm:$0xff] %v435
      %468 = vst [vmem:[#allocation2 + $0x248] sm:$0xff] %v436
      %469 = vst [vmem:[#allocation2 + $0x260] sm:$0xff] %v437
      %470 = vst [vmem:[#allocation2 + $0x278] sm:$0xff] %v438
      %471 = vst [vmem:[#allocation2 + $0x290] sm:$0xff] %v439
      %472 = vst [vmem:[#allocation2 + $0x2a8] sm:$0xff] %v440
      %473 = vst [vmem:[#allocation2 + $0x2c0] sm:$0xff] %v441
      %474 = vst [vmem:[#allocation2 + $0x2d8] sm:$0xff] %v442
      %475 = vst [vmem:[#allocation2 + $0x2f0] sm:$0xff] %v443
      %v476 = vld [vmem:[%s317 + $0x1] sm:$0xff]
      %v477 = vld [vmem:[%s317 + $0x9] sm:$0xff]
      %v478 = vld [vmem:[%s317 + $0x19] sm:$0xff]
      %v479 = vld [vmem:[%s317 + $0x21] sm:$0xff]
      %480 = vst [vmem:[%s407 + $0x8] sm:$0xff] %v476
      %481 = vst [vmem:[%s407 + $0x20] sm:$0xff] %v477
      %482 = vst [vmem:[%s407 + $0x38] sm:$0xff] %v478
      %483 = vst [vmem:[%s407 + $0x50] sm:$0xff] %v479
      %v484 = vld [vmem:[%s299 + $0x2] sm:$0xff]
      %v485 = vld [vmem:[%s299 + $0xa] sm:$0xff]
      %v486 = vld [vmem:[%s299 + $0x1a] sm:$0xff]
      %v487 = vld [vmem:[%s299 + $0x22] sm:$0xff]
      %v488 = vld [vmem:[%s299 + $0x32] sm:$0xff]
      %v489 = vld [vmem:[%s299 + $0x3a] sm:$0xff]
      %v490 = vld [vmem:[%s299 + $0x4a] sm:$0xff]
      %v491 = vld [vmem:[%s299 + $0x52] sm:$0xff]
      %v492 = vld [vmem:[%s299 + $0x62] sm:$0xff]
      %v493 = vld [vmem:[%s299 + $0x6a] sm:$0xff]
      %v494 = vld [vmem:[%s299 + $0x7a] sm:$0xff]
      %v495 = vld [vmem:[%s299 + $0x82] sm:$0xff]
      %v496 = vld [vmem:[%s299 + $0x92] sm:$0xff]
      %v497 = vld [vmem:[%s299 + $0x9a] sm:$0xff]
      %v498 = vld [vmem:[%s299 + $0xaa] sm:$0xff]
      %v499 = vld [vmem:[%s299 + $0xb2] sm:$0xff]
      %v500 = vld [vmem:[%s299 + $0xc2] sm:$0xff]
      %v501 = vld [vmem:[%s299 + $0xca] sm:$0xff]
      %v502 = vld [vmem:[%s299 + $0xda] sm:$0xff]
      %v503 = vld [vmem:[%s299 + $0xe2] sm:$0xff]
      %v504 = vld [vmem:[%s299 + $0xf2] sm:$0xff]
      %v505 = vld [vmem:[%s299 + $0xfa] sm:$0xff]
      %v506 = vld [vmem:[%s299 + $0x10a] sm:$0xff]
      %v507 = vld [vmem:[%s299 + $0x112] sm:$0xff]
      %v508 = vld [vmem:[%s299 + $0x122] sm:$0xff]
      %v509 = vld [vmem:[%s299 + $0x12a] sm:$0xff]
      %v510 = vld [vmem:[%s299 + $0x13a] sm:$0xff]
      %v511 = vld [vmem:[%s299 + $0x142] sm:$0xff]
      %v512 = vld [vmem:[%s299 + $0x152] sm:$0xff]
      %v513 = vld [vmem:[%s299 + $0x15a] sm:$0xff]
      %v514 = vld [vmem:[%s299 + $0x16a] sm:$0xff]
      %v515 = vld [vmem:[%s299 + $0x172] sm:$0xff]
      %516 = vst [vmem:[#allocation2 + $0x10] sm:$0xff] %v484
      %517 = vst [vmem:[#allocation2 + $0x28] sm:$0xff] %v485
      %518 = vst [vmem:[#allocation2 + $0x40] sm:$0xff] %v486
      %519 = vst [vmem:[#allocation2 + $0x58] sm:$0xff] %v487
      %520 = vst [vmem:[#allocation2 + $0x70] sm:$0xff] %v488
      %521 = vst [vmem:[#allocation2 + $0x88] sm:$0xff] %v489
      %522 = vst [vmem:[#allocation2 + $0xa0] sm:$0xff] %v490
      %523 = vst [vmem:[#allocation2 + $0xb8] sm:$0xff] %v491
      %524 = vst [vmem:[#allocation2 + $0xd0] sm:$0xff] %v492
      %525 = vst [vmem:[#allocation2 + $0xe8] sm:$0xff] %v493
      %526 = vst [vmem:[#allocation2 + $0x100] sm:$0xff] %v494
      %527 = vst [vmem:[#allocation2 + $0x118] sm:$0xff] %v495
      %528 = vst [vmem:[#allocation2 + $0x130] sm:$0xff] %v496
      %529 = vst [vmem:[#allocation2 + $0x148] sm:$0xff] %v497
      %530 = vst [vmem:[#allocation2 + $0x160] sm:$0xff] %v498
      %531 = vst [vmem:[#allocation2 + $0x178] sm:$0xff] %v499
      %532 = vst [vmem:[#allocation2 + $0x190] sm:$0xff] %v500
      %533 = vst [vmem:[#allocation2 + $0x1a8] sm:$0xff] %v501
      %534 = vst [vmem:[#allocation2 + $0x1c0] sm:$0xff] %v502
      %535 = vst [vmem:[#allocation2 + $0x1d8] sm:$0xff] %v503
      %536 = vst [vmem:[#allocation2 + $0x1f0] sm:$0xff] %v504
      %537 = vst [vmem:[#allocation2 + $0x208] sm:$0xff] %v505
      %538 = vst [vmem:[#allocation2 + $0x220] sm:$0xff] %v506
      %539 = vst [vmem:[#allocation2 + $0x238] sm:$0xff] %v507
      %540 = vst [vmem:[#allocation2 + $0x250] sm:$0xff] %v508
      %541 = vst [vmem:[#allocation2 + $0x268] sm:$0xff] %v509
      %542 = vst [vmem:[#allocation2 + $0x280] sm:$0xff] %v510
      %543 = vst [vmem:[#allocation2 + $0x298] sm:$0xff] %v511
      %544 = vst [vmem:[#allocation2 + $0x2b0] sm:$0xff] %v512
      %545 = vst [vmem:[#allocation2 + $0x2c8] sm:$0xff] %v513
      %546 = vst [vmem:[#allocation2 + $0x2e0] sm:$0xff] %v514
      %547 = vst [vmem:[#allocation2 + $0x2f8] sm:$0xff] %v515
      %v548 = vld [vmem:[%s317 + $0x2] sm:$0xff]
      %v549 = vld [vmem:[%s317 + $0xa] sm:$0xff]
      %v550 = vld [vmem:[%s317 + $0x1a] sm:$0xff]
      %v551 = vld [vmem:[%s317 + $0x22] sm:$0xff]
      %552 = vst [vmem:[%s407 + $0x10] sm:$0xff] %v548
      %553 = vst [vmem:[%s407 + $0x28] sm:$0xff] %v549
      %554 = vst [vmem:[%s407 + $0x40] sm:$0xff] %v550
      %555 = vst [vmem:[%s407 + $0x58] sm:$0xff] %v551
      %v556 = vld [vmem:[#allocation2] sm:$0xff]
      %v557 = vld [vmem:[#allocation2 + $0x8] sm:$0xff]
      %v558 = vld [vmem:[#allocation2 + $0x10] sm:$0xff]
      %v559 = vld [vmem:[#allocation2 + $0x18] sm:$0xff]
      %v560 = vld [vmem:[#allocation2 + $0x20] sm:$0xff]
      %v561 = vld [vmem:[#allocation2 + $0x28] sm:$0xff]
      %v562 = vld [vmem:[#allocation2 + $0x30] sm:$0xff]
      %v563 = vld [vmem:[#allocation2 + $0x38] sm:$0xff]
      %v564 = vld [vmem:[#allocation2 + $0x40] sm:$0xff]
      %v565 = vld [vmem:[#allocation2 + $0x48] sm:$0xff]
      %v566 = vld [vmem:[#allocation2 + $0x50] sm:$0xff]
      %v567 = vld [vmem:[#allocation2 + $0x58] sm:$0xff]
      %v568 = vld [vmem:[#allocation2 + $0x60] sm:$0xff]
      %v569 = vld [vmem:[#allocation2 + $0x68] sm:$0xff]
      %v570 = vld [vmem:[#allocation2 + $0x70] sm:$0xff]
      %v571 = vld [vmem:[#allocation2 + $0x78] sm:$0xff]
      %v572 = vld [vmem:[#allocation2 + $0x80] sm:$0xff]
      %v573 = vld [vmem:[#allocation2 + $0x88] sm:$0xff]
      %v574 = vld [vmem:[#allocation2 + $0x90] sm:$0xff]
      %v575 = vld [vmem:[#allocation2 + $0x98] sm:$0xff]
      %v576 = vld [vmem:[#allocation2 + $0xa0] sm:$0xff]
      %v577 = vld [vmem:[#allocation2 + $0xa8] sm:$0xff]
      %v578 = vld [vmem:[#allocation2 + $0xb0] sm:$0xff]
      %v579 = vld [vmem:[#allocation2 + $0xb8] sm:$0xff]
      %v580 = vld [vmem:[#allocation2 + $0xc0] sm:$0xff]
      %v581 = vld [vmem:[#allocation2 + $0xc8] sm:$0xff]
      %v582 = vld [vmem:[#allocation2 + $0xd0] sm:$0xff]
      %v583 = vld [vmem:[#allocation2 + $0xd8] sm:$0xff]
      %v584 = vld [vmem:[#allocation2 + $0xe0] sm:$0xff]
      %v585 = vld [vmem:[#allocation2 + $0xe8] sm:$0xff]
      %v586 = vld [vmem:[#allocation2 + $0xf0] sm:$0xff]
      %v587 = vld [vmem:[#allocation2 + $0xf8] sm:$0xff]
      %v588 = vld [vmem:[#allocation2 + $0x100] sm:$0xff]
      %v589 = vld [vmem:[#allocation2 + $0x108] sm:$0xff]
      %v590 = vld [vmem:[#allocation2 + $0x110] sm:$0xff]
      %v591 = vld [vmem:[#allocation2 + $0x118] sm:$0xff]
      %v592 = vld [vmem:[#allocation2 + $0x120] sm:$0xff]
      %v593 = vld [vmem:[#allocation2 + $0x128] sm:$0xff]
      %v594 = vld [vmem:[#allocation2 + $0x130] sm:$0xff]
      %v595 = vld [vmem:[#allocation2 + $0x138] sm:$0xff]
      %v596 = vld [vmem:[#allocation2 + $0x140] sm:$0xff]
      %v597 = vld [vmem:[#allocation2 + $0x148] sm:$0xff]
      %v598 = vld [vmem:[#allocation2 + $0x150] sm:$0xff]
      %v599 = vld [vmem:[#allocation2 + $0x158] sm:$0xff]
      %v600 = vld [vmem:[#allocation2 + $0x160] sm:$0xff]
      %v601 = vld [vmem:[#allocation2 + $0x168] sm:$0xff]
      %v602 = vld [vmem:[#allocation2 + $0x170] sm:$0xff]
      %v603 = vld [vmem:[#allocation2 + $0x178] sm:$0xff]
      %v604 = vld [vmem:[#allocation2 + $0x180] sm:$0xff]
      %v605 = vld [vmem:[#allocation2 + $0x188] sm:$0xff]
      %v606 = vld [vmem:[#allocation2 + $0x190] sm:$0xff]
      %v607 = vld [vmem:[#allocation2 + $0x198] sm:$0xff]
      %v608 = vld [vmem:[#allocation2 + $0x1a0] sm:$0xff]
      %v609 = vld [vmem:[#allocation2 + $0x1a8] sm:$0xff]
      %v610 = vld [vmem:[#allocation2 + $0x1b0] sm:$0xff]
      %v611 = vld [vmem:[#allocation2 + $0x1b8] sm:$0xff]
      %v612 = vld [vmem:[#allocation2 + $0x1c0] sm:$0xff]
      %v613 = vld [vmem:[#allocation2 + $0x1c8] sm:$0xff]
      %v614 = vld [vmem:[#allocation2 + $0x1d0] sm:$0xff]
      %v615 = vld [vmem:[#allocation2 + $0x1d8] sm:$0xff]
      %v616 = vld [vmem:[#allocation2 + $0x1e0] sm:$0xff]
      %v617 = vld [vmem:[#allocation2 + $0x1e8] sm:$0xff]
      %v618 = vld [vmem:[#allocation2 + $0x1f0] sm:$0xff]
      %v619 = vld [vmem:[#allocation2 + $0x1f8] sm:$0xff]
      %v620 = vld [vmem:[#allocation2 + $0x200] sm:$0xff]
      %v621 = vld [vmem:[#allocation2 + $0x208] sm:$0xff]
      %v622 = vld [vmem:[#allocation2 + $0x210] sm:$0xff]
      %v623 = vld [vmem:[#allocation2 + $0x218] sm:$0xff]
      %v624 = vld [vmem:[#allocation2 + $0x220] sm:$0xff]
      %v625 = vld [vmem:[#allocation2 + $0x228] sm:$0xff]
      %v626 = vld [vmem:[#allocation2 + $0x230] sm:$0xff]
      %v627 = vld [vmem:[#allocation2 + $0x238] sm:$0xff]
      %v628 = vld [vmem:[#allocation2 + $0x240] sm:$0xff]
      %v629 = vld [vmem:[#allocation2 + $0x248] sm:$0xff]
      %v630 = vld [vmem:[#allocation2 + $0x250] sm:$0xff]
      %v631 = vld [vmem:[#allocation2 + $0x258] sm:$0xff]
      %v632 = vld [vmem:[#allocation2 + $0x260] sm:$0xff]
      %v633 = vld [vmem:[#allocation2 + $0x268] sm:$0xff]
      %v634 = vld [vmem:[#allocation2 + $0x270] sm:$0xff]
      %v635 = vld [vmem:[#allocation2 + $0x278] sm:$0xff]
      %v636 = vld [vmem:[#allocation2 + $0x280] sm:$0xff]
      %v637 = vld [vmem:[#allocation2 + $0x288] sm:$0xff]
      %v638 = vld [vmem:[#allocation2 + $0x290] sm:$0xff]
      %v639 = vld [vmem:[#allocation2 + $0x298] sm:$0xff]
      %v640 = vld [vmem:[#allocation2 + $0x2a0] sm:$0xff]
      %v641 = vld [vmem:[#allocation2 + $0x2a8] sm:$0xff]
      %v642 = vld [vmem:[#allocation2 + $0x2b0] sm:$0xff]
      %v643 = vld [vmem:[#allocation2 + $0x2b8] sm:$0xff]
      %v644 = vld [vmem:[#allocation2 + $0x2c0] sm:$0xff]
      %v645 = vld [vmem:[#allocation2 + $0x2c8] sm:$0xff]
      %v646 = vld [vmem:[#allocation2 + $0x2d0] sm:$0xff]
      %v647 = vld [vmem:[#allocation2 + $0x2d8] sm:$0xff]
      %v648 = vld [vmem:[#allocation2 + $0x2e0] sm:$0xff]
      %v649 = vld [vmem:[#allocation2 + $0x2e8] sm:$0xff]
      %v650 = vld [vmem:[#allocation2 + $0x2f0] sm:$0xff]
      %v651 = vld [vmem:[#allocation2 + $0x2f8] sm:$0xff]
      %v652 = vld [vmem:[%s2] sm:$0xff]
      %v653 = vld [vmem:[%s2 + $0x8] sm:$0xff]
      %v654 = vld [vmem:[%s2 + $0x10] sm:$0xff]
      %v655 = vld [vmem:[%s2 + $0x18] sm:$0xff]
      %v656 = vld [vmem:[%s2 + $0x20] sm:$0xff]
      %v657 = vld [vmem:[%s2 + $0x28] sm:$0xff]
      %v658 = vld [vmem:[%s2 + $0x30] sm:$0xff]
      %v659 = vld [vmem:[%s2 + $0x38] sm:$0xff]
      %v660 = vld [vmem:[%s2 + $0x40] sm:$0xff]
      %v661 = vld [vmem:[%s2 + $0x48] sm:$0xff]
      %v662 = vld [vmem:[%s2 + $0x50] sm:$0xff]
      %v663 = vld [vmem:[%s2 + $0x58] sm:$0xff]
      %v664 = vld [vmem:[%s2 + $0x60] sm:$0xff]
      %v665 = vld [vmem:[%s2 + $0x68] sm:$0xff]
      %v666 = vld [vmem:[%s2 + $0x70] sm:$0xff]
      %v667 = vld [vmem:[%s2 + $0x78] sm:$0xff]
      %v668 = vld [vmem:[%s2 + $0x80] sm:$0xff]
      %v669 = vld [vmem:[%s2 + $0x88] sm:$0xff]
      %v670 = vld [vmem:[%s2 + $0x90] sm:$0xff]
      %v671 = vld [vmem:[%s2 + $0x98] sm:$0xff]
      %v672 = vld [vmem:[%s2 + $0xa0] sm:$0xff]
      %v673 = vld [vmem:[%s2 + $0xa8] sm:$0xff]
      %v674 = vld [vmem:[%s2 + $0xb0] sm:$0xff]
      %v675 = vld [vmem:[%s2 + $0xb8] sm:$0xff]
      %v676 = vld [vmem:[%s2 + $0xc0] sm:$0xff]
      %v677 = vld [vmem:[%s2 + $0xc8] sm:$0xff]
      %v678 = vld [vmem:[%s2 + $0xd0] sm:$0xff]
      %v679 = vld [vmem:[%s2 + $0xd8] sm:$0xff]
      %v680 = vld [vmem:[%s2 + $0xe0] sm:$0xff]
      %v681 = vld [vmem:[%s2 + $0xe8] sm:$0xff]
      %v682 = vld [vmem:[%s2 + $0xf0] sm:$0xff]
      %v683 = vld [vmem:[%s2 + $0xf8] sm:$0xff]
      %v684 = vld [vmem:[%s2 + $0x100] sm:$0xff]
      %v685 = vld [vmem:[%s2 + $0x108] sm:$0xff]
      %v686 = vld [vmem:[%s2 + $0x110] sm:$0xff]
      %v687 = vld [vmem:[%s2 + $0x118] sm:$0xff]
      %v688 = vld [vmem:[%s2 + $0x120] sm:$0xff]
      %v689 = vld [vmem:[%s2 + $0x128] sm:$0xff]
      %v690 = vld [vmem:[%s2 + $0x130] sm:$0xff]
      %v691 = vld [vmem:[%s2 + $0x138] sm:$0xff]
      %v692 = vld [vmem:[%s2 + $0x140] sm:$0xff]
      %v693 = vld [vmem:[%s2 + $0x148] sm:$0xff]
      %v694 = vld [vmem:[%s2 + $0x150] sm:$0xff]
      %v695 = vld [vmem:[%s2 + $0x158] sm:$0xff]
      %v696 = vld [vmem:[%s2 + $0x160] sm:$0xff]
      %v697 = vld [vmem:[%s2 + $0x168] sm:$0xff]
      %v698 = vld [vmem:[%s2 + $0x170] sm:$0xff]
      %v699 = vld [vmem:[%s2 + $0x178] sm:$0xff]
      %s700 = scalar_lea.vmem [#allocation2], 48
      %v701 = vld [vmem:[%s700] sm:$0xff]
      %v702 = vld [vmem:[%s700 + $0x8] sm:$0xff]
      %v703 = vld [vmem:[%s700 + $0x10] sm:$0xff]
      %v704 = vld [vmem:[%s700 + $0x18] sm:$0xff]
      %v705 = vld [vmem:[%s700 + $0x20] sm:$0xff]
      %v706 = vld [vmem:[%s700 + $0x28] sm:$0xff]
      %v707 = vld [vmem:[%s700 + $0x30] sm:$0xff]
      %v708 = vld [vmem:[%s700 + $0x38] sm:$0xff]
      %v709 = vld [vmem:[%s700 + $0x40] sm:$0xff]
      %v710 = vld [vmem:[%s700 + $0x48] sm:$0xff]
      %v711 = vld [vmem:[%s700 + $0x50] sm:$0xff]
      %v712 = vld [vmem:[%s700 + $0x58] sm:$0xff]
      %v713 = vld [vmem:[%s700 + $0x60] sm:$0xff]
      %v714 = vld [vmem:[%s700 + $0x68] sm:$0xff]
      %v715 = vld [vmem:[%s700 + $0x70] sm:$0xff]
      %v716 = vld [vmem:[%s700 + $0x78] sm:$0xff]
      %v717 = vld [vmem:[%s700 + $0x80] sm:$0xff]
      %v718 = vld [vmem:[%s700 + $0x88] sm:$0xff]
      %v719 = vld [vmem:[%s700 + $0x90] sm:$0xff]
      %v720 = vld [vmem:[%s700 + $0x98] sm:$0xff]
      %v721 = vld [vmem:[%s700 + $0xa0] sm:$0xff]
      %v722 = vld [vmem:[%s700 + $0xa8] sm:$0xff]
      %v723 = vld [vmem:[%s700 + $0xb0] sm:$0xff]
      %v724 = vld [vmem:[%s700 + $0xb8] sm:$0xff]
      %v725 = vld [vmem:[%s700 + $0xc0] sm:$0xff]
      %v726 = vld [vmem:[%s700 + $0xc8] sm:$0xff]
      %v727 = vld [vmem:[%s700 + $0xd0] sm:$0xff]
      %v728 = vld [vmem:[%s700 + $0xd8] sm:$0xff]
      %v729 = vld [vmem:[%s700 + $0xe0] sm:$0xff]
      %v730 = vld [vmem:[%s700 + $0xe8] sm:$0xff]
      %v731 = vld [vmem:[%s700 + $0xf0] sm:$0xff]
      %v732 = vld [vmem:[%s700 + $0xf8] sm:$0xff]
      %v733 = vld [vmem:[%s700 + $0x100] sm:$0xff]
      %v734 = vld [vmem:[%s700 + $0x108] sm:$0xff]
      %v735 = vld [vmem:[%s700 + $0x110] sm:$0xff]
      %v736 = vld [vmem:[%s700 + $0x118] sm:$0xff]
      %v737 = vld [vmem:[%s700 + $0x120] sm:$0xff]
      %v738 = vld [vmem:[%s700 + $0x128] sm:$0xff]
      %v739 = vld [vmem:[%s700 + $0x130] sm:$0xff]
      %v740 = vld [vmem:[%s700 + $0x138] sm:$0xff]
      %v741 = vld [vmem:[%s700 + $0x140] sm:$0xff]
      %v742 = vld [vmem:[%s700 + $0x148] sm:$0xff]
      %v743 = vld [vmem:[%s700 + $0x150] sm:$0xff]
      %v744 = vld [vmem:[%s700 + $0x158] sm:$0xff]
      %v745 = vld [vmem:[%s700 + $0x160] sm:$0xff]
      %v746 = vld [vmem:[%s700 + $0x168] sm:$0xff]
      %v747 = vld [vmem:[%s700 + $0x170] sm:$0xff]
      %v748 = vld [vmem:[%s700 + $0x178] sm:$0xff]
      %v749 = vld [vmem:[%s700 + $0x180] sm:$0xff]
      %v750 = vld [vmem:[%s700 + $0x188] sm:$0xff]
      %v751 = vld [vmem:[%s700 + $0x190] sm:$0xff]
      %v752 = vld [vmem:[%s700 + $0x198] sm:$0xff]
      %v753 = vld [vmem:[%s700 + $0x1a0] sm:$0xff]
      %v754 = vld [vmem:[%s700 + $0x1a8] sm:$0xff]
      %v755 = vld [vmem:[%s700 + $0x1b0] sm:$0xff]
      %v756 = vld [vmem:[%s700 + $0x1b8] sm:$0xff]
      %v757 = vld [vmem:[%s700 + $0x1c0] sm:$0xff]
      %v758 = vld [vmem:[%s700 + $0x1c8] sm:$0xff]
      %v759 = vld [vmem:[%s700 + $0x1d0] sm:$0xff]
      %v760 = vld [vmem:[%s700 + $0x1d8] sm:$0xff]
      %v761 = vld [vmem:[%s700 + $0x1e0] sm:$0xff]
      %v762 = vld [vmem:[%s700 + $0x1e8] sm:$0xff]
      %v763 = vld [vmem:[%s700 + $0x1f0] sm:$0xff]
      %v764 = vld [vmem:[%s700 + $0x1f8] sm:$0xff]
      %v765 = vld [vmem:[%s700 + $0x200] sm:$0xff]
      %v766 = vld [vmem:[%s700 + $0x208] sm:$0xff]
      %v767 = vld [vmem:[%s700 + $0x210] sm:$0xff]
      %v768 = vld [vmem:[%s700 + $0x218] sm:$0xff]
      %v769 = vld [vmem:[%s700 + $0x220] sm:$0xff]
      %v770 = vld [vmem:[%s700 + $0x228] sm:$0xff]
      %v771 = vld [vmem:[%s700 + $0x230] sm:$0xff]
      %v772 = vld [vmem:[%s700 + $0x238] sm:$0xff]
      %v773 = vld [vmem:[%s700 + $0x240] sm:$0xff]
      %v774 = vld [vmem:[%s700 + $0x248] sm:$0xff]
      %v775 = vld [vmem:[%s700 + $0x250] sm:$0xff]
      %v776 = vld [vmem:[%s700 + $0x258] sm:$0xff]
      %v777 = vld [vmem:[%s700 + $0x260] sm:$0xff]
      %v778 = vld [vmem:[%s700 + $0x268] sm:$0xff]
      %v779 = vld [vmem:[%s700 + $0x270] sm:$0xff]
      %v780 = vld [vmem:[%s700 + $0x278] sm:$0xff]
      %v781 = vld [vmem:[%s700 + $0x280] sm:$0xff]
      %v782 = vld [vmem:[%s700 + $0x288] sm:$0xff]
      %v783 = vld [vmem:[%s700 + $0x290] sm:$0xff]
      %v784 = vld [vmem:[%s700 + $0x298] sm:$0xff]
      %v785 = vld [vmem:[%s700 + $0x2a0] sm:$0xff]
      %v786 = vld [vmem:[%s700 + $0x2a8] sm:$0xff]
      %v787 = vld [vmem:[%s700 + $0x2b0] sm:$0xff]
      %v788 = vld [vmem:[%s700 + $0x2b8] sm:$0xff]
      %v789 = vld [vmem:[%s700 + $0x2c0] sm:$0xff]
      %v790 = vld [vmem:[%s700 + $0x2c8] sm:$0xff]
      %v791 = vld [vmem:[%s700 + $0x2d0] sm:$0xff]
      %v792 = vld [vmem:[%s700 + $0x2d8] sm:$0xff]
      %v793 = vld [vmem:[%s700 + $0x2e0] sm:$0xff]
      %v794 = vld [vmem:[%s700 + $0x2e8] sm:$0xff]
      %v795 = vld [vmem:[%s700 + $0x2f0] sm:$0xff]
      %v796 = vld [vmem:[%s700 + $0x2f8] sm:$0xff]
      %s797 = scalar_lea.vmem %s2, 384
      %v798 = vld [vmem:[%s797] sm:$0xff]
      %v799 = vld [vmem:[%s797 + $0x8] sm:$0xff]
      %v800 = vld [vmem:[%s797 + $0x10] sm:$0xff]
      %v801 = vld [vmem:[%s797 + $0x18] sm:$0xff]
      %v802 = vld [vmem:[%s797 + $0x20] sm:$0xff]
      %v803 = vld [vmem:[%s797 + $0x28] sm:$0xff]
      %v804 = vld [vmem:[%s797 + $0x30] sm:$0xff]
      %v805 = vld [vmem:[%s797 + $0x38] sm:$0xff]
      %v806 = vld [vmem:[%s797 + $0x40] sm:$0xff]
      %v807 = vld [vmem:[%s797 + $0x48] sm:$0xff]
      %v808 = vld [vmem:[%s797 + $0x50] sm:$0xff]
      %v809 = vld [vmem:[%s797 + $0x58] sm:$0xff]
      %v810 = vld [vmem:[%s797 + $0x60] sm:$0xff]
      %v811 = vld [vmem:[%s797 + $0x68] sm:$0xff]
      %v812 = vld [vmem:[%s797 + $0x70] sm:$0xff]
      %v813 = vld [vmem:[%s797 + $0x78] sm:$0xff]
      %v814 = vld [vmem:[%s797 + $0x80] sm:$0xff]
      %v815 = vld [vmem:[%s797 + $0x88] sm:$0xff]
      %v816 = vld [vmem:[%s797 + $0x90] sm:$0xff]
      %v817 = vld [vmem:[%s797 + $0x98] sm:$0xff]
      %v818 = vld [vmem:[%s797 + $0xa0] sm:$0xff]
      %v819 = vld [vmem:[%s797 + $0xa8] sm:$0xff]
      %v820 = vld [vmem:[%s797 + $0xb0] sm:$0xff]
      %v821 = vld [vmem:[%s797 + $0xb8] sm:$0xff]
      %v822 = vld [vmem:[%s797 + $0xc0] sm:$0xff]
      %v823 = vld [vmem:[%s797 + $0xc8] sm:$0xff]
      %v824 = vld [vmem:[%s797 + $0xd0] sm:$0xff]
      %v825 = vld [vmem:[%s797 + $0xd8] sm:$0xff]
      %v826 = vld [vmem:[%s797 + $0xe0] sm:$0xff]
      %v827 = vld [vmem:[%s797 + $0xe8] sm:$0xff]
      %v828 = vld [vmem:[%s797 + $0xf0] sm:$0xff]
      %v829 = vld [vmem:[%s797 + $0xf8] sm:$0xff]
      %v830 = vld [vmem:[%s797 + $0x100] sm:$0xff]
      %v831 = vld [vmem:[%s797 + $0x108] sm:$0xff]
      %v832 = vld [vmem:[%s797 + $0x110] sm:$0xff]
      %v833 = vld [vmem:[%s797 + $0x118] sm:$0xff]
      %v834 = vld [vmem:[%s797 + $0x120] sm:$0xff]
      %v835 = vld [vmem:[%s797 + $0x128] sm:$0xff]
      %v836 = vld [vmem:[%s797 + $0x130] sm:$0xff]
      %v837 = vld [vmem:[%s797 + $0x138] sm:$0xff]
      %v838 = vld [vmem:[%s797 + $0x140] sm:$0xff]
      %v839 = vld [vmem:[%s797 + $0x148] sm:$0xff]
      %v840 = vld [vmem:[%s797 + $0x150] sm:$0xff]
      %v841 = vld [vmem:[%s797 + $0x158] sm:$0xff]
      %v842 = vld [vmem:[%s797 + $0x160] sm:$0xff]
      %v843 = vld [vmem:[%s797 + $0x168] sm:$0xff]
      %v844 = vld [vmem:[%s797 + $0x170] sm:$0xff]
      %v845 = vld [vmem:[%s797 + $0x178] sm:$0xff]
      %846 = vmatprep.subr.mxu0 0.0
      %847 = vmatpush1.msra.mxu0 %v798
      %848 = vmatprep.subr.mxu0 0.0
      %849 = vmatpush1.msra.mxu0 %v799
      %850 = vmatprep.subr.mxu0 0.0
      %851 = vmatpush1.msra.mxu0 %v800
      %852 = vmatprep.subr.mxu0 0.0
      %853 = vmatpush1.msra.mxu0 %v801
      %854 = vmatprep.subr.mxu0 0.0
      %855 = vmatpush1.msra.mxu0 %v802
      %856 = vmatprep.subr.mxu0 0.0
      %857 = vmatpush1.msra.mxu0 %v803
      %858 = vmatprep.subr.mxu0 0.0
      %859 = vmatpush1.msra.mxu0 %v804
      %860 = vmatprep.subr.mxu0 0.0
      %861 = vmatpush1.msra.mxu0 %v805
      %862 = vmatprep.subr.mxu0 0.0
      %863 = vmatpush1.msra.mxu0 %v806
      %864 = vmatprep.subr.mxu0 0.0
      %865 = vmatpush1.msra.mxu0 %v807
      %866 = vmatprep.subr.mxu0 0.0
      %867 = vmatpush1.msra.mxu0 %v808
      %868 = vmatprep.subr.mxu0 0.0
      %869 = vmatpush1.msra.mxu0 %v809
      %870 = vmatprep.subr.mxu0 0.0
      %871 = vmatpush1.msra.mxu0 %v810
      %872 = vmatprep.subr.mxu0 0.0
      %873 = vmatpush1.msra.mxu0 %v811
      %874 = vmatprep.subr.mxu0 0.0
      %875 = vmatpush1.msra.mxu0 %v812
      %876 = vmatprep.subr.mxu0 0.0
      %877 = vmatpush1.msra.mxu0 %v813
      %878 = vmatprep.subr.mxu0 0.0
      %879 = vmatpush1.msra.mxu0 %v814
      %880 = vmatprep.subr.mxu0 0.0
      %881 = vmatpush1.msra.mxu0 %v815
      %882 = vmatprep.subr.mxu0 0.0
      %883 = vmatpush1.msra.mxu0 %v816
      %884 = vmatprep.subr.mxu0 0.0
      %885 = vmatpush1.msra.mxu0 %v817
      %886 = vmatprep.subr.mxu0 0.0
      %887 = vmatpush1.msra.mxu0 %v818
      %888 = vmatprep.subr.mxu0 0.0
      %889 = vmatpush1.msra.mxu0 %v819
      %890 = vmatprep.subr.mxu0 0.0
      %891 = vmatpush1.msra.mxu0 %v820
      %892 = vmatprep.subr.mxu0 0.0
      %893 = vmatpush1.msra.mxu0 %v821
      %894 = vmatprep.subr.mxu0 0.0
      %895 = vmatpush1.msra.mxu0 %v822
      %896 = vmatprep.subr.mxu0 0.0
      %897 = vmatpush1.msra.mxu0 %v823
      %898 = vmatprep.subr.mxu0 0.0
      %899 = vmatpush1.msra.mxu0 %v824
      %900 = vmatprep.subr.mxu0 0.0
      %901 = vmatpush1.msra.mxu0 %v825
      %902 = vmatprep.subr.mxu0 0.0
      %903 = vmatpush1.msra.mxu0 %v826
      %904 = vmatprep.subr.mxu0 0.0
      %905 = vmatpush1.msra.mxu0 %v827
      %906 = vmatprep.subr.mxu0 0.0
      %907 = vmatpush1.msra.mxu0 %v828
      %908 = vmatprep.subr.mxu0 0.0
      %909 = vmatpush1.msra.mxu0 %v829
      %910 = vmatprep.mubr.f32.mxu0 %v702
      %911 = vmatmul.mubr.f32.gmra.mrb[0].mxu0 %v701
      %v912 = vpop.f32.mrb[0].mxu0
      %v913 = vadd.f32 0.0, %v912
      %v914 = vpop.f32.mrb[0].mxu0
      %915 = vmatprep.mubr.f32.mxu0 %v705
      %916 = vmatmul.mubr.f32.gmra.mrb[0].mxu0 %v704
      %v917 = vpop.f32.mrb[0].mxu0
      %v918 = vadd.f32 0.0, %v917
      %v919 = vpop.f32.mrb[0].mxu0
      %920 = vmatprep.mubr.f32.mxu0 %v708
      %921 = vmatmul.mubr.f32.gmra.mrb[0].mxu0 %v707
      %v922 = vpop.f32.mrb[0].mxu0
      %v923 = vadd.f32 0.0, %v922
      %v924 = vpop.f32.mrb[0].mxu0
      %925 = vmatprep.mubr.f32.mxu0 %v711
      %926 = vmatmul.mubr.f32.gmra.mrb[0].mxu0 %v710
      %v927 = vpop.f32.mrb[0].mxu0
      %v928 = vadd.f32 0.0, %v927
      %v929 = vpop.f32.mrb[0].mxu0
      %930 = vmatprep.mubr.f32.mxu0 %v714
      %931 = vmatmul.mubr.f32.gmra.mrb[0].mxu0 %v713
      %v932 = vpop.f32.mrb[0].mxu0
      %v933 = vadd.f32 0.0, %v932
      %v934 = vpop.f32.mrb[0].mxu0
      %935 = vmatprep.mubr.f32.mxu0 %v717
      %936 = vmatmul.mubr.f32.gmra.mrb[0].mxu0 %v716
      %v937 = vpop.f32.mrb[0].mxu0
      %v938 = vadd.f32 0.0, %v937
      %v939 = vpop.f32.mrb[0].mxu0
      %940 = vmatprep.mubr.f32.mxu0 %v720
      %941 = vmatmul.mubr.f32.gmra.mrb[0].mxu0 %v719
      %v942 = vpop.f32.mrb[0].mxu0
      %v943 = vadd.f32 0.0, %v942
      %v944 = vpop.f32.mrb[0].mxu0
      %945 = vmatprep.mubr.f32.mxu0 %v723
      %946 = vmatmul.mubr.f32.gmra.mrb[0].mxu0 %v722
      %v947 = vpop.f32.mrb[0].mxu0
      %v948 = vadd.f32 0.0, %v947
      %v949 = vpop.f32.mrb[0].mxu0
      %950 = vmatprep.mubr.f32.mxu0 %v726
      %951 = vmatmul.mubr.f32.gmra.mrb[0].mxu0 %v725
      %v952 = vpop.f32.mrb[0].mxu0
      %v953 = vadd.f32 0.0, %v952
      %v954 = vpop.f32.mrb[0].mxu0
      %955 = vmatprep.mubr.f32.mxu0 %v729
      %956 = vmatmul.mubr.f32.gmra.mrb[0].mxu0 %v728
      %v957 = vpop.f32.mrb[0].mxu0
      %v958 = vadd.f32 0.0, %v957
      %v959 = vpop.f32.mrb[0].mxu0
      %960 = vmatprep.mubr.f32.mxu0 %v732
      %961 = vmatmul.mubr.f32.gmra.mrb[0].mxu0 %v731
      %v962 = vpop.f32.mrb[0].mxu0
      %v963 = vadd.f32 0.0, %v962
      %v964 = vpop.f32.mrb[0].mxu0
      %965 = vmatprep.mubr.f32.mxu0 %v735
      %966 = vmatmul.mubr.f32.gmra.mrb[0].mxu0 %v734
      %v967 = vpop.f32.mrb[0].mxu0
      %v968 = vadd.f32 0.0, %v967
      %v969 = vpop.f32.mrb[0].mxu0
      %970 = vmatprep.mubr.f32.mxu0 %v738
      %971 = vmatmul.mubr.f32.gmra.mrb[0].mxu0 %v737
      %v972 = vpop.f32.mrb[0].mxu0
      %v973 = vadd.f32 0.0, %v972
      %v974 = vpop.f32.mrb[0].mxu0
      %975 = vmatprep.mubr.f32.mxu0 %v741
      %976 = vmatmul.mubr.f32.gmra.mrb[0].mxu0 %v740
      %v977 = vpop.f32.mrb[0].mxu0
      %v978 = vadd.f32 0.0, %v977
      %v979 = vpop.f32.mrb[0].mxu0
      %980 = vmatprep.mubr.f32.mxu0 %v744
      %981 = vmatmul.mubr.f32.gmra.mrb[0].mxu0 %v743
      %v982 = vpop.f32.mrb[0].mxu0
      %v983 = vadd.f32 0.0, %v982
      %v984 = vpop.f32.mrb[0].mxu0
      %985 = vmatprep.mubr.f32.mxu0 %v747
      %986 = vmatmul.mubr.f32.gmra.mrb[0].mxu0 %v746
      %v987 = vpop.f32.mrb[0].mxu0
      %v988 = vadd.f32 0.0, %v987
      %v989 = vpop.f32.mrb[0].mxu0
      %990 = vmatprep.mubr.f32.mxu0 %v750
      %991 = vmatmul.mubr.f32.gmra.mrb[0].mxu0 %v749
      %v992 = vpop.f32.mrb[0].mxu0
      %v993 = vadd.f32 0.0, %v992
      %v994 = vpop.f32.mrb[0].mxu0
      %995 = vmatprep.mubr.f32.mxu0 %v753
      %996 = vmatmul.mubr.f32.gmra.mrb[0].mxu0 %v752
      %v997 = vpop.f32.mrb[0].mxu0
      %v998 = vadd.f32 0.0, %v997
      %v999 = vpop.f32.mrb[0].mxu0
      %1000 = vmatprep.mubr.f32.mxu0 %v756
      %1001 = vmatmul.mubr.f32.gmra.mrb[0].mxu0 %v755
      %v1002 = vpop.f32.mrb[0].mxu0
      %v1003 = vadd.f32 0.0, %v1002
      %v1004 = vpop.f32.mrb[0].mxu0
      %1005 = vmatprep.mubr.f32.mxu0 %v759
      %1006 = vmatmul.mubr.f32.gmra.mrb[0].mxu0 %v758
      %v1007 = vpop.f32.mrb[0].mxu0
      %v1008 = vadd.f32 0.0, %v1007
      %v1009 = vpop.f32.mrb[0].mxu0
      %1010 = vmatprep.mubr.f32.mxu0 %v762
      %1011 = vmatmul.mubr.f32.gmra.mrb[0].mxu0 %v761
      %v1012 = vpop.f32.mrb[0].mxu0
      %v1013 = vadd.f32 0.0, %v1012
      %v1014 = vpop.f32.mrb[0].mxu0
      %1015 = vmatprep.mubr.f32.mxu0 %v765
      %1016 = vmatmul.mubr.f32.gmra.mrb[0].mxu0 %v764
      %v1017 = vpop.f32.mrb[0].mxu0
      %v1018 = vadd.f32 0.0, %v1017
      %v1019 = vpop.f32.mrb[0].mxu0
      %1020 = vmatprep.mubr.f32.mxu0 %v768
      %1021 = vmatmul.mubr.f32.gmra.mrb[0].mxu0 %v767
      %v1022 = vpop.f32.mrb[0].mxu0
      %v1023 = vadd.f32 0.0, %v1022
      %v1024 = vpop.f32.mrb[0].mxu0
      %1025 = vmatprep.mubr.f32.mxu0 %v771
      %1026 = vmatmul.mubr.f32.gmra.mrb[0].mxu0 %v770
      %v1027 = vpop.f32.mrb[0].mxu0
      %v1028 = vadd.f32 0.0, %v1027
      %v1029 = vpop.f32.mrb[0].mxu0
      %1030 = vmatprep.mubr.f32.mxu0 %v774
      %1031 = vmatmul.mubr.f32.gmra.mrb[0].mxu0 %v773
      %v1032 = vpop.f32.mrb[0].mxu0
      %v1033 = vadd.f32 0.0, %v1032
      %v1034 = vpop.f32.mrb[0].mxu0
      %1035 = vmatprep.mubr.f32.mxu0 %v777
      %1036 = vmatmul.mubr.f32.gmra.mrb[0].mxu0 %v776
      %v1037 = vpop.f32.mrb[0].mxu0
      %v1038 = vadd.f32 0.0, %v1037
      %v1039 = vpop.f32.mrb[0].mxu0
      %1040 = vmatprep.mubr.f32.mxu0 %v780
      %1041 = vmatmul.mubr.f32.gmra.mrb[0].mxu0 %v779
      %v1042 = vpop.f32.mrb[0].mxu0
      %v1043 = vadd.f32 0.0, %v1042
      %v1044 = vpop.f32.mrb[0].mxu0
      %1045 = vmatprep.mubr.f32.mxu0 %v783
      %1046 = vmatmul.mubr.f32.gmra.mrb[0].mxu0 %v782
      %v1047 = vpop.f32.mrb[0].mxu0
      %v1048 = vadd.f32 0.0, %v1047
      %v1049 = vpop.f32.mrb[0].mxu0
      %1050 = vmatprep.mubr.f32.mxu0 %v786
      %1051 = vmatmul.mubr.f32.gmra.mrb[0].mxu0 %v785
      %v1052 = vpop.f32.mrb[0].mxu0
      %v1053 = vadd.f32 0.0, %v1052
      %v1054 = vpop.f32.mrb[0].mxu0
      %1055 = vmatprep.mubr.f32.mxu0 %v789
      %1056 = vmatmul.mubr.f32.gmra.mrb[0].mxu0 %v788
      %v1057 = vpop.f32.mrb[0].mxu0
      %v1058 = vadd.f32 0.0, %v1057
      %v1059 = vpop.f32.mrb[0].mxu0
      %1060 = vmatprep.mubr.f32.mxu0 %v792
      %1061 = vmatmul.mubr.f32.gmra.mrb[0].mxu0 %v791
      %v1062 = vpop.f32.mrb[0].mxu0
      %v1063 = vadd.f32 0.0, %v1062
      %v1064 = vpop.f32.mrb[0].mxu0
      %1065 = vmatprep.mubr.f32.mxu0 %v795
      %1066 = vmatmul.mubr.f32.gmra.mrb[0].mxu0 %v794
      %v1067 = vpop.f32.mrb[0].mxu0
      %v1068 = vadd.f32 0.0, %v1067
      %v1069 = vpop.f32.mrb[0].mxu0
      %1070 = vdwg.mxu0
      %1071 = vmatprep.subr.mxu0 0.0
      %1072 = vmatpush1.msra.mxu0 %v830
      %1073 = vmatprep.subr.mxu0 0.0
      %1074 = vmatpush1.msra.mxu0 %v831
      %1075 = vmatprep.subr.mxu0 0.0
      %1076 = vmatpush1.msra.mxu0 %v832
      %1077 = vmatprep.subr.mxu0 0.0
      %1078 = vmatpush1.msra.mxu0 %v833
      %1079 = vmatprep.subr.mxu0 0.0
      %1080 = vmatpush1.msra.mxu0 %v834
      %1081 = vmatprep.subr.mxu0 0.0
      %1082 = vmatpush1.msra.mxu0 %v835
      %1083 = vmatprep.subr.mxu0 0.0
      %1084 = vmatpush1.msra.mxu0 %v836
      %1085 = vmatprep.subr.mxu0 0.0
      %1086 = vmatpush1.msra.mxu0 %v837
      %1087 = vmatprep.subr.mxu0 0.0
      %1088 = vmatpush1.msra.mxu0 %v838
      %1089 = vmatprep.subr.mxu0 0.0
      %1090 = vmatpush1.msra.mxu0 %v839
      %1091 = vmatprep.subr.mxu0 0.0
      %1092 = vmatpush1.msra.mxu0 %v840
      %1093 = vmatprep.subr.mxu0 0.0
      %1094 = vmatpush1.msra.mxu0 %v841
      %1095 = vmatprep.subr.mxu0 0.0
      %1096 = vmatpush1.msra.mxu0 %v842
      %1097 = vmatprep.subr.mxu0 0.0
      %1098 = vmatpush1.msra.mxu0 %v843
      %1099 = vmatprep.subr.mxu0 0.0
      %1100 = vmatpush1.msra.mxu0 %v844
      %1101 = vmatprep.subr.mxu0 0.0
      %1102 = vmatpush1.msra.mxu0 %v845
      %1103 = vmatprep.subr.mxu0 0.0
      %1104 = vmatpush1.msra.mxu0 0.0
      %1105 = vmatprep.subr.mxu0 0.0
      %1106 = vmatpush1.msra.mxu0 0.0
      %1107 = vmatprep.subr.mxu0 0.0
      %1108 = vmatpush1.msra.mxu0 0.0
      %1109 = vmatprep.subr.mxu0 0.0
      %1110 = vmatpush1.msra.mxu0 0.0
      %1111 = vmatprep.subr.mxu0 0.0
      %1112 = vmatpush1.msra.mxu0 0.0
      %1113 = vmatprep.subr.mxu0 0.0
      %1114 = vmatpush1.msra.mxu0 0.0
      %1115 = vmatprep.subr.mxu0 0.0
      %1116 = vmatpush1.msra.mxu0 0.0
      %1117 = vmatprep.subr.mxu0 0.0
      %1118 = vmatpush1.msra.mxu0 0.0
      %1119 = vmatprep.subr.mxu0 0.0
      %1120 = vmatpush1.msra.mxu0 0.0
      %1121 = vmatprep.subr.mxu0 0.0
      %1122 = vmatpush1.msra.mxu0 0.0
      %1123 = vmatprep.subr.mxu0 0.0
      %1124 = vmatpush1.msra.mxu0 0.0
      %1125 = vmatprep.subr.mxu0 0.0
      %1126 = vmatpush1.msra.mxu0 0.0
      %1127 = vmatprep.subr.mxu0 0.0
      %1128 = vmatpush1.msra.mxu0 0.0
      %1129 = vmatprep.subr.mxu0 0.0
      %1130 = vmatpush1.msra.mxu0 0.0
      %1131 = vmatprep.subr.mxu0 0.0
      %1132 = vmatpush1.msra.mxu0 0.0
      %1133 = vmatprep.subr.mxu0 0.0
      %1134 = vmatpush1.msra.mxu0 0.0
      %1135 = vmatprep.mubr.f32.mxu0 0.0
      %1136 = vmatmul.mubr.f32.gmra.mrb[0].mxu0 %v703
      %v1137 = vpop.f32.mrb[0].mxu0
      %v1138 = vadd.f32 %v913, %v1137
      %v1139 = vpop.f32.mrb[0].mxu0
      %1140 = vmatprep.mubr.f32.mxu0 0.0
      %1141 = vmatmul.mubr.f32.gmra.mrb[0].mxu0 %v706
      %v1142 = vpop.f32.mrb[0].mxu0
      %v1143 = vadd.f32 %v918, %v1142
      %v1144 = vpop.f32.mrb[0].mxu0
      %1145 = vmatprep.mubr.f32.mxu0 0.0
      %1146 = vmatmul.mubr.f32.gmra.mrb[0].mxu0 %v709
      %v1147 = vpop.f32.mrb[0].mxu0
      %v1148 = vadd.f32 %v923, %v1147
      %v1149 = vpop.f32.mrb[0].mxu0
      %1150 = vmatprep.mubr.f32.mxu0 0.0
      %1151 = vmatmul.mubr.f32.gmra.mrb[0].mxu0 %v712
      %v1152 = vpop.f32.mrb[0].mxu0
      %v1153 = vadd.f32 %v928, %v1152
      %v1154 = vpop.f32.mrb[0].mxu0
      %1155 = vmatprep.mubr.f32.mxu0 0.0
      %1156 = vmatmul.mubr.f32.gmra.mrb[0].mxu0 %v715
      %v1157 = vpop.f32.mrb[0].mxu0
      %v1158 = vadd.f32 %v933, %v1157
      %v1159 = vpop.f32.mrb[0].mxu0
      %1160 = vmatprep.mubr.f32.mxu0 0.0
      %1161 = vmatmul.mubr.f32.gmra.mrb[0].mxu0 %v718
      %v1162 = vpop.f32.mrb[0].mxu0
      %v1163 = vadd.f32 %v938, %v1162
      %v1164 = vpop.f32.mrb[0].mxu0
      %1165 = vmatprep.mubr.f32.mxu0 0.0
      %1166 = vmatmul.mubr.f32.gmra.mrb[0].mxu0 %v721
      %v1167 = vpop.f32.mrb[0].mxu0
      %v1168 = vadd.f32 %v943, %v1167
      %v1169 = vpop.f32.mrb[0].mxu0
      %1170 = vmatprep.mubr.f32.mxu0 0.0
      %1171 = vmatmul.mubr.f32.gmra.mrb[0].mxu0 %v724
      %v1172 = vpop.f32.mrb[0].mxu0
      %v1173 = vadd.f32 %v948, %v1172
      %v1174 = vpop.f32.mrb[0].mxu0
      %1175 = vmatprep.mubr.f32.mxu0 0.0
      %1176 = vmatmul.mubr.f32.gmra.mrb[0].mxu0 %v727
      %v1177 = vpop.f32.mrb[0].mxu0
      %v1178 = vadd.f32 %v953, %v1177
      %v1179 = vpop.f32.mrb[0].mxu0
      %1180 = vmatprep.mubr.f32.mxu0 0.0
      %1181 = vmatmul.mubr.f32.gmra.mrb[0].mxu0 %v730
      %v1182 = vpop.f32.mrb[0].mxu0
      %v1183 = vadd.f32 %v958, %v1182
      %v1184 = vpop.f32.mrb[0].mxu0
      %1185 = vmatprep.mubr.f32.mxu0 0.0
      %1186 = vmatmul.mubr.f32.gmra.mrb[0].mxu0 %v733
      %v1187 = vpop.f32.mrb[0].mxu0
      %v1188 = vadd.f32 %v963, %v1187
      %v1189 = vpop.f32.mrb[0].mxu0
      %1190 = vmatprep.mubr.f32.mxu0 0.0
      %1191 = vmatmul.mubr.f32.gmra.mrb[0].mxu0 %v736
      %v1192 = vpop.f32.mrb[0].mxu0
      %v1193 = vadd.f32 %v968, %v1192
      %v1194 = vpop.f32.mrb[0].mxu0
      %1195 = vmatprep.mubr.f32.mxu0 0.0
      %1196 = vmatmul.mubr.f32.gmra.mrb[0].mxu0 %v739
      %v1197 = vpop.f32.mrb[0].mxu0
      %v1198 = vadd.f32 %v973, %v1197
      %v1199 = vpop.f32.mrb[0].mxu0
      %1200 = vmatprep.mubr.f32.mxu0 0.0
      %1201 = vmatmul.mubr.f32.gmra.mrb[0].mxu0 %v742
      %v1202 = vpop.f32.mrb[0].mxu0
      %v1203 = vadd.f32 %v978, %v1202
      %v1204 = vpop.f32.mrb[0].mxu0
      %1205 = vmatprep.mubr.f32.mxu0 0.0
      %1206 = vmatmul.mubr.f32.gmra.mrb[0].mxu0 %v745
      %v1207 = vpop.f32.mrb[0].mxu0
      %v1208 = vadd.f32 %v983, %v1207
      %v1209 = vpop.f32.mrb[0].mxu0
      %1210 = vmatprep.mubr.f32.mxu0 0.0
      %1211 = vmatmul.mubr.f32.gmra.mrb[0].mxu0 %v748
      %v1212 = vpop.f32.mrb[0].mxu0
      %v1213 = vadd.f32 %v988, %v1212
      %v1214 = vpop.f32.mrb[0].mxu0
      %1215 = vmatprep.mubr.f32.mxu0 0.0
      %1216 = vmatmul.mubr.f32.gmra.mrb[0].mxu0 %v751
      %v1217 = vpop.f32.mrb[0].mxu0
      %v1218 = vadd.f32 %v993, %v1217
      %v1219 = vpop.f32.mrb[0].mxu0
      %1220 = vmatprep.mubr.f32.mxu0 0.0
      %1221 = vmatmul.mubr.f32.gmra.mrb[0].mxu0 %v754
      %v1222 = vpop.f32.mrb[0].mxu0
      %v1223 = vadd.f32 %v998, %v1222
      %v1224 = vpop.f32.mrb[0].mxu0
      %1225 = vmatprep.mubr.f32.mxu0 0.0
      %1226 = vmatmul.mubr.f32.gmra.mrb[0].mxu0 %v757
      %v1227 = vpop.f32.mrb[0].mxu0
      %v1228 = vadd.f32 %v1003, %v1227
      %v1229 = vpop.f32.mrb[0].mxu0
      %1230 = vmatprep.mubr.f32.mxu0 0.0
      %1231 = vmatmul.mubr.f32.gmra.mrb[0].mxu0 %v760
      %v1232 = vpop.f32.mrb[0].mxu0
      %v1233 = vadd.f32 %v1008, %v1232
      %v1234 = vpop.f32.mrb[0].mxu0
      %1235 = vmatprep.mubr.f32.mxu0 0.0
      %1236 = vmatmul.mubr.f32.gmra.mrb[0].mxu0 %v763
      %v1237 = vpop.f32.mrb[0].mxu0
      %v1238 = vadd.f32 %v1013, %v1237
      %v1239 = vpop.f32.mrb[0].mxu0
      %1240 = vmatprep.mubr.f32.mxu0 0.0
      %1241 = vmatmul.mubr.f32.gmra.mrb[0].mxu0 %v766
      %v1242 = vpop.f32.mrb[0].mxu0
      %v1243 = vadd.f32 %v1018, %v1242
      %v1244 = vpop.f32.mrb[0].mxu0
      %1245 = vmatprep.mubr.f32.mxu0 0.0
      %1246 = vmatmul.mubr.f32.gmra.mrb[0].mxu0 %v769
      %v1247 = vpop.f32.mrb[0].mxu0
      %v1248 = vadd.f32 %v1023, %v1247
      %v1249 = vpop.f32.mrb[0].mxu0
      %1250 = vmatprep.mubr.f32.mxu0 0.0
      %1251 = vmatmul.mubr.f32.gmra.mrb[0].mxu0 %v772
      %v1252 = vpop.f32.mrb[0].mxu0
      %v1253 = vadd.f32 %v1028, %v1252
      %v1254 = vpop.f32.mrb[0].mxu0
      %1255 = vmatprep.mubr.f32.mxu0 0.0
      %1256 = vmatmul.mubr.f32.gmra.mrb[0].mxu0 %v775
      %v1257 = vpop.f32.mrb[0].mxu0
      %v1258 = vadd.f32 %v1033, %v1257
      %v1259 = vpop.f32.mrb[0].mxu0
      %1260 = vmatprep.mubr.f32.mxu0 0.0
      %1261 = vmatmul.mubr.f32.gmra.mrb[0].mxu0 %v778
      %v1262 = vpop.f32.mrb[0].mxu0
      %v1263 = vadd.f32 %v1038, %v1262
      %v1264 = vpop.f32.mrb[0].mxu0
      %1265 = vmatprep.mubr.f32.mxu0 0.0
      %1266 = vmatmul.mubr.f32.gmra.mrb[0].mxu0 %v781
      %v1267 = vpop.f32.mrb[0].mxu0
      %v1268 = vadd.f32 %v1043, %v1267
      %v1269 = vpop.f32.mrb[0].mxu0
      %1270 = vmatprep.mubr.f32.mxu0 0.0
      %1271 = vmatmul.mubr.f32.gmra.mrb[0].mxu0 %v784
      %v1272 = vpop.f32.mrb[0].mxu0
      %v1273 = vadd.f32 %v1048, %v1272
      %v1274 = vpop.f32.mrb[0].mxu0
      %1275 = vmatprep.mubr.f32.mxu0 0.0
      %1276 = vmatmul.mubr.f32.gmra.mrb[0].mxu0 %v787
      %v1277 = vpop.f32.mrb[0].mxu0
      %v1278 = vadd.f32 %v1053, %v1277
      %v1279 = vpop.f32.mrb[0].mxu0
      %1280 = vmatprep.mubr.f32.mxu0 0.0
      %1281 = vmatmul.mubr.f32.gmra.mrb[0].mxu0 %v790
      %v1282 = vpop.f32.mrb[0].mxu0
      %v1283 = vadd.f32 %v1058, %v1282
      %v1284 = vpop.f32.mrb[0].mxu0
      %1285 = vmatprep.mubr.f32.mxu0 0.0
      %1286 = vmatmul.mubr.f32.gmra.mrb[0].mxu0 %v793
      %v1287 = vpop.f32.mrb[0].mxu0
      %v1288 = vadd.f32 %v1063, %v1287
      %v1289 = vpop.f32.mrb[0].mxu0
      %1290 = vmatprep.mubr.f32.mxu0 0.0
      %1291 = vmatmul.mubr.f32.gmra.mrb[0].mxu0 %v796
      %v1292 = vpop.f32.mrb[0].mxu0
      %v1293 = vadd.f32 %v1068, %v1292
      %v1294 = vpop.f32.mrb[0].mxu0
      %1295 = vdwg.mxu0
      %1296 = vmatprep.subr.mxu0 0.0
      %1297 = vmatpush1.msra.mxu0 %v652
      %1298 = vmatprep.subr.mxu0 0.0
      %1299 = vmatpush1.msra.mxu0 %v653
      %1300 = vmatprep.subr.mxu0 0.0
      %1301 = vmatpush1.msra.mxu0 %v654
      %1302 = vmatprep.subr.mxu0 0.0
      %1303 = vmatpush1.msra.mxu0 %v655
      %1304 = vmatprep.subr.mxu0 0.0
      %1305 = vmatpush1.msra.mxu0 %v656
      %1306 = vmatprep.subr.mxu0 0.0
      %1307 = vmatpush1.msra.mxu0 %v657
      %1308 = vmatprep.subr.mxu0 0.0
      %1309 = vmatpush1.msra.mxu0 %v658
      %1310 = vmatprep.subr.mxu0 0.0
      %1311 = vmatpush1.msra.mxu0 %v659
      %1312 = vmatprep.subr.mxu0 0.0
      %1313 = vmatpush1.msra.mxu0 %v660
      %1314 = vmatprep.subr.mxu0 0.0
      %1315 = vmatpush1.msra.mxu0 %v661
      %1316 = vmatprep.subr.mxu0 0.0
      %1317 = vmatpush1.msra.mxu0 %v662
      %1318 = vmatprep.subr.mxu0 0.0
      %1319 = vmatpush1.msra.mxu0 %v663
      %1320 = vmatprep.subr.mxu0 0.0
      %1321 = vmatpush1.msra.mxu0 %v664
      %1322 = vmatprep.subr.mxu0 0.0
      %1323 = vmatpush1.msra.mxu0 %v665
      %1324 = vmatprep.subr.mxu0 0.0
      %1325 = vmatpush1.msra.mxu0 %v666
      %1326 = vmatprep.subr.mxu0 0.0
      %1327 = vmatpush1.msra.mxu0 %v667
      %1328 = vmatprep.subr.mxu0 0.0
      %1329 = vmatpush1.msra.mxu0 %v668
      %1330 = vmatprep.subr.mxu0 0.0
      %1331 = vmatpush1.msra.mxu0 %v669
      %1332 = vmatprep.subr.mxu0 0.0
      %1333 = vmatpush1.msra.mxu0 %v670
      %1334 = vmatprep.subr.mxu0 0.0
      %1335 = vmatpush1.msra.mxu0 %v671
      %1336 = vmatprep.subr.mxu0 0.0
      %1337 = vmatpush1.msra.mxu0 %v672
      %1338 = vmatprep.subr.mxu0 0.0
      %1339 = vmatpush1.msra.mxu0 %v673
      %1340 = vmatprep.subr.mxu0 0.0
      %1341 = vmatpush1.msra.mxu0 %v674
      %1342 = vmatprep.subr.mxu0 0.0
      %1343 = vmatpush1.msra.mxu0 %v675
      %1344 = vmatprep.subr.mxu0 0.0
      %1345 = vmatpush1.msra.mxu0 %v676
      %1346 = vmatprep.subr.mxu0 0.0
      %1347 = vmatpush1.msra.mxu0 %v677
      %1348 = vmatprep.subr.mxu0 0.0
      %1349 = vmatpush1.msra.mxu0 %v678
      %1350 = vmatprep.subr.mxu0 0.0
      %1351 = vmatpush1.msra.mxu0 %v679
      %1352 = vmatprep.subr.mxu0 0.0
      %1353 = vmatpush1.msra.mxu0 %v680
      %1354 = vmatprep.subr.mxu0 0.0
      %1355 = vmatpush1.msra.mxu0 %v681
      %1356 = vmatprep.subr.mxu0 0.0
      %1357 = vmatpush1.msra.mxu0 %v682
      %1358 = vmatprep.subr.mxu0 0.0
      %1359 = vmatpush1.msra.mxu0 %v683
      %1360 = vmatprep.mubr.f32.mxu0 %v557
      %1361 = vmatmul.mubr.f32.gmra.mrb[0].mxu0 %v556
      %v1362 = vpop.f32.mrb[0].mxu0
      %v1363 = vadd.f32 %v1138, %v1362
      %v1364 = vpop.f32.mrb[0].mxu0
      %1365 = vmatprep.mubr.f32.mxu0 %v560
      %1366 = vmatmul.mubr.f32.gmra.mrb[0].mxu0 %v559
      %v1367 = vpop.f32.mrb[0].mxu0
      %v1368 = vadd.f32 %v1143, %v1367
      %v1369 = vpop.f32.mrb[0].mxu0
      %1370 = vmatprep.mubr.f32.mxu0 %v563
      %1371 = vmatmul.mubr.f32.gmra.mrb[0].mxu0 %v562
      %v1372 = vpop.f32.mrb[0].mxu0
      %v1373 = vadd.f32 %v1148, %v1372
      %v1374 = vpop.f32.mrb[0].mxu0
      %1375 = vmatprep.mubr.f32.mxu0 %v566
      %1376 = vmatmul.mubr.f32.gmra.mrb[0].mxu0 %v565
      %v1377 = vpop.f32.mrb[0].mxu0
      %v1378 = vadd.f32 %v1153, %v1377
      %v1379 = vpop.f32.mrb[0].mxu0
      %1380 = vmatprep.mubr.f32.mxu0 %v569
      %1381 = vmatmul.mubr.f32.gmra.mrb[0].mxu0 %v568
      %v1382 = vpop.f32.mrb[0].mxu0
      %v1383 = vadd.f32 %v1158, %v1382
      %v1384 = vpop.f32.mrb[0].mxu0
      %1385 = vmatprep.mubr.f32.mxu0 %v572
      %1386 = vmatmul.mubr.f32.gmra.mrb[0].mxu0 %v571
      %v1387 = vpop.f32.mrb[0].mxu0
      %v1388 = vadd.f32 %v1163, %v1387
      %v1389 = vpop.f32.mrb[0].mxu0
      %1390 = vmatprep.mubr.f32.mxu0 %v575
      %1391 = vmatmul.mubr.f32.gmra.mrb[0].mxu0 %v574
      %v1392 = vpop.f32.mrb[0].mxu0
      %v1393 = vadd.f32 %v1168, %v1392
      %v1394 = vpop.f32.mrb[0].mxu0
      %1395 = vmatprep.mubr.f32.mxu0 %v578
      %1396 = vmatmul.mubr.f32.gmra.mrb[0].mxu0 %v577
      %v1397 = vpop.f32.mrb[0].mxu0
      %v1398 = vadd.f32 %v1173, %v1397
      %v1399 = vpop.f32.mrb[0].mxu0
      %1400 = vmatprep.mubr.f32.mxu0 %v581
      %1401 = vmatmul.mubr.f32.gmra.mrb[0].mxu0 %v580
      %v1402 = vpop.f32.mrb[0].mxu0
      %v1403 = vadd.f32 %v1178, %v1402
      %v1404 = vpop.f32.mrb[0].mxu0
      %1405 = vmatprep.mubr.f32.mxu0 %v584
      %1406 = vmatmul.mubr.f32.gmra.mrb[0].mxu0 %v583
      %v1407 = vpop.f32.mrb[0].mxu0
      %v1408 = vadd.f32 %v1183, %v1407
      %v1409 = vpop.f32.mrb[0].mxu0
      %1410 = vmatprep.mubr.f32.mxu0 %v587
      %1411 = vmatmul.mubr.f32.gmra.mrb[0].mxu0 %v586
      %v1412 = vpop.f32.mrb[0].mxu0
      %v1413 = vadd.f32 %v1188, %v1412
      %v1414 = vpop.f32.mrb[0].mxu0
      %1415 = vmatprep.mubr.f32.mxu0 %v590
      %1416 = vmatmul.mubr.f32.gmra.mrb[0].mxu0 %v589
      %v1417 = vpop.f32.mrb[0].mxu0
      %v1418 = vadd.f32 %v1193, %v1417
      %v1419 = vpop.f32.mrb[0].mxu0
      %1420 = vmatprep.mubr.f32.mxu0 %v593
      %1421 = vmatmul.mubr.f32.gmra.mrb[0].mxu0 %v592
      %v1422 = vpop.f32.mrb[0].mxu0
      %v1423 = vadd.f32 %v1198, %v1422
      %v1424 = vpop.f32.mrb[0].mxu0
      %1425 = vmatprep.mubr.f32.mxu0 %v596
      %1426 = vmatmul.mubr.f32.gmra.mrb[0].mxu0 %v595
      %v1427 = vpop.f32.mrb[0].mxu0
      %v1428 = vadd.f32 %v1203, %v1427
      %v1429 = vpop.f32.mrb[0].mxu0
      %1430 = vmatprep.mubr.f32.mxu0 %v599
      %1431 = vmatmul.mubr.f32.gmra.mrb[0].mxu0 %v598
      %v1432 = vpop.f32.mrb[0].mxu0
      %v1433 = vadd.f32 %v1208, %v1432
      %v1434 = vpop.f32.mrb[0].mxu0
      %1435 = vmatprep.mubr.f32.mxu0 %v602
      %1436 = vmatmul.mubr.f32.gmra.mrb[0].mxu0 %v601
      %v1437 = vpop.f32.mrb[0].mxu0
      %v1438 = vadd.f32 %v1213, %v1437
      %v1439 = vpop.f32.mrb[0].mxu0
      %1440 = vmatprep.mubr.f32.mxu0 %v605
      %1441 = vmatmul.mubr.f32.gmra.mrb[0].mxu0 %v604
      %v1442 = vpop.f32.mrb[0].mxu0
      %v1443 = vadd.f32 %v1218, %v1442
      %v1444 = vpop.f32.mrb[0].mxu0
      %1445 = vmatprep.mubr.f32.mxu0 %v608
      %1446 = vmatmul.mubr.f32.gmra.mrb[0].mxu0 %v607
      %v1447 = vpop.f32.mrb[0].mxu0
      %v1448 = vadd.f32 %v1223, %v1447
      %v1449 = vpop.f32.mrb[0].mxu0
      %1450 = vmatprep.mubr.f32.mxu0 %v611
      %1451 = vmatmul.mubr.f32.gmra.mrb[0].mxu0 %v610
      %v1452 = vpop.f32.mrb[0].mxu0
      %v1453 = vadd.f32 %v1228, %v1452
      %v1454 = vpop.f32.mrb[0].mxu0
      %1455 = vmatprep.mubr.f32.mxu0 %v614
      %1456 = vmatmul.mubr.f32.gmra.mrb[0].mxu0 %v613
      %v1457 = vpop.f32.mrb[0].mxu0
      %v1458 = vadd.f32 %v1233, %v1457
      %v1459 = vpop.f32.mrb[0].mxu0
      %1460 = vmatprep.mubr.f32.mxu0 %v617
      %1461 = vmatmul.mubr.f32.gmra.mrb[0].mxu0 %v616
      %v1462 = vpop.f32.mrb[0].mxu0
      %v1463 = vadd.f32 %v1238, %v1462
      %v1464 = vpop.f32.mrb[0].mxu0
      %1465 = vmatprep.mubr.f32.mxu0 %v620
      %1466 = vmatmul.mubr.f32.gmra.mrb[0].mxu0 %v619
      %v1467 = vpop.f32.mrb[0].mxu0
      %v1468 = vadd.f32 %v1243, %v1467
      %v1469 = vpop.f32.mrb[0].mxu0
      %1470 = vmatprep.mubr.f32.mxu0 %v623
      %1471 = vmatmul.mubr.f32.gmra.mrb[0].mxu0 %v622
      %v1472 = vpop.f32.mrb[0].mxu0
      %v1473 = vadd.f32 %v1248, %v1472
      %v1474 = vpop.f32.mrb[0].mxu0
      %1475 = vmatprep.mubr.f32.mxu0 %v626
      %1476 = vmatmul.mubr.f32.gmra.mrb[0].mxu0 %v625
      %v1477 = vpop.f32.mrb[0].mxu0
      %v1478 = vadd.f32 %v1253, %v1477
      %v1479 = vpop.f32.mrb[0].mxu0
      %1480 = vmatprep.mubr.f32.mxu0 %v629
      %1481 = vmatmul.mubr.f32.gmra.mrb[0].mxu0 %v628
      %v1482 = vpop.f32.mrb[0].mxu0
      %v1483 = vadd.f32 %v1258, %v1482
      %v1484 = vpop.f32.mrb[0].mxu0
      %1485 = vmatprep.mubr.f32.mxu0 %v632
      %1486 = vmatmul.mubr.f32.gmra.mrb[0].mxu0 %v631
      %v1487 = vpop.f32.mrb[0].mxu0
      %v1488 = vadd.f32 %v1263, %v1487
      %v1489 = vpop.f32.mrb[0].mxu0
      %1490 = vmatprep.mubr.f32.mxu0 %v635
      %1491 = vmatmul.mubr.f32.gmra.mrb[0].mxu0 %v634
      %v1492 = vpop.f32.mrb[0].mxu0
      %v1493 = vadd.f32 %v1268, %v1492
      %v1494 = vpop.f32.mrb[0].mxu0
      %1495 = vmatprep.mubr.f32.mxu0 %v638
      %1496 = vmatmul.mubr.f32.gmra.mrb[0].mxu0 %v637
      %v1497 = vpop.f32.mrb[0].mxu0
      %v1498 = vadd.f32 %v1273, %v1497
      %v1499 = vpop.f32.mrb[0].mxu0
      %1500 = vmatprep.mubr.f32.mxu0 %v641
      %1501 = vmatmul.mubr.f32.gmra.mrb[0].mxu0 %v640
      %v1502 = vpop.f32.mrb[0].mxu0
      %v1503 = vadd.f32 %v1278, %v1502
      %v1504 = vpop.f32.mrb[0].mxu0
      %1505 = vmatprep.mubr.f32.mxu0 %v644
      %1506 = vmatmul.mubr.f32.gmra.mrb[0].mxu0 %v643
      %v1507 = vpop.f32.mrb[0].mxu0
      %v1508 = vadd.f32 %v1283, %v1507
      %v1509 = vpop.f32.mrb[0].mxu0
      %1510 = vmatprep.mubr.f32.mxu0 %v647
      %1511 = vmatmul.mubr.f32.gmra.mrb[0].mxu0 %v646
      %v1512 = vpop.f32.mrb[0].mxu0
      %v1513 = vadd.f32 %v1288, %v1512
      %v1514 = vpop.f32.mrb[0].mxu0
      %1515 = vmatprep.mubr.f32.mxu0 %v650
      %1516 = vmatmul.mubr.f32.gmra.mrb[0].mxu0 %v649
      %v1517 = vpop.f32.mrb[0].mxu0
      %v1518 = vadd.f32 %v1293, %v1517
      %v1519 = vpop.f32.mrb[0].mxu0
      %1520 = vdwg.mxu0
      %1521 = vmatprep.subr.mxu0 0.0
      %1522 = vmatpush1.msra.mxu0 %v684
      %1523 = vmatprep.subr.mxu0 0.0
      %1524 = vmatpush1.msra.mxu0 %v685
      %1525 = vmatprep.subr.mxu0 0.0
      %1526 = vmatpush1.msra.mxu0 %v686
      %1527 = vmatprep.subr.mxu0 0.0
      %1528 = vmatpush1.msra.mxu0 %v687
      %1529 = vmatprep.subr.mxu0 0.0
      %1530 = vmatpush1.msra.mxu0 %v688
      %1531 = vmatprep.subr.mxu0 0.0
      %1532 = vmatpush1.msra.mxu0 %v689
      %1533 = vmatprep.subr.mxu0 0.0
      %1534 = vmatpush1.msra.mxu0 %v690
      %1535 = vmatprep.subr.mxu0 0.0
      %1536 = vmatpush1.msra.mxu0 %v691
      %1537 = vmatprep.subr.mxu0 0.0
      %1538 = vmatpush1.msra.mxu0 %v692
      %1539 = vmatprep.subr.mxu0 0.0
      %1540 = vmatpush1.msra.mxu0 %v693
      %1541 = vmatprep.subr.mxu0 0.0
      %1542 = vmatpush1.msra.mxu0 %v694
      %1543 = vmatprep.subr.mxu0 0.0
      %1544 = vmatpush1.msra.mxu0 %v695
      %1545 = vmatprep.subr.mxu0 0.0
      %1546 = vmatpush1.msra.mxu0 %v696
      %1547 = vmatprep.subr.mxu0 0.0
      %1548 = vmatpush1.msra.mxu0 %v697
      %1549 = vmatprep.subr.mxu0 0.0
      %1550 = vmatpush1.msra.mxu0 %v698
      %1551 = vmatprep.subr.mxu0 0.0
      %1552 = vmatpush1.msra.mxu0 %v699
      %1553 = vmatprep.subr.mxu0 0.0
      %1554 = vmatpush1.msra.mxu0 0.0
      %1555 = vmatprep.subr.mxu0 0.0
      %1556 = vmatpush1.msra.mxu0 0.0
      %1557 = vmatprep.subr.mxu0 0.0
      %1558 = vmatpush1.msra.mxu0 0.0
      %1559 = vmatprep.subr.mxu0 0.0
      %1560 = vmatpush1.msra.mxu0 0.0
      %1561 = vmatprep.subr.mxu0 0.0
      %1562 = vmatpush1.msra.mxu0 0.0
      %1563 = vmatprep.subr.mxu0 0.0
      %1564 = vmatpush1.msra.mxu0 0.0
      %1565 = vmatprep.subr.mxu0 0.0
      %1566 = vmatpush1.msra.mxu0 0.0
      %1567 = vmatprep.subr.mxu0 0.0
      %1568 = vmatpush1.msra.mxu0 0.0
      %1569 = vmatprep.subr.mxu0 0.0
      %1570 = vmatpush1.msra.mxu0 0.0
      %1571 = vmatprep.subr.mxu0 0.0
      %1572 = vmatpush1.msra.mxu0 0.0
      %1573 = vmatprep.subr.mxu0 0.0
      %1574 = vmatpush1.msra.mxu0 0.0
      %1575 = vmatprep.subr.mxu0 0.0
      %1576 = vmatpush1.msra.mxu0 0.0
      %1577 = vmatprep.subr.mxu0 0.0
      %1578 = vmatpush1.msra.mxu0 0.0
      %1579 = vmatprep.subr.mxu0 0.0
      %1580 = vmatpush1.msra.mxu0 0.0
      %1581 = vmatprep.subr.mxu0 0.0
      %1582 = vmatpush1.msra.mxu0 0.0
      %1583 = vmatprep.subr.mxu0 0.0
      %1584 = vmatpush1.msra.mxu0 0.0
      %1585 = vmatprep.mubr.f32.mxu0 0.0
      %1586 = vmatmul.mubr.f32.gmra.mrb[0].mxu0 %v558
      %v1587 = vpop.f32.mrb[0].mxu0
      %v1588 = vadd.f32 %v1363, %v1587
      %v1589 = vpop.f32.mrb[0].mxu0
      %1590 = vmatprep.mubr.f32.mxu0 0.0
      %1591 = vmatmul.mubr.f32.gmra.mrb[0].mxu0 %v561
      %v1592 = vpop.f32.mrb[0].mxu0
      %v1593 = vadd.f32 %v1368, %v1592
      %v1594 = vpop.f32.mrb[0].mxu0
      %1595 = vmatprep.mubr.f32.mxu0 0.0
      %1596 = vmatmul.mubr.f32.gmra.mrb[0].mxu0 %v564
      %v1597 = vpop.f32.mrb[0].mxu0
      %v1598 = vadd.f32 %v1373, %v1597
      %v1599 = vpop.f32.mrb[0].mxu0
      %1600 = vmatprep.mubr.f32.mxu0 0.0
      %1601 = vmatmul.mubr.f32.gmra.mrb[0].mxu0 %v567
      %v1602 = vpop.f32.mrb[0].mxu0
      %v1603 = vadd.f32 %v1378, %v1602
      %v1604 = vpop.f32.mrb[0].mxu0
      %1605 = vmatprep.mubr.f32.mxu0 0.0
      %1606 = vmatmul.mubr.f32.gmra.mrb[0].mxu0 %v570
      %v1607 = vpop.f32.mrb[0].mxu0
      %v1608 = vadd.f32 %v1383, %v1607
      %v1609 = vpop.f32.mrb[0].mxu0
      %1610 = vmatprep.mubr.f32.mxu0 0.0
      %1611 = vmatmul.mubr.f32.gmra.mrb[0].mxu0 %v573
      %v1612 = vpop.f32.mrb[0].mxu0
      %v1613 = vadd.f32 %v1388, %v1612
      %v1614 = vpop.f32.mrb[0].mxu0
      %1615 = vmatprep.mubr.f32.mxu0 0.0
      %1616 = vmatmul.mubr.f32.gmra.mrb[0].mxu0 %v576
      %v1617 = vpop.f32.mrb[0].mxu0
      %v1618 = vadd.f32 %v1393, %v1617
      %v1619 = vpop.f32.mrb[0].mxu0
      %1620 = vmatprep.mubr.f32.mxu0 0.0
      %1621 = vmatmul.mubr.f32.gmra.mrb[0].mxu0 %v579
      %v1622 = vpop.f32.mrb[0].mxu0
      %v1623 = vadd.f32 %v1398, %v1622
      %v1624 = vpop.f32.mrb[0].mxu0
      %1625 = vmatprep.mubr.f32.mxu0 0.0
      %1626 = vmatmul.mubr.f32.gmra.mrb[0].mxu0 %v582
      %v1627 = vpop.f32.mrb[0].mxu0
      %v1628 = vadd.f32 %v1403, %v1627
      %v1629 = vpop.f32.mrb[0].mxu0
      %1630 = vmatprep.mubr.f32.mxu0 0.0
      %1631 = vmatmul.mubr.f32.gmra.mrb[0].mxu0 %v585
      %v1632 = vpop.f32.mrb[0].mxu0
      %v1633 = vadd.f32 %v1408, %v1632
      %v1634 = vpop.f32.mrb[0].mxu0
      %1635 = vmatprep.mubr.f32.mxu0 0.0
      %1636 = vmatmul.mubr.f32.gmra.mrb[0].mxu0 %v588
      %v1637 = vpop.f32.mrb[0].mxu0
      %v1638 = vadd.f32 %v1413, %v1637
      %v1639 = vpop.f32.mrb[0].mxu0
      %1640 = vmatprep.mubr.f32.mxu0 0.0
      %1641 = vmatmul.mubr.f32.gmra.mrb[0].mxu0 %v591
      %v1642 = vpop.f32.mrb[0].mxu0
      %v1643 = vadd.f32 %v1418, %v1642
      %v1644 = vpop.f32.mrb[0].mxu0
      %1645 = vmatprep.mubr.f32.mxu0 0.0
      %1646 = vmatmul.mubr.f32.gmra.mrb[0].mxu0 %v594
      %v1647 = vpop.f32.mrb[0].mxu0
      %v1648 = vadd.f32 %v1423, %v1647
      %v1649 = vpop.f32.mrb[0].mxu0
      %1650 = vmatprep.mubr.f32.mxu0 0.0
      %1651 = vmatmul.mubr.f32.gmra.mrb[0].mxu0 %v597
      %v1652 = vpop.f32.mrb[0].mxu0
      %v1653 = vadd.f32 %v1428, %v1652
      %v1654 = vpop.f32.mrb[0].mxu0
      %1655 = vmatprep.mubr.f32.mxu0 0.0
      %1656 = vmatmul.mubr.f32.gmra.mrb[0].mxu0 %v600
      %v1657 = vpop.f32.mrb[0].mxu0
      %v1658 = vadd.f32 %v1433, %v1657
      %v1659 = vpop.f32.mrb[0].mxu0
      %1660 = vmatprep.mubr.f32.mxu0 0.0
      %1661 = vmatmul.mubr.f32.gmra.mrb[0].mxu0 %v603
      %v1662 = vpop.f32.mrb[0].mxu0
      %v1663 = vadd.f32 %v1438, %v1662
      %v1664 = vpop.f32.mrb[0].mxu0
      %1665 = vmatprep.mubr.f32.mxu0 0.0
      %1666 = vmatmul.mubr.f32.gmra.mrb[0].mxu0 %v606
      %v1667 = vpop.f32.mrb[0].mxu0
      %v1668 = vadd.f32 %v1443, %v1667
      %v1669 = vpop.f32.mrb[0].mxu0
      %1670 = vmatprep.mubr.f32.mxu0 0.0
      %1671 = vmatmul.mubr.f32.gmra.mrb[0].mxu0 %v609
      %v1672 = vpop.f32.mrb[0].mxu0
      %v1673 = vadd.f32 %v1448, %v1672
      %v1674 = vpop.f32.mrb[0].mxu0
      %1675 = vmatprep.mubr.f32.mxu0 0.0
      %1676 = vmatmul.mubr.f32.gmra.mrb[0].mxu0 %v612
      %v1677 = vpop.f32.mrb[0].mxu0
      %v1678 = vadd.f32 %v1453, %v1677
      %v1679 = vpop.f32.mrb[0].mxu0
      %1680 = vmatprep.mubr.f32.mxu0 0.0
      %1681 = vmatmul.mubr.f32.gmra.mrb[0].mxu0 %v615
      %v1682 = vpop.f32.mrb[0].mxu0
      %v1683 = vadd.f32 %v1458, %v1682
      %v1684 = vpop.f32.mrb[0].mxu0
      %1685 = vmatprep.mubr.f32.mxu0 0.0
      %1686 = vmatmul.mubr.f32.gmra.mrb[0].mxu0 %v618
      %v1687 = vpop.f32.mrb[0].mxu0
      %v1688 = vadd.f32 %v1463, %v1687
      %v1689 = vpop.f32.mrb[0].mxu0
      %1690 = vmatprep.mubr.f32.mxu0 0.0
      %1691 = vmatmul.mubr.f32.gmra.mrb[0].mxu0 %v621
      %v1692 = vpop.f32.mrb[0].mxu0
      %v1693 = vadd.f32 %v1468, %v1692
      %v1694 = vpop.f32.mrb[0].mxu0
      %1695 = vmatprep.mubr.f32.mxu0 0.0
      %1696 = vmatmul.mubr.f32.gmra.mrb[0].mxu0 %v624
      %v1697 = vpop.f32.mrb[0].mxu0
      %v1698 = vadd.f32 %v1473, %v1697
      %v1699 = vpop.f32.mrb[0].mxu0
      %1700 = vmatprep.mubr.f32.mxu0 0.0
      %1701 = vmatmul.mubr.f32.gmra.mrb[0].mxu0 %v627
      %v1702 = vpop.f32.mrb[0].mxu0
      %v1703 = vadd.f32 %v1478, %v1702
      %v1704 = vpop.f32.mrb[0].mxu0
      %1705 = vmatprep.mubr.f32.mxu0 0.0
      %1706 = vmatmul.mubr.f32.gmra.mrb[0].mxu0 %v630
      %v1707 = vpop.f32.mrb[0].mxu0
      %v1708 = vadd.f32 %v1483, %v1707
      %v1709 = vpop.f32.mrb[0].mxu0
      %1710 = vmatprep.mubr.f32.mxu0 0.0
      %1711 = vmatmul.mubr.f32.gmra.mrb[0].mxu0 %v633
      %v1712 = vpop.f32.mrb[0].mxu0
      %v1713 = vadd.f32 %v1488, %v1712
      %v1714 = vpop.f32.mrb[0].mxu0
      %1715 = vmatprep.mubr.f32.mxu0 0.0
      %1716 = vmatmul.mubr.f32.gmra.mrb[0].mxu0 %v636
      %v1717 = vpop.f32.mrb[0].mxu0
      %v1718 = vadd.f32 %v1493, %v1717
      %v1719 = vpop.f32.mrb[0].mxu0
      %1720 = vmatprep.mubr.f32.mxu0 0.0
      %1721 = vmatmul.mubr.f32.gmra.mrb[0].mxu0 %v639
      %v1722 = vpop.f32.mrb[0].mxu0
      %v1723 = vadd.f32 %v1498, %v1722
      %v1724 = vpop.f32.mrb[0].mxu0
      %1725 = vmatprep.mubr.f32.mxu0 0.0
      %1726 = vmatmul.mubr.f32.gmra.mrb[0].mxu0 %v642
      %v1727 = vpop.f32.mrb[0].mxu0
      %v1728 = vadd.f32 %v1503, %v1727
      %v1729 = vpop.f32.mrb[0].mxu0
      %1730 = vmatprep.mubr.f32.mxu0 0.0
      %1731 = vmatmul.mubr.f32.gmra.mrb[0].mxu0 %v645
      %v1732 = vpop.f32.mrb[0].mxu0
      %v1733 = vadd.f32 %v1508, %v1732
      %v1734 = vpop.f32.mrb[0].mxu0
      %1735 = vmatprep.mubr.f32.mxu0 0.0
      %1736 = vmatmul.mubr.f32.gmra.mrb[0].mxu0 %v648
      %v1737 = vpop.f32.mrb[0].mxu0
      %v1738 = vadd.f32 %v1513, %v1737
      %v1739 = vpop.f32.mrb[0].mxu0
      %1740 = vmatprep.mubr.f32.mxu0 0.0
      %1741 = vmatmul.mubr.f32.gmra.mrb[0].mxu0 %v651
      %v1742 = vpop.f32.mrb[0].mxu0
      %v1743 = vadd.f32 %v1518, %v1742
      %v1744 = vpop.f32.mrb[0].mxu0
      %1745 = vdwg.mxu0
      %s1746 = scalar_lea.vmem [#allocation2], 96
      %v1747 = vld [vmem:[%s1746] sm:$0xff]
      %v1748 = vld [vmem:[%s1746 + $0x8] sm:$0xff]
      %v1749 = vld [vmem:[%s1746 + $0x10] sm:$0xff]
      %v1750 = vld [vmem:[%s1746 + $0x18] sm:$0xff]
      %v1751 = vld [vmem:[%s1746 + $0x20] sm:$0xff]
      %v1752 = vld [vmem:[%s1746 + $0x28] sm:$0xff]
      %v1753 = vld [vmem:[%s1746 + $0x30] sm:$0xff]
      %v1754 = vld [vmem:[%s1746 + $0x38] sm:$0xff]
      %v1755 = vld [vmem:[%s1746 + $0x40] sm:$0xff]
      %v1756 = vld [vmem:[%s1746 + $0x48] sm:$0xff]
      %v1757 = vld [vmem:[%s1746 + $0x50] sm:$0xff]
      %v1758 = vld [vmem:[%s1746 + $0x58] sm:$0xff]
      %v1759 = vld [vmem:[%s1746 + $0x60] sm:$0xff]
      %v1760 = vld [vmem:[%s1746 + $0x68] sm:$0xff]
      %v1761 = vld [vmem:[%s1746 + $0x70] sm:$0xff]
      %v1762 = vld [vmem:[%s1746 + $0x78] sm:$0xff]
      %v1763 = vld [vmem:[%s1746 + $0x80] sm:$0xff]
      %v1764 = vld [vmem:[%s1746 + $0x88] sm:$0xff]
      %v1765 = vld [vmem:[%s1746 + $0x90] sm:$0xff]
      %v1766 = vld [vmem:[%s1746 + $0x98] sm:$0xff]
      %v1767 = vld [vmem:[%s1746 + $0xa0] sm:$0xff]
      %v1768 = vld [vmem:[%s1746 + $0xa8] sm:$0xff]
      %v1769 = vld [vmem:[%s1746 + $0xb0] sm:$0xff]
      %v1770 = vld [vmem:[%s1746 + $0xb8] sm:$0xff]
      %v1771 = vld [vmem:[%s1746 + $0xc0] sm:$0xff]
      %v1772 = vld [vmem:[%s1746 + $0xc8] sm:$0xff]
      %v1773 = vld [vmem:[%s1746 + $0xd0] sm:$0xff]
      %v1774 = vld [vmem:[%s1746 + $0xd8] sm:$0xff]
      %v1775 = vld [vmem:[%s1746 + $0xe0] sm:$0xff]
      %v1776 = vld [vmem:[%s1746 + $0xe8] sm:$0xff]
      %v1777 = vld [vmem:[%s1746 + $0xf0] sm:$0xff]
      %v1778 = vld [vmem:[%s1746 + $0xf8] sm:$0xff]
      %v1779 = vld [vmem:[%s1746 + $0x100] sm:$0xff]
      %v1780 = vld [vmem:[%s1746 + $0x108] sm:$0xff]
      %v1781 = vld [vmem:[%s1746 + $0x110] sm:$0xff]
      %v1782 = vld [vmem:[%s1746 + $0x118] sm:$0xff]
      %v1783 = vld [vmem:[%s1746 + $0x120] sm:$0xff]
      %v1784 = vld [vmem:[%s1746 + $0x128] sm:$0xff]
      %v1785 = vld [vmem:[%s1746 + $0x130] sm:$0xff]
      %v1786 = vld [vmem:[%s1746 + $0x138] sm:$0xff]
      %v1787 = vld [vmem:[%s1746 + $0x140] sm:$0xff]
      %v1788 = vld [vmem:[%s1746 + $0x148] sm:$0xff]
      %v1789 = vld [vmem:[%s1746 + $0x150] sm:$0xff]
      %v1790 = vld [vmem:[%s1746 + $0x158] sm:$0xff]
      %v1791 = vld [vmem:[%s1746 + $0x160] sm:$0xff]
      %v1792 = vld [vmem:[%s1746 + $0x168] sm:$0xff]
      %v1793 = vld [vmem:[%s1746 + $0x170] sm:$0xff]
      %v1794 = vld [vmem:[%s1746 + $0x178] sm:$0xff]
      %v1795 = vld [vmem:[%s1746 + $0x180] sm:$0xff]
      %v1796 = vld [vmem:[%s1746 + $0x188] sm:$0xff]
      %v1797 = vld [vmem:[%s1746 + $0x190] sm:$0xff]
      %v1798 = vld [vmem:[%s1746 + $0x198] sm:$0xff]
      %v1799 = vld [vmem:[%s1746 + $0x1a0] sm:$0xff]
      %v1800 = vld [vmem:[%s1746 + $0x1a8] sm:$0xff]
      %v1801 = vld [vmem:[%s1746 + $0x1b0] sm:$0xff]
      %v1802 = vld [vmem:[%s1746 + $0x1b8] sm:$0xff]
      %v1803 = vld [vmem:[%s1746 + $0x1c0] sm:$0xff]
      %v1804 = vld [vmem:[%s1746 + $0x1c8] sm:$0xff]
      %v1805 = vld [vmem:[%s1746 + $0x1d0] sm:$0xff]
      %v1806 = vld [vmem:[%s1746 + $0x1d8] sm:$0xff]
      %v1807 = vld [vmem:[%s1746 + $0x1e0] sm:$0xff]
      %v1808 = vld [vmem:[%s1746 + $0x1e8] sm:$0xff]
      %v1809 = vld [vmem:[%s1746 + $0x1f0] sm:$0xff]
      %v1810 = vld [vmem:[%s1746 + $0x1f8] sm:$0xff]
      %v1811 = vld [vmem:[%s1746 + $0x200] sm:$0xff]
      %v1812 = vld [vmem:[%s1746 + $0x208] sm:$0xff]
      %v1813 = vld [vmem:[%s1746 + $0x210] sm:$0xff]
      %v1814 = vld [vmem:[%s1746 + $0x218] sm:$0xff]
      %v1815 = vld [vmem:[%s1746 + $0x220] sm:$0xff]
      %v1816 = vld [vmem:[%s1746 + $0x228] sm:$0xff]
      %v1817 = vld [vmem:[%s1746 + $0x230] sm:$0xff]
      %v1818 = vld [vmem:[%s1746 + $0x238] sm:$0xff]
      %v1819 = vld [vmem:[%s1746 + $0x240] sm:$0xff]
      %v1820 = vld [vmem:[%s1746 + $0x248] sm:$0xff]
      %v1821 = vld [vmem:[%s1746 + $0x250] sm:$0xff]
      %v1822 = vld [vmem:[%s1746 + $0x258] sm:$0xff]
      %v1823 = vld [vmem:[%s1746 + $0x260] sm:$0xff]
      %v1824 = vld [vmem:[%s1746 + $0x268] sm:$0xff]
      %v1825 = vld [vmem:[%s1746 + $0x270] sm:$0xff]
      %v1826 = vld [vmem:[%s1746 + $0x278] sm:$0xff]
      %v1827 = vld [vmem:[%s1746 + $0x280] sm:$0xff]
      %v1828 = vld [vmem:[%s1746 + $0x288] sm:$0xff]
      %v1829 = vld [vmem:[%s1746 + $0x290] sm:$0xff]
      %v1830 = vld [vmem:[%s1746 + $0x298] sm:$0xff]
      %v1831 = vld [vmem:[%s1746 + $0x2a0] sm:$0xff]
      %v1832 = vld [vmem:[%s1746 + $0x2a8] sm:$0xff]
      %v1833 = vld [vmem:[%s1746 + $0x2b0] sm:$0xff]
      %v1834 = vld [vmem:[%s1746 + $0x2b8] sm:$0xff]
      %v1835 = vld [vmem:[%s1746 + $0x2c0] sm:$0xff]
      %v1836 = vld [vmem:[%s1746 + $0x2c8] sm:$0xff]
      %v1837 = vld [vmem:[%s1746 + $0x2d0] sm:$0xff]
      %v1838 = vld [vmem:[%s1746 + $0x2d8] sm:$0xff]
      %v1839 = vld [vmem:[%s1746 + $0x2e0] sm:$0xff]
      %v1840 = vld [vmem:[%s1746 + $0x2e8] sm:$0xff]
      %v1841 = vld [vmem:[%s1746 + $0x2f0] sm:$0xff]
      %v1842 = vld [vmem:[%s1746 + $0x2f8] sm:$0xff]
      %s1843 = scalar_lea.vmem %s2, 768
      %v1844 = vld [vmem:[%s1843] sm:$0xff]
      %v1845 = vld [vmem:[%s1843 + $0x8] sm:$0xff]
      %v1846 = vld [vmem:[%s1843 + $0x10] sm:$0xff]
      %v1847 = vld [vmem:[%s1843 + $0x18] sm:$0xff]
      %v1848 = vld [vmem:[%s1843 + $0x20] sm:$0xff]
      %v1849 = vld [vmem:[%s1843 + $0x28] sm:$0xff]
      %v1850 = vld [vmem:[%s1843 + $0x30] sm:$0xff]
      %v1851 = vld [vmem:[%s1843 + $0x38] sm:$0xff]
      %v1852 = vld [vmem:[%s1843 + $0x40] sm:$0xff]
      %v1853 = vld [vmem:[%s1843 + $0x48] sm:$0xff]
      %v1854 = vld [vmem:[%s1843 + $0x50] sm:$0xff]
      %v1855 = vld [vmem:[%s1843 + $0x58] sm:$0xff]
      %v1856 = vld [vmem:[%s1843 + $0x60] sm:$0xff]
      %v1857 = vld [vmem:[%s1843 + $0x68] sm:$0xff]
      %v1858 = vld [vmem:[%s1843 + $0x70] sm:$0xff]
      %v1859 = vld [vmem:[%s1843 + $0x78] sm:$0xff]
      %v1860 = vld [vmem:[%s1843 + $0x80] sm:$0xff]
      %v1861 = vld [vmem:[%s1843 + $0x88] sm:$0xff]
      %v1862 = vld [vmem:[%s1843 + $0x90] sm:$0xff]
      %v1863 = vld [vmem:[%s1843 + $0x98] sm:$0xff]
      %v1864 = vld [vmem:[%s1843 + $0xa0] sm:$0xff]
      %v1865 = vld [vmem:[%s1843 + $0xa8] sm:$0xff]
      %v1866 = vld [vmem:[%s1843 + $0xb0] sm:$0xff]
      %v1867 = vld [vmem:[%s1843 + $0xb8] sm:$0xff]
      %v1868 = vld [vmem:[%s1843 + $0xc0] sm:$0xff]
      %v1869 = vld [vmem:[%s1843 + $0xc8] sm:$0xff]
      %v1870 = vld [vmem:[%s1843 + $0xd0] sm:$0xff]
      %v1871 = vld [vmem:[%s1843 + $0xd8] sm:$0xff]
      %v1872 = vld [vmem:[%s1843 + $0xe0] sm:$0xff]
      %v1873 = vld [vmem:[%s1843 + $0xe8] sm:$0xff]
      %v1874 = vld [vmem:[%s1843 + $0xf0] sm:$0xff]
      %v1875 = vld [vmem:[%s1843 + $0xf8] sm:$0xff]
      %v1876 = vld [vmem:[%s1843 + $0x100] sm:$0xff]
      %v1877 = vld [vmem:[%s1843 + $0x108] sm:$0xff]
      %v1878 = vld [vmem:[%s1843 + $0x110] sm:$0xff]
      %v1879 = vld [vmem:[%s1843 + $0x118] sm:$0xff]
      %v1880 = vld [vmem:[%s1843 + $0x120] sm:$0xff]
      %v1881 = vld [vmem:[%s1843 + $0x128] sm:$0xff]
      %v1882 = vld [vmem:[%s1843 + $0x130] sm:$0xff]
      %v1883 = vld [vmem:[%s1843 + $0x138] sm:$0xff]
      %v1884 = vld [vmem:[%s1843 + $0x140] sm:$0xff]
      %v1885 = vld [vmem:[%s1843 + $0x148] sm:$0xff]
      %v1886 = vld [vmem:[%s1843 + $0x150] sm:$0xff]
      %v1887 = vld [vmem:[%s1843 + $0x158] sm:$0xff]
      %v1888 = vld [vmem:[%s1843 + $0x160] sm:$0xff]
      %v1889 = vld [vmem:[%s1843 + $0x168] sm:$0xff]
      %v1890 = vld [vmem:[%s1843 + $0x170] sm:$0xff]
      %v1891 = vld [vmem:[%s1843 + $0x178] sm:$0xff]
      %1892 = vmatprep.subr.mxu0 0.0
      %1893 = vmatpush1.msra.mxu0 %v1844
      %1894 = vmatprep.subr.mxu0 0.0
      %1895 = vmatpush1.msra.mxu0 %v1845
      %1896 = vmatprep.subr.mxu0 0.0
      %1897 = vmatpush1.msra.mxu0 %v1846
      %1898 = vmatprep.subr.mxu0 0.0
      %1899 = vmatpush1.msra.mxu0 %v1847
      %1900 = vmatprep.subr.mxu0 0.0
      %1901 = vmatpush1.msra.mxu0 %v1848
      %1902 = vmatprep.subr.mxu0 0.0
      %1903 = vmatpush1.msra.mxu0 %v1849
      %1904 = vmatprep.subr.mxu0 0.0
      %1905 = vmatpush1.msra.mxu0 %v1850
      %1906 = vmatprep.subr.mxu0 0.0
      %1907 = vmatpush1.msra.mxu0 %v1851
      %1908 = vmatprep.subr.mxu0 0.0
      %1909 = vmatpush1.msra.mxu0 %v1852
      %1910 = vmatprep.subr.mxu0 0.0
      %1911 = vmatpush1.msra.mxu0 %v1853
      %1912 = vmatprep.subr.mxu0 0.0
      %1913 = vmatpush1.msra.mxu0 %v1854
      %1914 = vmatprep.subr.mxu0 0.0
      %1915 = vmatpush1.msra.mxu0 %v1855
      %1916 = vmatprep.subr.mxu0 0.0
      %1917 = vmatpush1.msra.mxu0 %v1856
      %1918 = vmatprep.subr.mxu0 0.0
      %1919 = vmatpush1.msra.mxu0 %v1857
      %1920 = vmatprep.subr.mxu0 0.0
      %1921 = vmatpush1.msra.mxu0 %v1858
      %1922 = vmatprep.subr.mxu0 0.0
      %1923 = vmatpush1.msra.mxu0 %v1859
      %1924 = vmatprep.subr.mxu0 0.0
      %1925 = vmatpush1.msra.mxu0 %v1860
      %1926 = vmatprep.subr.mxu0 0.0
      %1927 = vmatpush1.msra.mxu0 %v1861
      %1928 = vmatprep.subr.mxu0 0.0
      %1929 = vmatpush1.msra.mxu0 %v1862
      %1930 = vmatprep.subr.mxu0 0.0
      %1931 = vmatpush1.msra.mxu0 %v1863
      %1932 = vmatprep.subr.mxu0 0.0
      %1933 = vmatpush1.msra.mxu0 %v1864
      %1934 = vmatprep.subr.mxu0 0.0
      %1935 = vmatpush1.msra.mxu0 %v1865
      %1936 = vmatprep.subr.mxu0 0.0
      %1937 = vmatpush1.msra.mxu0 %v1866
      %1938 = vmatprep.subr.mxu0 0.0
      %1939 = vmatpush1.msra.mxu0 %v1867
      %1940 = vmatprep.subr.mxu0 0.0
      %1941 = vmatpush1.msra.mxu0 %v1868
      %1942 = vmatprep.subr.mxu0 0.0
      %1943 = vmatpush1.msra.mxu0 %v1869
      %1944 = vmatprep.subr.mxu0 0.0
      %1945 = vmatpush1.msra.mxu0 %v1870
      %1946 = vmatprep.subr.mxu0 0.0
      %1947 = vmatpush1.msra.mxu0 %v1871
      %1948 = vmatprep.subr.mxu0 0.0
      %1949 = vmatpush1.msra.mxu0 %v1872
      %1950 = vmatprep.subr.mxu0 0.0
      %1951 = vmatpush1.msra.mxu0 %v1873
      %1952 = vmatprep.subr.mxu0 0.0
      %1953 = vmatpush1.msra.mxu0 %v1874
      %1954 = vmatprep.subr.mxu0 0.0
      %1955 = vmatpush1.msra.mxu0 %v1875
      %1956 = vmatprep.mubr.f32.mxu0 %v1748
      %1957 = vmatmul.mubr.f32.gmra.mrb[0].mxu0 %v1747
      %v1958 = vpop.f32.mrb[0].mxu0
      %v1959 = vadd.f32 0.0, %v1958
      %v1960 = vpop.f32.mrb[0].mxu0
      %1961 = vmatprep.mubr.f32.mxu0 %v1751
      %1962 = vmatmul.mubr.f32.gmra.mrb[0].mxu0 %v1750
      %v1963 = vpop.f32.mrb[0].mxu0
      %v1964 = vadd.f32 0.0, %v1963
      %v1965 = vpop.f32.mrb[0].mxu0
      %1966 = vmatprep.mubr.f32.mxu0 %v1754
      %1967 = vmatmul.mubr.f32.gmra.mrb[0].mxu0 %v1753
      %v1968 = vpop.f32.mrb[0].mxu0
      %v1969 = vadd.f32 0.0, %v1968
      %v1970 = vpop.f32.mrb[0].mxu0
      %1971 = vmatprep.mubr.f32.mxu0 %v1757
      %1972 = vmatmul.mubr.f32.gmra.mrb[0].mxu0 %v1756
      %v1973 = vpop.f32.mrb[0].mxu0
      %v1974 = vadd.f32 0.0, %v1973
      %v1975 = vpop.f32.mrb[0].mxu0
      %1976 = vmatprep.mubr.f32.mxu0 %v1760
      %1977 = vmatmul.mubr.f32.gmra.mrb[0].mxu0 %v1759
      %v1978 = vpop.f32.mrb[0].mxu0
      %v1979 = vadd.f32 0.0, %v1978
      %v1980 = vpop.f32.mrb[0].mxu0
      %1981 = vmatprep.mubr.f32.mxu0 %v1763
      %1982 = vmatmul.mubr.f32.gmra.mrb[0].mxu0 %v1762
      %v1983 = vpop.f32.mrb[0].mxu0
      %v1984 = vadd.f32 0.0, %v1983
      %v1985 = vpop.f32.mrb[0].mxu0
      %1986 = vmatprep.mubr.f32.mxu0 %v1766
      %1987 = vmatmul.mubr.f32.gmra.mrb[0].mxu0 %v1765
      %v1988 = vpop.f32.mrb[0].mxu0
      %v1989 = vadd.f32 0.0, %v1988
      %v1990 = vpop.f32.mrb[0].mxu0
      %1991 = vmatprep.mubr.f32.mxu0 %v1769
      %1992 = vmatmul.mubr.f32.gmra.mrb[0].mxu0 %v1768
      %v1993 = vpop.f32.mrb[0].mxu0
      %v1994 = vadd.f32 0.0, %v1993
      %v1995 = vpop.f32.mrb[0].mxu0
      %1996 = vmatprep.mubr.f32.mxu0 %v1772
      %1997 = vmatmul.mubr.f32.gmra.mrb[0].mxu0 %v1771
      %v1998 = vpop.f32.mrb[0].mxu0
      %v1999 = vadd.f32 0.0, %v1998
      %v2000 = vpop.f32.mrb[0].mxu0
      %2001 = vmatprep.mubr.f32.mxu0 %v1775
      %2002 = vmatmul.mubr.f32.gmra.mrb[0].mxu0 %v1774
      %v2003 = vpop.f32.mrb[0].mxu0
      %v2004 = vadd.f32 0.0, %v2003
      %v2005 = vpop.f32.mrb[0].mxu0
      %2006 = vmatprep.mubr.f32.mxu0 %v1778
      %2007 = vmatmul.mubr.f32.gmra.mrb[0].mxu0 %v1777
      %v2008 = vpop.f32.mrb[0].mxu0
      %v2009 = vadd.f32 0.0, %v2008
      %v2010 = vpop.f32.mrb[0].mxu0
      %2011 = vmatprep.mubr.f32.mxu0 %v1781
      %2012 = vmatmul.mubr.f32.gmra.mrb[0].mxu0 %v1780
      %v2013 = vpop.f32.mrb[0].mxu0
      %v2014 = vadd.f32 0.0, %v2013
      %v2015 = vpop.f32.mrb[0].mxu0
      %2016 = vmatprep.mubr.f32.mxu0 %v1784
      %2017 = vmatmul.mubr.f32.gmra.mrb[0].mxu0 %v1783
      %v2018 = vpop.f32.mrb[0].mxu0
      %v2019 = vadd.f32 0.0, %v2018
      %v2020 = vpop.f32.mrb[0].mxu0
      %2021 = vmatprep.mubr.f32.mxu0 %v1787
      %2022 = vmatmul.mubr.f32.gmra.mrb[0].mxu0 %v1786
      %v2023 = vpop.f32.mrb[0].mxu0
      %v2024 = vadd.f32 0.0, %v2023
      %v2025 = vpop.f32.mrb[0].mxu0
      %2026 = vmatprep.mubr.f32.mxu0 %v1790
      %2027 = vmatmul.mubr.f32.gmra.mrb[0].mxu0 %v1789
      %v2028 = vpop.f32.mrb[0].mxu0
      %v2029 = vadd.f32 0.0, %v2028
      %v2030 = vpop.f32.mrb[0].mxu0
      %2031 = vmatprep.mubr.f32.mxu0 %v1793
      %2032 = vmatmul.mubr.f32.gmra.mrb[0].mxu0 %v1792
      %v2033 = vpop.f32.mrb[0].mxu0
      %v2034 = vadd.f32 0.0, %v2033
      %v2035 = vpop.f32.mrb[0].mxu0
      %2036 = vmatprep.mubr.f32.mxu0 %v1796
      %2037 = vmatmul.mubr.f32.gmra.mrb[0].mxu0 %v1795
      %v2038 = vpop.f32.mrb[0].mxu0
      %v2039 = vadd.f32 0.0, %v2038
      %v2040 = vpop.f32.mrb[0].mxu0
      %2041 = vmatprep.mubr.f32.mxu0 %v1799
      %2042 = vmatmul.mubr.f32.gmra.mrb[0].mxu0 %v1798
      %v2043 = vpop.f32.mrb[0].mxu0
      %v2044 = vadd.f32 0.0, %v2043
      %v2045 = vpop.f32.mrb[0].mxu0
      %2046 = vmatprep.mubr.f32.mxu0 %v1802
      %2047 = vmatmul.mubr.f32.gmra.mrb[0].mxu0 %v1801
      %v2048 = vpop.f32.mrb[0].mxu0
      %v2049 = vadd.f32 0.0, %v2048
      %v2050 = vpop.f32.mrb[0].mxu0
      %2051 = vmatprep.mubr.f32.mxu0 %v1805
      %2052 = vmatmul.mubr.f32.gmra.mrb[0].mxu0 %v1804
      %v2053 = vpop.f32.mrb[0].mxu0
      %v2054 = vadd.f32 0.0, %v2053
      %v2055 = vpop.f32.mrb[0].mxu0
      %2056 = vmatprep.mubr.f32.mxu0 %v1808
      %2057 = vmatmul.mubr.f32.gmra.mrb[0].mxu0 %v1807
      %v2058 = vpop.f32.mrb[0].mxu0
      %v2059 = vadd.f32 0.0, %v2058
      %v2060 = vpop.f32.mrb[0].mxu0
      %2061 = vmatprep.mubr.f32.mxu0 %v1811
      %2062 = vmatmul.mubr.f32.gmra.mrb[0].mxu0 %v1810
      %v2063 = vpop.f32.mrb[0].mxu0
      %v2064 = vadd.f32 0.0, %v2063
      %v2065 = vpop.f32.mrb[0].mxu0
      %2066 = vmatprep.mubr.f32.mxu0 %v1814
      %2067 = vmatmul.mubr.f32.gmra.mrb[0].mxu0 %v1813
      %v2068 = vpop.f32.mrb[0].mxu0
      %v2069 = vadd.f32 0.0, %v2068
      %v2070 = vpop.f32.mrb[0].mxu0
      %2071 = vmatprep.mubr.f32.mxu0 %v1817
      %2072 = vmatmul.mubr.f32.gmra.mrb[0].mxu0 %v1816
      %v2073 = vpop.f32.mrb[0].mxu0
      %v2074 = vadd.f32 0.0, %v2073
      %v2075 = vpop.f32.mrb[0].mxu0
      %2076 = vmatprep.mubr.f32.mxu0 %v1820
      %2077 = vmatmul.mubr.f32.gmra.mrb[0].mxu0 %v1819
      %v2078 = vpop.f32.mrb[0].mxu0
      %v2079 = vadd.f32 0.0, %v2078
      %v2080 = vpop.f32.mrb[0].mxu0
      %2081 = vmatprep.mubr.f32.mxu0 %v1823
      %2082 = vmatmul.mubr.f32.gmra.mrb[0].mxu0 %v1822
      %v2083 = vpop.f32.mrb[0].mxu0
      %v2084 = vadd.f32 0.0, %v2083
      %v2085 = vpop.f32.mrb[0].mxu0
      %2086 = vmatprep.mubr.f32.mxu0 %v1826
      %2087 = vmatmul.mubr.f32.gmra.mrb[0].mxu0 %v1825
      %v2088 = vpop.f32.mrb[0].mxu0
      %v2089 = vadd.f32 0.0, %v2088
      %v2090 = vpop.f32.mrb[0].mxu0
      %2091 = vmatprep.mubr.f32.mxu0 %v1829
      %2092 = vmatmul.mubr.f32.gmra.mrb[0].mxu0 %v1828
      %v2093 = vpop.f32.mrb[0].mxu0
      %v2094 = vadd.f32 0.0, %v2093
      %v2095 = vpop.f32.mrb[0].mxu0
      %2096 = vmatprep.mubr.f32.mxu0 %v1832
      %2097 = vmatmul.mubr.f32.gmra.mrb[0].mxu0 %v1831
      %v2098 = vpop.f32.mrb[0].mxu0
      %v2099 = vadd.f32 0.0, %v2098
      %v2100 = vpop.f32.mrb[0].mxu0
      %2101 = vmatprep.mubr.f32.mxu0 %v1835
      %2102 = vmatmul.mubr.f32.gmra.mrb[0].mxu0 %v1834
      %v2103 = vpop.f32.mrb[0].mxu0
      %v2104 = vadd.f32 0.0, %v2103
      %v2105 = vpop.f32.mrb[0].mxu0
      %2106 = vmatprep.mubr.f32.mxu0 %v1838
      %2107 = vmatmul.mubr.f32.gmra.mrb[0].mxu0 %v1837
      %v2108 = vpop.f32.mrb[0].mxu0
      %v2109 = vadd.f32 0.0, %v2108
      %v2110 = vpop.f32.mrb[0].mxu0
      %2111 = vmatprep.mubr.f32.mxu0 %v1841
      %2112 = vmatmul.mubr.f32.gmra.mrb[0].mxu0 %v1840
      %v2113 = vpop.f32.mrb[0].mxu0
      %v2114 = vadd.f32 0.0, %v2113
      %v2115 = vpop.f32.mrb[0].mxu0
      %2116 = vdwg.mxu0
      %2117 = vmatprep.subr.mxu0 0.0
      %2118 = vmatpush1.msra.mxu0 %v1876
      %2119 = vmatprep.subr.mxu0 0.0
      %2120 = vmatpush1.msra.mxu0 %v1877
      %2121 = vmatprep.subr.mxu0 0.0
      %2122 = vmatpush1.msra.mxu0 %v1878
      %2123 = vmatprep.subr.mxu0 0.0
      %2124 = vmatpush1.msra.mxu0 %v1879
      %2125 = vmatprep.subr.mxu0 0.0
      %2126 = vmatpush1.msra.mxu0 %v1880
      %2127 = vmatprep.subr.mxu0 0.0
      %2128 = vmatpush1.msra.mxu0 %v1881
      %2129 = vmatprep.subr.mxu0 0.0
      %2130 = vmatpush1.msra.mxu0 %v1882
      %2131 = vmatprep.subr.mxu0 0.0
      %2132 = vmatpush1.msra.mxu0 %v1883
      %2133 = vmatprep.subr.mxu0 0.0
      %2134 = vmatpush1.msra.mxu0 %v1884
      %2135 = vmatprep.subr.mxu0 0.0
      %2136 = vmatpush1.msra.mxu0 %v1885
      %2137 = vmatprep.subr.mxu0 0.0
      %2138 = vmatpush1.msra.mxu0 %v1886
      %2139 = vmatprep.subr.mxu0 0.0
      %2140 = vmatpush1.msra.mxu0 %v1887
      %2141 = vmatprep.subr.mxu0 0.0
      %2142 = vmatpush1.msra.mxu0 %v1888
      %2143 = vmatprep.subr.mxu0 0.0
      %2144 = vmatpush1.msra.mxu0 %v1889
      %2145 = vmatprep.subr.mxu0 0.0
      %2146 = vmatpush1.msra.mxu0 %v1890
      %2147 = vmatprep.subr.mxu0 0.0
      %2148 = vmatpush1.msra.mxu0 %v1891
      %2149 = vmatprep.subr.mxu0 0.0
      %2150 = vmatpush1.msra.mxu0 0.0
      %2151 = vmatprep.subr.mxu0 0.0
      %2152 = vmatpush1.msra.mxu0 0.0
      %2153 = vmatprep.subr.mxu0 0.0
      %2154 = vmatpush1.msra.mxu0 0.0
      %2155 = vmatprep.subr.mxu0 0.0
      %2156 = vmatpush1.msra.mxu0 0.0
      %2157 = vmatprep.subr.mxu0 0.0
      %2158 = vmatpush1.msra.mxu0 0.0
      %2159 = vmatprep.subr.mxu0 0.0
      %2160 = vmatpush1.msra.mxu0 0.0
      %2161 = vmatprep.subr.mxu0 0.0
      %2162 = vmatpush1.msra.mxu0 0.0
      %2163 = vmatprep.subr.mxu0 0.0
      %2164 = vmatpush1.msra.mxu0 0.0
      %2165 = vmatprep.subr.mxu0 0.0
      %2166 = vmatpush1.msra.mxu0 0.0
      %2167 = vmatprep.subr.mxu0 0.0
      %2168 = vmatpush1.msra.mxu0 0.0
      %2169 = vmatprep.subr.mxu0 0.0
      %2170 = vmatpush1.msra.mxu0 0.0
      %2171 = vmatprep.subr.mxu0 0.0
      %2172 = vmatpush1.msra.mxu0 0.0
      %2173 = vmatprep.subr.mxu0 0.0
      %2174 = vmatpush1.msra.mxu0 0.0
      %2175 = vmatprep.subr.mxu0 0.0
      %2176 = vmatpush1.msra.mxu0 0.0
      %2177 = vmatprep.subr.mxu0 0.0
      %2178 = vmatpush1.msra.mxu0 0.0
      %2179 = vmatprep.subr.mxu0 0.0
      %2180 = vmatpush1.msra.mxu0 0.0
      %2181 = vmatprep.mubr.f32.mxu0 0.0
      %2182 = vmatmul.mubr.f32.gmra.mrb[0].mxu0 %v1749
      %v2183 = vpop.f32.mrb[0].mxu0
      %v2184 = vadd.f32 %v1959, %v2183
      %v2185 = vpop.f32.mrb[0].mxu0
      %2186 = vmatprep.mubr.f32.mxu0 0.0
      %2187 = vmatmul.mubr.f32.gmra.mrb[0].mxu0 %v1752
      %v2188 = vpop.f32.mrb[0].mxu0
      %v2189 = vadd.f32 %v1964, %v2188
      %v2190 = vpop.f32.mrb[0].mxu0
      %2191 = vmatprep.mubr.f32.mxu0 0.0
      %2192 = vmatmul.mubr.f32.gmra.mrb[0].mxu0 %v1755
      %v2193 = vpop.f32.mrb[0].mxu0
      %v2194 = vadd.f32 %v1969, %v2193
      %v2195 = vpop.f32.mrb[0].mxu0
      %2196 = vmatprep.mubr.f32.mxu0 0.0
      %2197 = vmatmul.mubr.f32.gmra.mrb[0].mxu0 %v1758
      %v2198 = vpop.f32.mrb[0].mxu0
      %v2199 = vadd.f32 %v1974, %v2198
      %v2200 = vpop.f32.mrb[0].mxu0
      %2201 = vmatprep.mubr.f32.mxu0 0.0
      %2202 = vmatmul.mubr.f32.gmra.mrb[0].mxu0 %v1761
      %v2203 = vpop.f32.mrb[0].mxu0
      %v2204 = vadd.f32 %v1979, %v2203
      %v2205 = vpop.f32.mrb[0].mxu0
      %2206 = vmatprep.mubr.f32.mxu0 0.0
      %2207 = vmatmul.mubr.f32.gmra.mrb[0].mxu0 %v1764
      %v2208 = vpop.f32.mrb[0].mxu0
      %v2209 = vadd.f32 %v1984, %v2208
      %v2210 = vpop.f32.mrb[0].mxu0
      %2211 = vmatprep.mubr.f32.mxu0 0.0
      %2212 = vmatmul.mubr.f32.gmra.mrb[0].mxu0 %v1767
      %v2213 = vpop.f32.mrb[0].mxu0
      %v2214 = vadd.f32 %v1989, %v2213
      %v2215 = vpop.f32.mrb[0].mxu0
      %2216 = vmatprep.mubr.f32.mxu0 0.0
      %2217 = vmatmul.mubr.f32.gmra.mrb[0].mxu0 %v1770
      %v2218 = vpop.f32.mrb[0].mxu0
      %v2219 = vadd.f32 %v1994, %v2218
      %v2220 = vpop.f32.mrb[0].mxu0
      %2221 = vmatprep.mubr.f32.mxu0 0.0
      %2222 = vmatmul.mubr.f32.gmra.mrb[0].mxu0 %v1773
      %v2223 = vpop.f32.mrb[0].mxu0
      %v2224 = vadd.f32 %v1999, %v2223
      %v2225 = vpop.f32.mrb[0].mxu0
      %2226 = vmatprep.mubr.f32.mxu0 0.0
      %2227 = vmatmul.mubr.f32.gmra.mrb[0].mxu0 %v1776
      %v2228 = vpop.f32.mrb[0].mxu0
      %v2229 = vadd.f32 %v2004, %v2228
      %v2230 = vpop.f32.mrb[0].mxu0
      %2231 = vmatprep.mubr.f32.mxu0 0.0
      %2232 = vmatmul.mubr.f32.gmra.mrb[0].mxu0 %v1779
      %v2233 = vpop.f32.mrb[0].mxu0
      %v2234 = vadd.f32 %v2009, %v2233
      %v2235 = vpop.f32.mrb[0].mxu0
      %2236 = vmatprep.mubr.f32.mxu0 0.0
      %2237 = vmatmul.mubr.f32.gmra.mrb[0].mxu0 %v1782
      %v2238 = vpop.f32.mrb[0].mxu0
      %v2239 = vadd.f32 %v2014, %v2238
      %v2240 = vpop.f32.mrb[0].mxu0
      %2241 = vmatprep.mubr.f32.mxu0 0.0
      %2242 = vmatmul.mubr.f32.gmra.mrb[0].mxu0 %v1785
      %v2243 = vpop.f32.mrb[0].mxu0
      %v2244 = vadd.f32 %v2019, %v2243
      %v2245 = vpop.f32.mrb[0].mxu0
      %2246 = vmatprep.mubr.f32.mxu0 0.0
      %2247 = vmatmul.mubr.f32.gmra.mrb[0].mxu0 %v1788
      %v2248 = vpop.f32.mrb[0].mxu0
      %v2249 = vadd.f32 %v2024, %v2248
      %v2250 = vpop.f32.mrb[0].mxu0
      %2251 = vmatprep.mubr.f32.mxu0 0.0
      %2252 = vmatmul.mubr.f32.gmra.mrb[0].mxu0 %v1791
      %v2253 = vpop.f32.mrb[0].mxu0
      %v2254 = vadd.f32 %v2029, %v2253
      %v2255 = vpop.f32.mrb[0].mxu0
      %2256 = vmatprep.mubr.f32.mxu0 0.0
      %2257 = vmatmul.mubr.f32.gmra.mrb[0].mxu0 %v1794
      %v2258 = vpop.f32.mrb[0].mxu0
      %v2259 = vadd.f32 %v2034, %v2258
      %v2260 = vpop.f32.mrb[0].mxu0
      %2261 = vmatprep.mubr.f32.mxu0 0.0
      %2262 = vmatmul.mubr.f32.gmra.mrb[0].mxu0 %v1797
      %v2263 = vpop.f32.mrb[0].mxu0
      %v2264 = vadd.f32 %v2039, %v2263
      %v2265 = vpop.f32.mrb[0].mxu0
      %2266 = vmatprep.mubr.f32.mxu0 0.0
      %2267 = vmatmul.mubr.f32.gmra.mrb[0].mxu0 %v1800
      %v2268 = vpop.f32.mrb[0].mxu0
      %v2269 = vadd.f32 %v2044, %v2268
      %v2270 = vpop.f32.mrb[0].mxu0
      %2271 = vmatprep.mubr.f32.mxu0 0.0
      %2272 = vmatmul.mubr.f32.gmra.mrb[0].mxu0 %v1803
      %v2273 = vpop.f32.mrb[0].mxu0
      %v2274 = vadd.f32 %v2049, %v2273
      %v2275 = vpop.f32.mrb[0].mxu0
      %2276 = vmatprep.mubr.f32.mxu0 0.0
      %2277 = vmatmul.mubr.f32.gmra.mrb[0].mxu0 %v1806
      %v2278 = vpop.f32.mrb[0].mxu0
      %v2279 = vadd.f32 %v2054, %v2278
      %v2280 = vpop.f32.mrb[0].mxu0
      %2281 = vmatprep.mubr.f32.mxu0 0.0
      %2282 = vmatmul.mubr.f32.gmra.mrb[0].mxu0 %v1809
      %v2283 = vpop.f32.mrb[0].mxu0
      %v2284 = vadd.f32 %v2059, %v2283
      %v2285 = vpop.f32.mrb[0].mxu0
      %2286 = vmatprep.mubr.f32.mxu0 0.0
      %2287 = vmatmul.mubr.f32.gmra.mrb[0].mxu0 %v1812
      %v2288 = vpop.f32.mrb[0].mxu0
      %v2289 = vadd.f32 %v2064, %v2288
      %v2290 = vpop.f32.mrb[0].mxu0
      %2291 = vmatprep.mubr.f32.mxu0 0.0
      %2292 = vmatmul.mubr.f32.gmra.mrb[0].mxu0 %v1815
      %v2293 = vpop.f32.mrb[0].mxu0
      %v2294 = vadd.f32 %v2069, %v2293
      %v2295 = vpop.f32.mrb[0].mxu0
      %2296 = vmatprep.mubr.f32.mxu0 0.0
      %2297 = vmatmul.mubr.f32.gmra.mrb[0].mxu0 %v1818
      %v2298 = vpop.f32.mrb[0].mxu0
      %v2299 = vadd.f32 %v2074, %v2298
      %v2300 = vpop.f32.mrb[0].mxu0
      %2301 = vmatprep.mubr.f32.mxu0 0.0
      %2302 = vmatmul.mubr.f32.gmra.mrb[0].mxu0 %v1821
      %v2303 = vpop.f32.mrb[0].mxu0
      %v2304 = vadd.f32 %v2079, %v2303
      %v2305 = vpop.f32.mrb[0].mxu0
      %2306 = vmatprep.mubr.f32.mxu0 0.0
      %2307 = vmatmul.mubr.f32.gmra.mrb[0].mxu0 %v1824
      %v2308 = vpop.f32.mrb[0].mxu0
      %v2309 = vadd.f32 %v2084, %v2308
      %v2310 = vpop.f32.mrb[0].mxu0
      %2311 = vmatprep.mubr.f32.mxu0 0.0
      %2312 = vmatmul.mubr.f32.gmra.mrb[0].mxu0 %v1827
      %v2313 = vpop.f32.mrb[0].mxu0
      %v2314 = vadd.f32 %v2089, %v2313
      %v2315 = vpop.f32.mrb[0].mxu0
      %2316 = vmatprep.mubr.f32.mxu0 0.0
      %2317 = vmatmul.mubr.f32.gmra.mrb[0].mxu0 %v1830
      %v2318 = vpop.f32.mrb[0].mxu0
      %v2319 = vadd.f32 %v2094, %v2318
      %v2320 = vpop.f32.mrb[0].mxu0
      %2321 = vmatprep.mubr.f32.mxu0 0.0
      %2322 = vmatmul.mubr.f32.gmra.mrb[0].mxu0 %v1833
      %v2323 = vpop.f32.mrb[0].mxu0
      %v2324 = vadd.f32 %v2099, %v2323
      %v2325 = vpop.f32.mrb[0].mxu0
      %2326 = vmatprep.mubr.f32.mxu0 0.0
      %2327 = vmatmul.mubr.f32.gmra.mrb[0].mxu0 %v1836
      %v2328 = vpop.f32.mrb[0].mxu0
      %v2329 = vadd.f32 %v2104, %v2328
      %v2330 = vpop.f32.mrb[0].mxu0
      %2331 = vmatprep.mubr.f32.mxu0 0.0
      %2332 = vmatmul.mubr.f32.gmra.mrb[0].mxu0 %v1839
      %v2333 = vpop.f32.mrb[0].mxu0
      %v2334 = vadd.f32 %v2109, %v2333
      %v2335 = vpop.f32.mrb[0].mxu0
      %2336 = vmatprep.mubr.f32.mxu0 0.0
      %2337 = vmatmul.mubr.f32.gmra.mrb[0].mxu0 %v1842
      %v2338 = vpop.f32.mrb[0].mxu0
      %v2339 = vadd.f32 %v2114, %v2338
      %v2340 = vpop.f32.mrb[0].mxu0
      %2341 = vdwg.mxu0
      %v2342 = vadd.f32 %v1588, %v2184
      %v2343 = vadd.f32 %v1593, %v2189
      %v2344 = vadd.f32 %v1598, %v2194
      %v2345 = vadd.f32 %v1603, %v2199
      %v2346 = vadd.f32 %v1608, %v2204
      %v2347 = vadd.f32 %v1613, %v2209
      %v2348 = vadd.f32 %v1618, %v2214
      %v2349 = vadd.f32 %v1623, %v2219
      %v2350 = vadd.f32 %v1628, %v2224
      %v2351 = vadd.f32 %v1633, %v2229
      %v2352 = vadd.f32 %v1638, %v2234
      %v2353 = vadd.f32 %v1643, %v2239
      %v2354 = vadd.f32 %v1648, %v2244
      %v2355 = vadd.f32 %v1653, %v2249
      %v2356 = vadd.f32 %v1658, %v2254
      %v2357 = vadd.f32 %v1663, %v2259
      %v2358 = vadd.f32 %v1668, %v2264
      %v2359 = vadd.f32 %v1673, %v2269
      %v2360 = vadd.f32 %v1678, %v2274
      %v2361 = vadd.f32 %v1683, %v2279
      %v2362 = vadd.f32 %v1688, %v2284
      %v2363 = vadd.f32 %v1693, %v2289
      %v2364 = vadd.f32 %v1698, %v2294
      %v2365 = vadd.f32 %v1703, %v2299
      %v2366 = vadd.f32 %v1708, %v2304
      %v2367 = vadd.f32 %v1713, %v2309
      %v2368 = vadd.f32 %v1718, %v2314
      %v2369 = vadd.f32 %v1723, %v2319
      %v2370 = vadd.f32 %v1728, %v2324
      %v2371 = vadd.f32 %v1733, %v2329
      %v2372 = vadd.f32 %v1738, %v2334
      %v2373 = vadd.f32 %v1743, %v2339
      %2374 = vst [vmem:[%s330] sm:$0xff] %v2342
      %2375 = vst [vmem:[%s330 + $0x8] sm:$0xff] %v2343
      %2376 = vst [vmem:[%s330 + $0x10] sm:$0xff] %v2344
      %2377 = vst [vmem:[%s330 + $0x18] sm:$0xff] %v2345
      %2378 = vst [vmem:[%s330 + $0x20] sm:$0xff] %v2346
      %2379 = vst [vmem:[%s330 + $0x28] sm:$0xff] %v2347
      %2380 = vst [vmem:[%s330 + $0x30] sm:$0xff] %v2348
      %2381 = vst [vmem:[%s330 + $0x38] sm:$0xff] %v2349
      %2382 = vst [vmem:[%s330 + $0x40] sm:$0xff] %v2350
      %2383 = vst [vmem:[%s330 + $0x48] sm:$0xff] %v2351
      %2384 = vst [vmem:[%s330 + $0x50] sm:$0xff] %v2352
      %2385 = vst [vmem:[%s330 + $0x58] sm:$0xff] %v2353
      %2386 = vst [vmem:[%s330 + $0x60] sm:$0xff] %v2354
      %2387 = vst [vmem:[%s330 + $0x68] sm:$0xff] %v2355
      %2388 = vst [vmem:[%s330 + $0x70] sm:$0xff] %v2356
      %2389 = vst [vmem:[%s330 + $0x78] sm:$0xff] %v2357
      %2390 = vst [vmem:[%s330 + $0x80] sm:$0xff] %v2358
      %2391 = vst [vmem:[%s330 + $0x88] sm:$0xff] %v2359
      %2392 = vst [vmem:[%s330 + $0x90] sm:$0xff] %v2360
      %2393 = vst [vmem:[%s330 + $0x98] sm:$0xff] %v2361
      %2394 = vst [vmem:[%s330 + $0xa0] sm:$0xff] %v2362
      %2395 = vst [vmem:[%s330 + $0xa8] sm:$0xff] %v2363
      %2396 = vst [vmem:[%s330 + $0xb0] sm:$0xff] %v2364
      %2397 = vst [vmem:[%s330 + $0xb8] sm:$0xff] %v2365
      %2398 = vst [vmem:[%s330 + $0xc0] sm:$0xff] %v2366
      %2399 = vst [vmem:[%s330 + $0xc8] sm:$0xff] %v2367
      %2400 = vst [vmem:[%s330 + $0xd0] sm:$0xff] %v2368
      %2401 = vst [vmem:[%s330 + $0xd8] sm:$0xff] %v2369
      %2402 = vst [vmem:[%s330 + $0xe0] sm:$0xff] %v2370
      %2403 = vst [vmem:[%s330 + $0xe8] sm:$0xff] %v2371
      %2404 = vst [vmem:[%s330 + $0xf0] sm:$0xff] %v2372
      %2405 = vst [vmem:[%s330 + $0xf8] sm:$0xff] %v2373
      %v2406 = vadd.f32 %v2342, %v2343
      %v2407 = vadd.f32 %v2406, %v2344
      %v2408 = vadd.f32 %v2407, %v2345
      %v2409 = vadd.f32 %v2408, %v2346
      %v2410 = vadd.f32 %v2409, %v2347
      %v2411 = vadd.f32 %v2410, %v2348
      %v2412 = vadd.f32 %v2411, %v2349
      %v2413 = vadd.f32 %v2412, %v2350
      %v2414 = vadd.f32 %v2413, %v2351
      %v2415 = vadd.f32 %v2414, %v2352
      %v2416 = vadd.f32 %v2415, %v2353
      %v2417 = vadd.f32 %v2416, %v2354
      %v2418 = vadd.f32 %v2417, %v2355
      %v2419 = vadd.f32 %v2418, %v2356
      %v2420 = vadd.f32 %v2419, %v2357
      %v2421 = vadd.f32 %v2420, %v2358
      %v2422 = vadd.f32 %v2421, %v2359
      %v2423 = vadd.f32 %v2422, %v2360
      %v2424 = vadd.f32 %v2423, %v2361
      %v2425 = vadd.f32 %v2424, %v2362
      %v2426 = vadd.f32 %v2425, %v2363
      %v2427 = vadd.f32 %v2426, %v2364
      %v2428 = vadd.f32 %v2427, %v2365
      %v2429 = vadd.f32 %v2428, %v2366
      %v2430 = vadd.f32 %v2429, %v2367
      %v2431 = vadd.f32 %v2430, %v2368
      %v2432 = vadd.f32 %v2431, %v2369
      %v2433 = vadd.f32 %v2432, %v2370
      %v2434 = vadd.f32 %v2433, %v2371
      %v2435 = vadd.f32 %v2434, %v2372
      %v2436 = vadd.f32 %v2435, %v2373
      %v2437 = vrot.slane %v2436, 4
      %v2438 = vadd.f32 %v2436, %v2437
      %v2439 = vrot.slane %v2438, 2
      %v2440 = vadd.f32 %v2438, %v2439
      %v2441 = vrot.slane %v2440, 1
      %v2442 = vadd.f32 %v2440, %v2441
      %v2443 = vmul.f32 %v2342, %v2342
      %v2444 = vmul.f32 %v2343, %v2343
      %v2445 = vmul.f32 %v2344, %v2344
      %v2446 = vmul.f32 %v2345, %v2345
      %v2447 = vmul.f32 %v2346, %v2346
      %v2448 = vmul.f32 %v2347, %v2347
      %v2449 = vmul.f32 %v2348, %v2348
      %v2450 = vmul.f32 %v2349, %v2349
      %v2451 = vmul.f32 %v2350, %v2350
      %v2452 = vmul.f32 %v2351, %v2351
      %v2453 = vmul.f32 %v2352, %v2352
      %v2454 = vmul.f32 %v2353, %v2353
      %v2455 = vmul.f32 %v2354, %v2354
      %v2456 = vmul.f32 %v2355, %v2355
      %v2457 = vmul.f32 %v2356, %v2356
      %v2458 = vmul.f32 %v2357, %v2357
      %v2459 = vmul.f32 %v2358, %v2358
      %v2460 = vmul.f32 %v2359, %v2359
      %v2461 = vmul.f32 %v2360, %v2360
      %v2462 = vmul.f32 %v2361, %v2361
      %v2463 = vmul.f32 %v2362, %v2362
      %v2464 = vmul.f32 %v2363, %v2363
      %v2465 = vmul.f32 %v2364, %v2364
      %v2466 = vmul.f32 %v2365, %v2365
      %v2467 = vmul.f32 %v2366, %v2366
      %v2468 = vmul.f32 %v2367, %v2367
      %v2469 = vmul.f32 %v2368, %v2368
      %v2470 = vmul.f32 %v2369, %v2369
      %v2471 = vmul.f32 %v2370, %v2370
      %v2472 = vmul.f32 %v2371, %v2371
      %v2473 = vmul.f32 %v2372, %v2372
      %v2474 = vmul.f32 %v2373, %v2373
      %v2475 = vadd.f32 %v2443, %v2444
      %v2476 = vadd.f32 %v2475, %v2445
      %v2477 = vadd.f32 %v2476, %v2446
      %v2478 = vadd.f32 %v2477, %v2447
      %v2479 = vadd.f32 %v2478, %v2448
      %v2480 = vadd.f32 %v2479, %v2449
      %v2481 = vadd.f32 %v2480, %v2450
      %v2482 = vadd.f32 %v2481, %v2451
      %v2483 = vadd.f32 %v2482, %v2452
      %v2484 = vadd.f32 %v2483, %v2453
      %v2485 = vadd.f32 %v2484, %v2454
      %v2486 = vadd.f32 %v2485, %v2455
      %v2487 = vadd.f32 %v2486, %v2456
      %v2488 = vadd.f32 %v2487, %v2457
      %v2489 = vadd.f32 %v2488, %v2458
      %v2490 = vadd.f32 %v2489, %v2459
      %v2491 = vadd.f32 %v2490, %v2460
      %v2492 = vadd.f32 %v2491, %v2461
      %v2493 = vadd.f32 %v2492, %v2462
      %v2494 = vadd.f32 %v2493, %v2463
      %v2495 = vadd.f32 %v2494, %v2464
      %v2496 = vadd.f32 %v2495, %v2465
      %v2497 = vadd.f32 %v2496, %v2466
      %v2498 = vadd.f32 %v2497, %v2467
      %v2499 = vadd.f32 %v2498, %v2468
      %v2500 = vadd.f32 %v2499, %v2469
      %v2501 = vadd.f32 %v2500, %v2470
      %v2502 = vadd.f32 %v2501, %v2471
      %v2503 = vadd.f32 %v2502, %v2472
      %v2504 = vadd.f32 %v2503, %v2473
      %v2505 = vadd.f32 %v2504, %v2474
      %v2506 = vrot.slane %v2505, 4
      %v2507 = vadd.f32 %v2505, %v2506
      %v2508 = vrot.slane %v2507, 2
      %v2509 = vadd.f32 %v2507, %v2508
      %v2510 = vrot.slane %v2509, 1
      %v2511 = vadd.f32 %v2509, %v2510
      %vm2512 = vcmask 1040384
      %v2513 = vsel %vm2512, %v2442, %v2511
      %2514 = vst [vmem:[%s338] sm:$0x3] %v2513
      %s2515 = smul.u32 16, %s21
      %p2516 = scmp.lt.s32.totalorder %s20, 1
      %s2517 = scalar_select %p2516, %s20, 1
      %p2518 = scmp.lt.s32.totalorder %s2515, 15
      %s2519 = scalar_select %p2518, %s2515, 15
      %s2520 = smul.addr %s2519, 2
      %s2521 = smul.addr %s2517, 32
      %s2522 = sadd.s32 %s2520, %s2521
      %s2523 = smul.addr %s2522, 8
      %s2524 = scalar_lea.vmem %s3, %s2523
      %p2525 = scmp.lt.s32.totalorder %s20, 1
      %s2526 = scalar_select %p2525, %s20, 1
      %p2527 = scmp.lt.s32.totalorder %s21, 0
      %s2528 = scalar_select %p2527, %s21, 0
      %s2529 = sadd.s32 %s2528, %s2526
      %s2530 = smul.addr %s2529, 2
      %s2531 = scalar_lea.vmem %s4, %s2530
      // Predicated region
      $region33: #{conv_block.1} parent=31 // pred_check
        %p2532 = pneg %p129
      $region34: #{conv_block.1} parent=31 // pred_check_branch
        %2534 = sbr.rel (%p2532) target = $region36
      $region35: #{conv_block.1} parent=31 // pred_region
        %s2535 = smul.u32 16, %s21
      $region36: #{conv_block.1} parent=31 // pred_fallthru
        _
      // Predicated region
      $region37: #{conv_block.1} parent=31 // pred_check
        %p2536 = pneg %p157
      $region38: #{conv_block.1} parent=31 // pred_check_branch
        %2538 = sbr.rel (%p2536) target = $region40
      $region39: #{conv_block.1} parent=31 // pred_region
        _
      $region40: #{conv_block.1} parent=31 // pred_fallthru
        _
    $region32: #{conv_block.1} parent=5 // pred_fallthru
      _
    %p2539 = scmp.le.s32.totalorder 2, %s11
    // Predicated region
    $region41: #{conv_block.1} parent=5 // pred_check
      %p2540 = pneg %p2539
    $region42: #{conv_block.1} parent=5 // pred_check_branch
      %2542 = sbr.rel (%p2540) target = $region44
    $region43: #{conv_block.1} parent=5 // pred_region
      %s2543 = ssub.s32 %s11, 2
      // Predicated region
      $region45: #{conv_block.1} parent=43 // pred_check
        %p2544 = pneg %p135
      $region46: #{conv_block.1} parent=43 // pred_check_branch
        %2546 = sbr.rel (%p2544) target = $region48
      $region47: #{conv_block.1} parent=43 // pred_region
        %s2547 = smul.u32 16, %s23
        %p2548 = scmp.lt.s32.totalorder %s22, 1
        %s2549 = scalar_select %p2548, %s22, 1
        %p2550 = scmp.lt.s32.totalorder %s2547, 15
        %s2551 = scalar_select %p2550, %s2547, 15
        %s2552 = smul.addr %s2551, 2
        %s2553 = smul.addr %s2549, 32
        %s2554 = sadd.s32 %s2552, %s2553
        %s2555 = smul.addr %s2554, 8
        %s2556 = scalar_lea.vmem %s3, %s2555
      $region48: #{conv_block.1} parent=43 // pred_fallthru
        _
      // Predicated region
      $region49: #{conv_block.1} parent=43 // pred_check
        %p2557 = pneg %p163
      $region50: #{conv_block.1} parent=43 // pred_check_branch
        %2559 = sbr.rel (%p2557) target = $region52
      $region51: #{conv_block.1} parent=43 // pred_region
        %p2560 = scmp.lt.s32.totalorder %s22, 1
        %s2561 = scalar_select %p2560, %s22, 1
        %p2562 = scmp.lt.s32.totalorder %s23, 0
        %s2563 = scalar_select %p2562, %s23, 0
        %s2564 = sadd.s32 %s2563, %s2561
        %s2565 = smul.addr %s2564, 2
        %s2566 = scalar_lea.vmem %s4, %s2565
      $region52: #{conv_block.1} parent=43 // pred_fallthru
        _
    $region44: #{conv_block.1} parent=5 // pred_fallthru
      _
  $region6: #{conv_block.1} parent=0 // loop_footer
    %s15 = sadd.s32 1, %s11
  $region7: #{conv_block.1} parent=0 // loop_footer_branch
    %10 = sbr.rel target = $region3
  $region8: #{conv_block.1} parent=0 // loop_exit
    _

</llo_original>
